<compile_context>
chip_gen: v7x
topology: tpu7x:2x2x1
jax: 0.10.0
libtpu: 0.0.40
codegen_flags: <defaults>
</compile_context>

<pallas_src>
import functools

import jax
import jax.numpy as jnp
from jax.experimental import pallas as pl
from jax.experimental.pallas import tpu as pltpu


def mhsa_kernel(k_ref, q_ref, v_ref,
                wk_ref, bk_ref, wq_ref, bq_ref, wv_ref, bv_ref,
                wfc_ref, bfc_ref,
                o_ref,
                kp_ref, vp_ref, m_ref, l_ref, acc_ref,
                *, num_heads, head_dim, kv_tile, num_kv_tiles):
    H, D, tkv = num_heads, head_dim, kv_tile
    tq = q_ref.shape[1]
    qi = pl.program_id(1)

    # ---- K / V projection + head-split relayout: ONCE per batch element ----
    # (grid axis 1 is "arbitrary", so the VMEM scratch carry across the query
    #  tiles of one batch element is safe.)
    @pl.when(qi == 0)
    def _():
        k_in = k_ref[0]                                             # (Lk, E) bf16
        v_in = v_ref[0]                                             # (Lk, E) bf16
        kp = jnp.dot(k_in, wk_ref[...],
                     preferred_element_type=jnp.float32) + bk_ref[...]
        vp = jnp.dot(v_in, wv_ref[...],
                     preferred_element_type=jnp.float32) + bv_ref[...]
        # One-time relayout (amortized over all query tiles of this batch
        # element): K stored pre-transposed per head, V stored head-split.
        for ki in range(num_kv_tiles):                              # static unroll
            ks = kp[ki * tkv:(ki + 1) * tkv]                        # (tkv, E) f32
            vs = vp[ki * tkv:(ki + 1) * tkv]                        # (tkv, E) f32
            kp_ref[ki] = ks.T.reshape(H, D, tkv).astype(jnp.bfloat16)
            vp_ref[ki] = vs.reshape(tkv, H, D).transpose(1, 0, 2).astype(jnp.bfloat16)

    # ---- Q projection for this query tile (scale already folded into wq/bq) ----
    qp = jnp.dot(q_ref[0], wq_ref[...],
                 preferred_element_type=jnp.float32) + bq_ref[...]  # (tq, E) f32
    qh = qp.astype(jnp.bfloat16).reshape(tq, H, D).transpose(1, 0, 2)   # (H, tq, D)

    # ---- Online (flash) softmax over key/value tiles ----
    m_ref[...] = jnp.full(m_ref.shape, -jnp.inf, dtype=m_ref.dtype)
    l_ref[...] = jnp.zeros(l_ref.shape, dtype=l_ref.dtype)
    acc_ref[...] = jnp.zeros(acc_ref.shape, dtype=acc_ref.dtype)

    def body(ki, carry):
        kh = kp_ref[ki]                                             # (H, D, tkv) bf16
        vh = vp_ref[ki]                                             # (H, tkv, D) bf16
        s = jnp.einsum("hqd,hdk->hqk", qh, kh,
                       preferred_element_type=jnp.float32)          # (H, tq, tkv) f32
        m_prev = m_ref[...]
        m_new = jnp.maximum(m_prev, jnp.max(s, axis=-1, keepdims=True))
        alpha = jnp.exp(m_prev - m_new)
        p = jnp.exp(s - m_new)
        l_ref[...] = alpha * l_ref[...] + jnp.sum(p, axis=-1, keepdims=True)
        acc_ref[...] = alpha * acc_ref[...] + jnp.einsum(
            "hqk,hkd->hqd", p.astype(jnp.bfloat16), vh,
            preferred_element_type=jnp.float32)
        m_ref[...] = m_new
        return carry

    jax.lax.fori_loop(0, num_kv_tiles, body, 0)

    # ---- Normalize + output projection (head concat folded into wfc) ----
    ctx = acc_ref[...] * pl.reciprocal(l_ref[...], approx=True)     # (H, tq, D) f32
    per_head = jnp.einsum("hqd,hde->hqe", ctx.astype(jnp.bfloat16), wfc_ref[...],
                          preferred_element_type=jnp.float32)       # (H, tq, E)
    out = jnp.sum(per_head, axis=0) + bfc_ref[...]                  # (tq, E)
    o_ref[0] = out.astype(o_ref.dtype)


def _pick_tile(n, candidates):
    """Largest candidate that divides n, else the full extent."""
    for t in candidates:
        if n >= t and n % t == 0:
            return t
    return n


def _vmem_limit_bytes(Lk, E, H, D, tq, kv_bufs, w_bufs):
    """Rough VMEM footprint estimate (bytes) with a 2x safety factor."""
    mib = 1 << 20
    est = 0
    est += 2 * Lk * E * 2 * kv_bufs                 # K, V input blocks (bf16)
    est += tq * E * 2 * 2                           # Q input block (bf16, 2 bufs)
    est += tq * E * 4 * 2                           # output block (f32, 2 bufs)
    est += 4 * E * E * 2 * w_bufs                   # wk/wq/wv/wfc (bf16)
    est += 4 * E * 4 * w_bufs                       # biases (f32)
    est += 2 * Lk * E * 2                           # head-split K/V scratch (bf16)
    est += H * tq * (2 * 128 + max(D, 128)) * 4     # m/l/acc scratch (lane-padded)
    return int(min(max(2 * est + 4 * mib, 16 * mib), 96 * mib))


def _make_spec(shape, index_map, *, single_buffer):
    if single_buffer:
        # Grid-invariant block: a second pipeline buffer is pure VMEM waste.
        return pl.BlockSpec(shape, index_map, pipeline_mode=pl.Buffered(1))
    return pl.BlockSpec(shape, index_map)


def _build_call(B, Lq, Lk, E, H, D, tq, tkv, out_dtype, *, single_buffer_invariant):
    nq = Lq // tq
    nkv = Lk // tkv

    kernel = functools.partial(
        mhsa_kernel, num_heads=H, head_dim=D, kv_tile=tkv, num_kv_tiles=nkv)

    # Grid-invariant blocks within a batch element: weights, biases, K/V inputs.
    kv_spec = _make_spec((1, Lk, E), lambda b, qi: (b, 0, 0),
                         single_buffer=single_buffer_invariant)
    w_spec = _make_spec((E, E), lambda b, qi: (0, 0),
                        single_buffer=single_buffer_invariant)
    wfc_spec = _make_spec((H, D, E), lambda b, qi: (0, 0, 0),
                          single_buffer=single_buffer_invariant)
    b_spec = _make_spec((1, E), lambda b, qi: (0, 0),
                        single_buffer=single_buffer_invariant)
    q_spec = pl.BlockSpec((1, tq, E), lambda b, qi: (b, qi, 0))
    o_spec = pl.BlockSpec((1, tq, E), lambda b, qi: (b, qi, 0))

    bufs = 1 if single_buffer_invariant else 2
    vmem_limit = _vmem_limit_bytes(Lk, E, H, D, tq, bufs, bufs)

    return pl.pallas_call(
        kernel,
        out_shape=jax.ShapeDtypeStruct((B, Lq, E), out_dtype),
        grid_spec=pltpu.PrefetchScalarGridSpec(
            num_scalar_prefetch=0,
            grid=(B, nq),
            in_specs=[kv_spec, q_spec, kv_spec,
                      w_spec, b_spec, w_spec, b_spec, w_spec, b_spec,
                      wfc_spec, b_spec],
            out_specs=o_spec,
            scratch_shapes=[
                pltpu.VMEM((nkv, H, D, tkv), jnp.bfloat16),   # head-split K^T
                pltpu.VMEM((nkv, H, tkv, D), jnp.bfloat16),   # head-split V
                pltpu.VMEM((H, tq, 1), jnp.float32),          # online-softmax m
                pltpu.VMEM((H, tq, 1), jnp.float32),          # online-softmax l
                pltpu.VMEM((H, tq, D), jnp.float32),          # online-softmax acc
            ],
        ),
        compiler_params=pltpu.CompilerParams(
            # qi must stay "arbitrary": the K/V scratch written at qi == 0 is
            # carried across the query tiles of one batch element.
            dimension_semantics=("parallel", "arbitrary"),
            vmem_limit_bytes=vmem_limit),
    )


def mhsa_forward(key, query, value, params, *, n_embed, num_heads):
    """key/query/value: (B, L, E) arrays.  params: PyTorch-layout weights."""
    head_dim = n_embed // num_heads
    assert head_dim * num_heads == n_embed
    B, Lk, E = key.shape
    Lq = query.shape[1]
    assert E == n_embed and value.shape == key.shape and query.shape[0] == B
    out_dtype = query.dtype

    f32, bf16 = jnp.float32, jnp.bfloat16

    # Pre-transpose weights to (in, out), fold the 1/sqrt(n_embed) softmax
    # scale into the Q projection (NOTE: module scales by n_embed, not
    # head_dim), fold the head concat into wfc as (H, D, E).  All folding is
    # done in f32 before the bf16 cast.
    scale = 1.0 / (float(n_embed) ** 0.5)
    wk = jnp.asarray(params["wk"], f32).T.astype(bf16)
    wq = (jnp.asarray(params["wq"], f32).T * scale).astype(bf16)
    wv = jnp.asarray(params["wv"], f32).T.astype(bf16)
    wfc = jnp.asarray(params["wfc"], f32).T.reshape(num_heads, head_dim, E).astype(bf16)
    bk = jnp.asarray(params["bk"], f32).reshape(1, E)
    bq = (jnp.asarray(params["bq"], f32) * scale).reshape(1, E)
    bv = jnp.asarray(params["bv"], f32).reshape(1, E)
    bfc = jnp.asarray(params["bfc"], f32).reshape(1, E)

    # bf16 activations: halves activation DMA and input-block VMEM.
    key_bf = key.astype(bf16)
    query_bf = query.astype(bf16)
    value_bf = value.astype(bf16)

    # NOTE: realistic configs should use E a multiple of 128 (lane-dense
    # output stores) and head_dim a multiple of 8; the small demo config below
    # is functional but exercises padded/masked vregs.
    tq = _pick_tile(Lq, (256, 128))
    tkv = _pick_tile(Lk, (512, 256, 128))

    args = (key_bf, query_bf, value_bf, wk, bk, wq, bq, wv, bv, wfc, bfc)

    try:
        call = _build_call(B, Lq, Lk, E, num_heads, head_dim, tq, tkv,
                           out_dtype, single_buffer_invariant=True)
        return call(*args)
    except Exception:
        # pipeline_mode=pl.Buffered(1) not supported by this JAX build:
        # fall back to default double-buffering (identical numerics).
        call = _build_call(B, Lq, Lk, E, num_heads, head_dim, tq, tkv,
                           out_dtype, single_buffer_invariant=False)
        return call(*args)


def mhsa_reference(key, query, value, params, *, n_embed, num_heads):
    """Pure-JAX (f32) reference mirroring the PyTorch module exactly."""
    head_dim = n_embed // num_heads
    B, Lk, E = key.shape
    Lq = query.shape[1]
    k = key @ params["wk"].T + params["bk"]
    q = query @ params["wq"].T + params["bq"]
    v = value @ params["wv"].T + params["bv"]
    k = k.reshape(B, Lk, num_heads, head_dim)
    q = q.reshape(B, Lq, num_heads, head_dim)
    v = v.reshape(B, Lk, num_heads, head_dim)
    energies = jnp.einsum("nqhd,nkhd->nhqk", q, k)
    attn = jax.nn.softmax(energies / (n_embed ** 0.5), axis=3)
    out = jnp.einsum("nhql,nlhd->nqhd", attn, v).reshape(B, Lq, n_embed)
    return out @ params["wfc"].T + params["bfc"]


if __name__ == "__main__":
    B, L, n_embed, num_heads = 2, 8, 32, 4

    root = jax.random.PRNGKey(0)
    keys = jax.random.split(root, 12)

    bound = 1.0 / (n_embed ** 0.5)  # PyTorch nn.Linear default init range
    def u(k, shape):
        return jax.random.uniform(k, shape, jnp.float32, -bound, bound)

    params = {
        "wk": u(keys[0], (n_embed, n_embed)), "bk": u(keys[1], (n_embed,)),
        "wq": u(keys[2], (n_embed, n_embed)), "bq": u(keys[3], (n_embed,)),
        "wv": u(keys[4], (n_embed, n_embed)), "bv": u(keys[5], (n_embed,)),
        "wfc": u(keys[6], (n_embed, n_embed)), "bfc": u(keys[7], (n_embed,)),
    }

    k_in = jax.random.normal(keys[8], (B, L, n_embed), jnp.float32)
    q_in = jax.random.normal(keys[9], (B, L, n_embed), jnp.float32)
    v_in = jax.random.normal(keys[10], (B, L, n_embed), jnp.float32)

    out = mhsa_forward(k_in, q_in, v_in, params,
                       n_embed=n_embed, num_heads=num_heads)
    out = jax.block_until_ready(out)

    ref = mhsa_reference(k_in, q_in, v_in, params,
                         n_embed=n_embed, num_heads=num_heads)
    assert out.shape == (B, L, n_embed)
    # bf16 MXU inputs (f32 accumulation) + approx reciprocal: relaxed tolerance.
    assert jnp.allclose(out, ref, atol=3e-2, rtol=3e-2), "mismatch vs reference"

    print("KERNEL_OK")
</pallas_src>

<mosaic_0001>
module attributes {stable_mosaic.version = 11 : i64} {
  func.func @mhsa_kernel(%arg0: i32, %arg1: i32, %arg2: memref<1x8x32xbf16, #tpu.memory_space<vmem>>, %arg3: memref<1x8x32xbf16, #tpu.memory_space<vmem>>, %arg4: memref<1x8x32xbf16, #tpu.memory_space<vmem>>, %arg5: memref<32x32xbf16, #tpu.memory_space<vmem>>, %arg6: memref<1x32xf32, #tpu.memory_space<vmem>>, %arg7: memref<32x32xbf16, #tpu.memory_space<vmem>>, %arg8: memref<1x32xf32, #tpu.memory_space<vmem>>, %arg9: memref<32x32xbf16, #tpu.memory_space<vmem>>, %arg10: memref<1x32xf32, #tpu.memory_space<vmem>>, %arg11: memref<4x8x32xbf16, #tpu.memory_space<vmem>>, %arg12: memref<1x32xf32, #tpu.memory_space<vmem>>, %arg13: memref<1x8x32xf32, #tpu.memory_space<vmem>>, %arg14: memref<1x4x8x8xbf16, #tpu.memory_space<vmem>>, %arg15: memref<1x4x8x8xbf16, #tpu.memory_space<vmem>>, %arg16: memref<4x8x1xf32, #tpu.memory_space<vmem>>, %arg17: memref<4x8x1xf32, #tpu.memory_space<vmem>>, %arg18: memref<4x8x8xf32, #tpu.memory_space<vmem>>) attributes {dimension_semantics = [#tpu.dimension_semantics<parallel>, #tpu.dimension_semantics<arbitrary>], iteration_bounds = array<i64: 2, 1>, scalar_prefetch = 0 : i64, scratch_operands = 5 : i64, tpu.core_type = #tpu.core_type<tc>, window_params = [{pipeline_mode = #tpu.pipeline_mode<synchronous>, transform_indices = @transform_0, window_bounds = array<i64: 1, 8, 32>}, {transform_indices = @transform_1, window_bounds = array<i64: 1, 8, 32>}, {pipeline_mode = #tpu.pipeline_mode<synchronous>, transform_indices = @transform_2, window_bounds = array<i64: 1, 8, 32>}, {pipeline_mode = #tpu.pipeline_mode<synchronous>, transform_indices = @transform_3, window_bounds = array<i64: 32, 32>}, {pipeline_mode = #tpu.pipeline_mode<synchronous>, transform_indices = @transform_4, window_bounds = array<i64: 1, 32>}, {pipeline_mode = #tpu.pipeline_mode<synchronous>, transform_indices = @transform_5, window_bounds = array<i64: 32, 32>}, {pipeline_mode = #tpu.pipeline_mode<synchronous>, transform_indices = @transform_6, window_bounds = array<i64: 1, 32>}, {pipeline_mode = #tpu.pipeline_mode<synchronous>, transform_indices = @transform_7, window_bounds = array<i64: 32, 32>}, {pipeline_mode = #tpu.pipeline_mode<synchronous>, transform_indices = @transform_8, window_bounds = array<i64: 1, 32>}, {pipeline_mode = #tpu.pipeline_mode<synchronous>, transform_indices = @transform_9, window_bounds = array<i64: 4, 8, 32>}, {pipeline_mode = #tpu.pipeline_mode<synchronous>, transform_indices = @transform_10, window_bounds = array<i64: 1, 32>}, {transform_indices = @transform_11, window_bounds = array<i64: 1, 8, 32>}]} {
    %c0_i32 = arith.constant 0 : i32
    %0 = arith.cmpi eq, %arg1, %c0_i32 : i32
    %1 = arith.extui %0 : i1 to i32
    %c0_i32_0 = arith.constant 0 : i32
    %2 = arith.cmpi ne, %1, %c0_i32_0 : i32
    scf.if %2 {
      %c0_64 = arith.constant 0 : index
      %c0_65 = arith.constant 0 : index
      %c0_66 = arith.constant 0 : index
      %64 = vector.load %arg2[%c0_64, %c0_65, %c0_66] : memref<1x8x32xbf16, #tpu.memory_space<vmem>>, vector<1x8x32xbf16>
      %65 = vector.shape_cast %64 : vector<1x8x32xbf16> to vector<8x32xbf16>
      %c0_67 = arith.constant 0 : index
      %c0_68 = arith.constant 0 : index
      %c0_69 = arith.constant 0 : index
      %66 = vector.load %arg4[%c0_67, %c0_68, %c0_69] : memref<1x8x32xbf16, #tpu.memory_space<vmem>>, vector<1x8x32xbf16>
      %67 = vector.shape_cast %66 : vector<1x8x32xbf16> to vector<8x32xbf16>
      %c0_70 = arith.constant 0 : index
      %c0_71 = arith.constant 0 : index
      %68 = vector.load %arg5[%c0_70, %c0_71] : memref<32x32xbf16, #tpu.memory_space<vmem>>, vector<32x32xbf16>
      %cst_72 = arith.constant dense<0.000000e+00> : vector<8x32xf32>
      %69 = tpu.matmul %65, %68, %cst_72 {dimension_numbers = #tpu.dot_dimension_numbers<[1], [0], [0], [1], [0, 0, 1, 1], [], []>} : vector<8x32xbf16>, vector<32x32xbf16>, vector<8x32xf32> -> vector<8x32xf32>
      %c0_73 = arith.constant 0 : index
      %c0_74 = arith.constant 0 : index
      %70 = vector.load %arg6[%c0_73, %c0_74] : memref<1x32xf32, #tpu.memory_space<vmem>>, vector<1x32xf32>
      %71 = vector.broadcast %70 : vector<1x32xf32> to vector<8x32xf32>
      %72 = arith.addf %69, %71 : vector<8x32xf32>
      %c0_75 = arith.constant 0 : index
      %c0_76 = arith.constant 0 : index
      %73 = vector.load %arg9[%c0_75, %c0_76] : memref<32x32xbf16, #tpu.memory_space<vmem>>, vector<32x32xbf16>
      %cst_77 = arith.constant dense<0.000000e+00> : vector<8x32xf32>
      %74 = tpu.matmul %67, %73, %cst_77 {dimension_numbers = #tpu.dot_dimension_numbers<[1], [0], [0], [1], [0, 0, 1, 1], [], []>} : vector<8x32xbf16>, vector<32x32xbf16>, vector<8x32xf32> -> vector<8x32xf32>
      %c0_78 = arith.constant 0 : index
      %c0_79 = arith.constant 0 : index
      %75 = vector.load %arg10[%c0_78, %c0_79] : memref<1x32xf32, #tpu.memory_space<vmem>>, vector<1x32xf32>
      %76 = vector.broadcast %75 : vector<1x32xf32> to vector<8x32xf32>
      %77 = arith.addf %74, %76 : vector<8x32xf32>
      %78 = tpu.transpose %72, [1, 0] : vector<8x32xf32> -> vector<32x8xf32>
      %79 = vector.shape_cast %78 : vector<32x8xf32> to vector<4x8x8xf32>
      %80 = arith.truncf %79 : vector<4x8x8xf32> to vector<4x8x8xbf16>
      %c0_80 = arith.constant 0 : index
      %c0_81 = arith.constant 0 : index
      %c0_82 = arith.constant 0 : index
      %c0_83 = arith.constant 0 : index
      %81 = vector.load %arg14[%c0_80, %c0_81, %c0_82, %c0_83] : memref<1x4x8x8xbf16, #tpu.memory_space<vmem>>, vector<1x4x8x8xbf16>
      %82 = vector.shape_cast %81 : vector<1x4x8x8xbf16> to vector<4x8x8xbf16>
      %83 = vector.shape_cast %80 : vector<4x8x8xbf16> to vector<1x4x8x8xbf16>
      tpu.vector_store %arg14[%c0_80, %c0_81, %c0_82, %c0_83], %83 {strides = array<i32>} : memref<1x4x8x8xbf16, #tpu.memory_space<vmem>>, vector<1x4x8x8xbf16>,
      %84 = vector.shape_cast %77 : vector<8x32xf32> to vector<8x4x8xf32>
      %85 = tpu.transpose %84, [1, 0, 2] : vector<8x4x8xf32> -> vector<4x8x8xf32>
      %86 = arith.truncf %85 : vector<4x8x8xf32> to vector<4x8x8xbf16>
      %c0_84 = arith.constant 0 : index
      %c0_85 = arith.constant 0 : index
      %c0_86 = arith.constant 0 : index
      %c0_87 = arith.constant 0 : index
      %87 = vector.load %arg15[%c0_84, %c0_85, %c0_86, %c0_87] : memref<1x4x8x8xbf16, #tpu.memory_space<vmem>>, vector<1x4x8x8xbf16>
      %88 = vector.shape_cast %87 : vector<1x4x8x8xbf16> to vector<4x8x8xbf16>
      %89 = vector.shape_cast %86 : vector<4x8x8xbf16> to vector<1x4x8x8xbf16>
      tpu.vector_store %arg15[%c0_84, %c0_85, %c0_86, %c0_87], %89 {strides = array<i32>} : memref<1x4x8x8xbf16, #tpu.memory_space<vmem>>, vector<1x4x8x8xbf16>,
    } else {
    }
    %c0 = arith.constant 0 : index
    %c0_1 = arith.constant 0 : index
    %c0_2 = arith.constant 0 : index
    %3 = vector.load %arg3[%c0, %c0_1, %c0_2] : memref<1x8x32xbf16, #tpu.memory_space<vmem>>, vector<1x8x32xbf16>
    %4 = vector.shape_cast %3 : vector<1x8x32xbf16> to vector<8x32xbf16>
    %c0_3 = arith.constant 0 : index
    %c0_4 = arith.constant 0 : index
    %5 = vector.load %arg7[%c0_3, %c0_4] : memref<32x32xbf16, #tpu.memory_space<vmem>>, vector<32x32xbf16>
    %cst = arith.constant dense<0.000000e+00> : vector<8x32xf32>
    %6 = tpu.matmul %4, %5, %cst {dimension_numbers = #tpu.dot_dimension_numbers<[1], [0], [0], [1], [0, 0, 1, 1], [], []>} : vector<8x32xbf16>, vector<32x32xbf16>, vector<8x32xf32> -> vector<8x32xf32>
    %c0_5 = arith.constant 0 : index
    %c0_6 = arith.constant 0 : index
    %7 = vector.load %arg8[%c0_5, %c0_6] : memref<1x32xf32, #tpu.memory_space<vmem>>, vector<1x32xf32>
    %8 = vector.broadcast %7 : vector<1x32xf32> to vector<8x32xf32>
    %9 = arith.addf %6, %8 : vector<8x32xf32>
    %10 = arith.truncf %9 : vector<8x32xf32> to vector<8x32xbf16>
    %11 = vector.shape_cast %10 : vector<8x32xbf16> to vector<8x4x8xbf16>
    %12 = tpu.transpose %11, [1, 0, 2] : vector<8x4x8xbf16> -> vector<4x8x8xbf16>
    %cst_7 = arith.constant 0xFF800000 : f32
    %13 = vector.broadcast %cst_7 : f32 to vector<4x8x1xf32>
    %c0_8 = arith.constant 0 : index
    %c0_9 = arith.constant 0 : index
    %c0_10 = arith.constant 0 : index
    %14 = vector.load %arg16[%c0_8, %c0_9, %c0_10] : memref<4x8x1xf32, #tpu.memory_space<vmem>>, vector<4x8x1xf32>
    tpu.vector_store %arg16[%c0_8, %c0_9, %c0_10], %13 {strides = array<i32>} : memref<4x8x1xf32, #tpu.memory_space<vmem>>, vector<4x8x1xf32>,
    %cst_11 = arith.constant 0.000000e+00 : f32
    %15 = vector.broadcast %cst_11 : f32 to vector<4x8x1xf32>
    %c0_12 = arith.constant 0 : index
    %c0_13 = arith.constant 0 : index
    %c0_14 = arith.constant 0 : index
    %16 = vector.load %arg17[%c0_12, %c0_13, %c0_14] : memref<4x8x1xf32, #tpu.memory_space<vmem>>, vector<4x8x1xf32>
    tpu.vector_store %arg17[%c0_12, %c0_13, %c0_14], %15 {strides = array<i32>} : memref<4x8x1xf32, #tpu.memory_space<vmem>>, vector<4x8x1xf32>,
    %cst_15 = arith.constant 0.000000e+00 : f32
    %17 = vector.broadcast %cst_15 : f32 to vector<4x8x8xf32>
    %c0_16 = arith.constant 0 : index
    %c0_17 = arith.constant 0 : index
    %c0_18 = arith.constant 0 : index
    %18 = vector.load %arg18[%c0_16, %c0_17, %c0_18] : memref<4x8x8xf32, #tpu.memory_space<vmem>>, vector<4x8x8xf32>
    tpu.vector_store %arg18[%c0_16, %c0_17, %c0_18], %17 {strides = array<i32>} : memref<4x8x8xf32, #tpu.memory_space<vmem>>, vector<4x8x8xf32>,
    %c0_i32_19 = arith.constant 0 : i32
    %19 = arith.index_cast %c0_i32_19 : i32 to index
    %c0_20 = arith.constant 0 : index
    %c0_21 = arith.constant 0 : index
    %c0_22 = arith.constant 0 : index
    %20 = vector.load %arg14[%19, %c0_20, %c0_21, %c0_22] : memref<1x4x8x8xbf16, #tpu.memory_space<vmem>>, vector<1x4x8x8xbf16>
    %21 = vector.shape_cast %20 : vector<1x4x8x8xbf16> to vector<4x8x8xbf16>
    %22 = arith.index_cast %c0_i32_19 : i32 to index
    %c0_23 = arith.constant 0 : index
    %c0_24 = arith.constant 0 : index
    %c0_25 = arith.constant 0 : index
    %23 = vector.load %arg15[%22, %c0_23, %c0_24, %c0_25] : memref<1x4x8x8xbf16, #tpu.memory_space<vmem>>, vector<1x4x8x8xbf16>
    %24 = vector.shape_cast %23 : vector<1x4x8x8xbf16> to vector<4x8x8xbf16>
    "tpu.trace_start"() <{level = 10 : i32, message = "hqd,hdk->hqk"}> : () -> ()
    %cst_26 = arith.constant dense<0.000000e+00> : vector<4x8x8xf32>
    %25 = tpu.matmul %12, %21, %cst_26 {dimension_numbers = #tpu.dot_dimension_numbers<[2], [1], [1], [2], [0, 0, 0, 1, 1, 2], [0], [0]>} : vector<4x8x8xbf16>, vector<4x8x8xbf16>, vector<4x8x8xf32> -> vector<4x8x8xf32>
    "tpu.trace_stop"() : () -> ()
    %c0_27 = arith.constant 0 : index
    %c0_28 = arith.constant 0 : index
    %c0_29 = arith.constant 0 : index
    %26 = vector.load %arg16[%c0_27, %c0_28, %c0_29] : memref<4x8x1xf32, #tpu.memory_space<vmem>>, vector<4x8x1xf32>
    %cst_30 = arith.constant dense<0xFF800000> : vector<4x8xf32>
    %27 = vector.multi_reduction <maximumf>, %25, %cst_30 [2] : vector<4x8x8xf32> to vector<4x8xf32>
    %28 = vector.shape_cast %27 : vector<4x8xf32> to vector<4x8x1xf32>
    %29 = arith.maximumf %26, %28 : vector<4x8x1xf32>
    %30 = arith.subf %26, %29 : vector<4x8x1xf32>
    %31 = math.exp %30 : vector<4x8x1xf32>
    %32 = vector.broadcast %29 : vector<4x8x1xf32> to vector<4x8x8xf32>
    %33 = arith.subf %25, %32 : vector<4x8x8xf32>
    %34 = math.exp %33 : vector<4x8x8xf32>
    %c0_31 = arith.constant 0 : index
    %c0_32 = arith.constant 0 : index
    %c0_33 = arith.constant 0 : index
    %35 = vector.load %arg17[%c0_31, %c0_32, %c0_33] : memref<4x8x1xf32, #tpu.memory_space<vmem>>, vector<4x8x1xf32>
    %36 = arith.mulf %31, %35 : vector<4x8x1xf32>
    %cst_34 = arith.constant dense<0.000000e+00> : vector<4x8xf32>
    %37 = vector.multi_reduction <add>, %34, %cst_34 [2] : vector<4x8x8xf32> to vector<4x8xf32>
    %38 = vector.shape_cast %37 : vector<4x8xf32> to vector<4x8x1xf32>
    %39 = arith.addf %36, %38 : vector<4x8x1xf32>
    %c0_35 = arith.constant 0 : index
    %c0_36 = arith.constant 0 : index
    %c0_37 = arith.constant 0 : index
    %40 = vector.load %arg17[%c0_35, %c0_36, %c0_37] : memref<4x8x1xf32, #tpu.memory_space<vmem>>, vector<4x8x1xf32>
    tpu.vector_store %arg17[%c0_35, %c0_36, %c0_37], %39 {strides = array<i32>} : memref<4x8x1xf32, #tpu.memory_space<vmem>>, vector<4x8x1xf32>,
    %c0_38 = arith.constant 0 : index
    %c0_39 = arith.constant 0 : index
    %c0_40 = arith.constant 0 : index
    %41 = vector.load %arg18[%c0_38, %c0_39, %c0_40] : memref<4x8x8xf32, #tpu.memory_space<vmem>>, vector<4x8x8xf32>
    %42 = vector.broadcast %31 : vector<4x8x1xf32> to vector<4x8x8xf32>
    %43 = arith.mulf %42, %41 : vector<4x8x8xf32>
    %44 = arith.truncf %34 : vector<4x8x8xf32> to vector<4x8x8xbf16>
    "tpu.trace_start"() <{level = 10 : i32, message = "hqk,hkd->hqd"}> : () -> ()
    %cst_41 = arith.constant dense<0.000000e+00> : vector<4x8x8xf32>
    %45 = tpu.matmul %44, %24, %cst_41 {dimension_numbers = #tpu.dot_dimension_numbers<[2], [1], [1], [2], [0, 0, 0, 1, 1, 2], [0], [0]>} : vector<4x8x8xbf16>, vector<4x8x8xbf16>, vector<4x8x8xf32> -> vector<4x8x8xf32>
    "tpu.trace_stop"() : () -> ()
    %46 = arith.addf %43, %45 : vector<4x8x8xf32>
    %c0_42 = arith.constant 0 : index
    %c0_43 = arith.constant 0 : index
    %c0_44 = arith.constant 0 : index
    %47 = vector.load %arg18[%c0_42, %c0_43, %c0_44] : memref<4x8x8xf32, #tpu.memory_space<vmem>>, vector<4x8x8xf32>
    tpu.vector_store %arg18[%c0_42, %c0_43, %c0_44], %46 {strides = array<i32>} : memref<4x8x8xf32, #tpu.memory_space<vmem>>, vector<4x8x8xf32>,
    %c0_45 = arith.constant 0 : index
    %c0_46 = arith.constant 0 : index
    %c0_47 = arith.constant 0 : index
    %48 = vector.load %arg16[%c0_45, %c0_46, %c0_47] : memref<4x8x1xf32, #tpu.memory_space<vmem>>, vector<4x8x1xf32>
    tpu.vector_store %arg16[%c0_45, %c0_46, %c0_47], %29 {strides = array<i32>} : memref<4x8x1xf32, #tpu.memory_space<vmem>>, vector<4x8x1xf32>,
    %c1_i32 = arith.constant 1 : i32
    %c0_48 = arith.constant 0 : index
    %c0_49 = arith.constant 0 : index
    %c0_50 = arith.constant 0 : index
    %49 = vector.load %arg18[%c0_48, %c0_49, %c0_50] : memref<4x8x8xf32, #tpu.memory_space<vmem>>, vector<4x8x8xf32>
    %c0_51 = arith.constant 0 : index
    %c0_52 = arith.constant 0 : index
    %c0_53 = arith.constant 0 : index
    %50 = vector.load %arg17[%c0_51, %c0_52, %c0_53] : memref<4x8x1xf32, #tpu.memory_space<vmem>>, vector<4x8x1xf32>
    %51 = tpu.reciprocal %50 {approx = true} : vector<4x8x1xf32> -> vector<4x8x1xf32>
    %52 = vector.broadcast %51 : vector<4x8x1xf32> to vector<4x8x8xf32>
    %53 = arith.mulf %49, %52 : vector<4x8x8xf32>
    %54 = arith.truncf %53 : vector<4x8x8xf32> to vector<4x8x8xbf16>
    %c0_54 = arith.constant 0 : index
    %c0_55 = arith.constant 0 : index
    %c0_56 = arith.constant 0 : index
    %55 = vector.load %arg11[%c0_54, %c0_55, %c0_56] : memref<4x8x32xbf16, #tpu.memory_space<vmem>>, vector<4x8x32xbf16>
    "tpu.trace_start"() <{level = 10 : i32, message = "hqd,hde->hqe"}> : () -> ()
    %cst_57 = arith.constant dense<0.000000e+00> : vector<4x8x32xf32>
    %56 = tpu.matmul %54, %55, %cst_57 {dimension_numbers = #tpu.dot_dimension_numbers<[2], [1], [1], [2], [0, 0, 0, 1, 1, 2], [0], [0]>} : vector<4x8x8xbf16>, vector<4x8x32xbf16>, vector<4x8x32xf32> -> vector<4x8x32xf32>
    "tpu.trace_stop"() : () -> ()
    %cst_58 = arith.constant dense<0.000000e+00> : vector<8x32xf32>
    %57 = vector.multi_reduction <add>, %56, %cst_58 [0] : vector<4x8x32xf32> to vector<8x32xf32>
    %c0_59 = arith.constant 0 : index
    %c0_60 = arith.constant 0 : index
    %58 = vector.load %arg12[%c0_59, %c0_60] : memref<1x32xf32, #tpu.memory_space<vmem>>, vector<1x32xf32>
    %59 = vector.broadcast %58 : vector<1x32xf32> to vector<8x32xf32>
    %60 = arith.addf %57, %59 : vector<8x32xf32>
    %c0_61 = arith.constant 0 : index
    %c0_62 = arith.constant 0 : index
    %c0_63 = arith.constant 0 : index
    %61 = vector.load %arg13[%c0_61, %c0_62, %c0_63] : memref<1x8x32xf32, #tpu.memory_space<vmem>>, vector<1x8x32xf32>
    %62 = vector.shape_cast %61 : vector<1x8x32xf32> to vector<8x32xf32>
    %63 = vector.shape_cast %60 : vector<8x32xf32> to vector<1x8x32xf32>
    tpu.vector_store %arg13[%c0_61, %c0_62, %c0_63], %63 {strides = array<i32>} : memref<1x8x32xf32, #tpu.memory_space<vmem>>, vector<1x8x32xf32>,
    return
  }
  func.func @transform_0(%arg0: i32, %arg1: i32) -> (i32, i32, i32) {
    %c0_i32 = arith.constant 0 : i32
    %c0_i32_0 = arith.constant 0 : i32
    %c0_i32_1 = arith.constant 0 : i32
    return %arg0, %c0_i32, %c0_i32_0 : i32, i32, i32
  }
  func.func @transform_1(%arg0: i32, %arg1: i32) -> (i32, i32, i32) {
    %c0_i32 = arith.constant 0 : i32
    %c0_i32_0 = arith.constant 0 : i32
    return %arg0, %arg1, %c0_i32 : i32, i32, i32
  }
  func.func @transform_2(%arg0: i32, %arg1: i32) -> (i32, i32, i32) {
    %c0_i32 = arith.constant 0 : i32
    %c0_i32_0 = arith.constant 0 : i32
    %c0_i32_1 = arith.constant 0 : i32
    return %arg0, %c0_i32, %c0_i32_0 : i32, i32, i32
  }
  func.func @transform_3(%arg0: i32, %arg1: i32) -> (i32, i32) {
    %c0_i32 = arith.constant 0 : i32
    %c0_i32_0 = arith.constant 0 : i32
    %c0_i32_1 = arith.constant 0 : i32
    return %c0_i32, %c0_i32_0 : i32, i32
  }
  func.func @transform_4(%arg0: i32, %arg1: i32) -> (i32, i32) {
    %c0_i32 = arith.constant 0 : i32
    %c0_i32_0 = arith.constant 0 : i32
    %c0_i32_1 = arith.constant 0 : i32
    return %c0_i32, %c0_i32_0 : i32, i32
  }
  func.func @transform_5(%arg0: i32, %arg1: i32) -> (i32, i32) {
    %c0_i32 = arith.constant 0 : i32
    %c0_i32_0 = arith.constant 0 : i32
    %c0_i32_1 = arith.constant 0 : i32
    return %c0_i32, %c0_i32_0 : i32, i32
  }
  func.func @transform_6(%arg0: i32, %arg1: i32) -> (i32, i32) {
    %c0_i32 = arith.constant 0 : i32
    %c0_i32_0 = arith.constant 0 : i32
    %c0_i32_1 = arith.constant 0 : i32
    return %c0_i32, %c0_i32_0 : i32, i32
  }
  func.func @transform_7(%arg0: i32, %arg1: i32) -> (i32, i32) {
    %c0_i32 = arith.constant 0 : i32
    %c0_i32_0 = arith.constant 0 : i32
    %c0_i32_1 = arith.constant 0 : i32
    return %c0_i32, %c0_i32_0 : i32, i32
  }
  func.func @transform_8(%arg0: i32, %arg1: i32) -> (i32, i32) {
    %c0_i32 = arith.constant 0 : i32
    %c0_i32_0 = arith.constant 0 : i32
    %c0_i32_1 = arith.constant 0 : i32
    return %c0_i32, %c0_i32_0 : i32, i32
  }
  func.func @transform_9(%arg0: i32, %arg1: i32) -> (i32, i32, i32) {
    %c0_i32 = arith.constant 0 : i32
    %c0_i32_0 = arith.constant 0 : i32
    %c0_i32_1 = arith.constant 0 : i32
    %c0_i32_2 = arith.constant 0 : i32
    return %c0_i32, %c0_i32_0, %c0_i32_1 : i32, i32, i32
  }
  func.func @transform_10(%arg0: i32, %arg1: i32) -> (i32, i32) {
    %c0_i32 = arith.constant 0 : i32
    %c0_i32_0 = arith.constant 0 : i32
    %c0_i32_1 = arith.constant 0 : i32
    return %c0_i32, %c0_i32_0 : i32, i32
  }
  func.func @transform_11(%arg0: i32, %arg1: i32) -> (i32, i32, i32) {
    %c0_i32 = arith.constant 0 : i32
    %c0_i32_0 = arith.constant 0 : i32
    return %arg0, %arg1, %c0_i32 : i32, i32, i32
  }
}

module attributes {stable_mosaic.version = 11 : i64} {
  func.func @mhsa_kernel(%arg0: i32, %arg1: i32, %arg2: memref<1x8x32xbf16, #tpu.memory_space<vmem>>, %arg3: memref<1x8x32xbf16, #tpu.memory_space<vmem>>, %arg4: memref<1x8x32xbf16, #tpu.memory_space<vmem>>, %arg5: memref<32x32xbf16, #tpu.memory_space<vmem>>, %arg6: memref<1x32xf32, #tpu.memory_space<vmem>>, %arg7: memref<32x32xbf16, #tpu.memory_space<vmem>>, %arg8: memref<1x32xf32, #tpu.memory_space<vmem>>, %arg9: memref<32x32xbf16, #tpu.memory_space<vmem>>, %arg10: memref<1x32xf32, #tpu.memory_space<vmem>>, %arg11: memref<4x8x32xbf16, #tpu.memory_space<vmem>>, %arg12: memref<1x32xf32, #tpu.memory_space<vmem>>, %arg13: memref<1x8x32xf32, #tpu.memory_space<vmem>>, %arg14: memref<1x4x8x8xbf16, #tpu.memory_space<vmem>>, %arg15: memref<1x4x8x8xbf16, #tpu.memory_space<vmem>>, %arg16: memref<4x8x1xf32, #tpu.memory_space<vmem>>, %arg17: memref<4x8x1xf32, #tpu.memory_space<vmem>>, %arg18: memref<4x8x8xf32, #tpu.memory_space<vmem>>) attributes {dimension_semantics = [#tpu.dimension_semantics<parallel>, #tpu.dimension_semantics<arbitrary>], iteration_bounds = array<i64: 2, 1>, scalar_prefetch = 0 : i64, scratch_operands = 5 : i64, tpu.core_type = #tpu.core_type<tc>, window_params = [{transform_indices = @transform_0, window_bounds = array<i64: 1, 8, 32>}, {transform_indices = @transform_1, window_bounds = array<i64: 1, 8, 32>}, {transform_indices = @transform_2, window_bounds = array<i64: 1, 8, 32>}, {pipeline_mode = #tpu.pipeline_mode<synchronous>, transform_indices = @transform_3, window_bounds = array<i64: 32, 32>}, {pipeline_mode = #tpu.pipeline_mode<synchronous>, transform_indices = @transform_4, window_bounds = array<i64: 1, 32>}, {pipeline_mode = #tpu.pipeline_mode<synchronous>, transform_indices = @transform_5, window_bounds = array<i64: 32, 32>}, {pipeline_mode = #tpu.pipeline_mode<synchronous>, transform_indices = @transform_6, window_bounds = array<i64: 1, 32>}, {pipeline_mode = #tpu.pipeline_mode<synchronous>, transform_indices = @transform_7, window_bounds = array<i64: 32, 32>}, {pipeline_mode = #tpu.pipeline_mode<synchronous>, transform_indices = @transform_8, window_bounds = array<i64: 1, 32>}, {pipeline_mode = #tpu.pipeline_mode<synchronous>, transform_indices = @transform_9, window_bounds = array<i64: 4, 8, 32>}, {pipeline_mode = #tpu.pipeline_mode<synchronous>, transform_indices = @transform_10, window_bounds = array<i64: 1, 32>}, {transform_indices = @transform_11, window_bounds = array<i64: 1, 8, 32>}]} {
    %c0_i32 = arith.constant 0 : i32
    %0 = arith.cmpi eq, %arg1, %c0_i32 : i32
    %1 = arith.extui %0 : i1 to i32
    %c0_i32_0 = arith.constant 0 : i32
    %2 = arith.cmpi ne, %1, %c0_i32_0 : i32
    scf.if %2 {
      %c0_64 = arith.constant 0 : index
      %c0_65 = arith.constant 0 : index
      %c0_66 = arith.constant 0 : index
      %64 = vector.load %arg2[%c0_64, %c0_65, %c0_66] : memref<1x8x32xbf16, #tpu.memory_space<vmem>>, vector<1x8x32xbf16>
      %65 = vector.shape_cast %64 : vector<1x8x32xbf16> to vector<8x32xbf16>
      %c0_67 = arith.constant 0 : index
      %c0_68 = arith.constant 0 : index
      %c0_69 = arith.constant 0 : index
      %66 = vector.load %arg4[%c0_67, %c0_68, %c0_69] : memref<1x8x32xbf16, #tpu.memory_space<vmem>>, vector<1x8x32xbf16>
      %67 = vector.shape_cast %66 : vector<1x8x32xbf16> to vector<8x32xbf16>
      %c0_70 = arith.constant 0 : index
      %c0_71 = arith.constant 0 : index
      %68 = vector.load %arg5[%c0_70, %c0_71] : memref<32x32xbf16, #tpu.memory_space<vmem>>, vector<32x32xbf16>
      %cst_72 = arith.constant dense<0.000000e+00> : vector<8x32xf32>
      %69 = tpu.matmul %65, %68, %cst_72 {dimension_numbers = #tpu.dot_dimension_numbers<[1], [0], [0], [1], [0, 0, 1, 1], [], []>} : vector<8x32xbf16>, vector<32x32xbf16>, vector<8x32xf32> -> vector<8x32xf32>
      %c0_73 = arith.constant 0 : index
      %c0_74 = arith.constant 0 : index
      %70 = vector.load %arg6[%c0_73, %c0_74] : memref<1x32xf32, #tpu.memory_space<vmem>>, vector<1x32xf32>
      %71 = vector.broadcast %70 : vector<1x32xf32> to vector<8x32xf32>
      %72 = arith.addf %69, %71 : vector<8x32xf32>
      %c0_75 = arith.constant 0 : index
      %c0_76 = arith.constant 0 : index
      %73 = vector.load %arg9[%c0_75, %c0_76] : memref<32x32xbf16, #tpu.memory_space<vmem>>, vector<32x32xbf16>
      %cst_77 = arith.constant dense<0.000000e+00> : vector<8x32xf32>
      %74 = tpu.matmul %67, %73, %cst_77 {dimension_numbers = #tpu.dot_dimension_numbers<[1], [0], [0], [1], [0, 0, 1, 1], [], []>} : vector<8x32xbf16>, vector<32x32xbf16>, vector<8x32xf32> -> vector<8x32xf32>
      %c0_78 = arith.constant 0 : index
      %c0_79 = arith.constant 0 : index
      %75 = vector.load %arg10[%c0_78, %c0_79] : memref<1x32xf32, #tpu.memory_space<vmem>>, vector<1x32xf32>
      %76 = vector.broadcast %75 : vector<1x32xf32> to vector<8x32xf32>
      %77 = arith.addf %74, %76 : vector<8x32xf32>
      %78 = tpu.transpose %72, [1, 0] : vector<8x32xf32> -> vector<32x8xf32>
      %79 = vector.shape_cast %78 : vector<32x8xf32> to vector<4x8x8xf32>
      %80 = arith.truncf %79 : vector<4x8x8xf32> to vector<4x8x8xbf16>
      %c0_80 = arith.constant 0 : index
      %c0_81 = arith.constant 0 : index
      %c0_82 = arith.constant 0 : index
      %c0_83 = arith.constant 0 : index
      %81 = vector.load %arg14[%c0_80, %c0_81, %c0_82, %c0_83] : memref<1x4x8x8xbf16, #tpu.memory_space<vmem>>, vector<1x4x8x8xbf16>
      %82 = vector.shape_cast %81 : vector<1x4x8x8xbf16> to vector<4x8x8xbf16>
      %83 = vector.shape_cast %80 : vector<4x8x8xbf16> to vector<1x4x8x8xbf16>
      tpu.vector_store %arg14[%c0_80, %c0_81, %c0_82, %c0_83], %83 {strides = array<i32>} : memref<1x4x8x8xbf16, #tpu.memory_space<vmem>>, vector<1x4x8x8xbf16>,
      %84 = vector.shape_cast %77 : vector<8x32xf32> to vector<8x4x8xf32>
      %85 = tpu.transpose %84, [1, 0, 2] : vector<8x4x8xf32> -> vector<4x8x8xf32>
      %86 = arith.truncf %85 : vector<4x8x8xf32> to vector<4x8x8xbf16>
      %c0_84 = arith.constant 0 : index
      %c0_85 = arith.constant 0 : index
      %c0_86 = arith.constant 0 : index
      %c0_87 = arith.constant 0 : index
      %87 = vector.load %arg15[%c0_84, %c0_85, %c0_86, %c0_87] : memref<1x4x8x8xbf16, #tpu.memory_space<vmem>>, vector<1x4x8x8xbf16>
      %88 = vector.shape_cast %87 : vector<1x4x8x8xbf16> to vector<4x8x8xbf16>
      %89 = vector.shape_cast %86 : vector<4x8x8xbf16> to vector<1x4x8x8xbf16>
      tpu.vector_store %arg15[%c0_84, %c0_85, %c0_86, %c0_87], %89 {strides = array<i32>} : memref<1x4x8x8xbf16, #tpu.memory_space<vmem>>, vector<1x4x8x8xbf16>,
    } else {
    }
    %c0 = arith.constant 0 : index
    %c0_1 = arith.constant 0 : index
    %c0_2 = arith.constant 0 : index
    %3 = vector.load %arg3[%c0, %c0_1, %c0_2] : memref<1x8x32xbf16, #tpu.memory_space<vmem>>, vector<1x8x32xbf16>
    %4 = vector.shape_cast %3 : vector<1x8x32xbf16> to vector<8x32xbf16>
    %c0_3 = arith.constant 0 : index
    %c0_4 = arith.constant 0 : index
    %5 = vector.load %arg7[%c0_3, %c0_4] : memref<32x32xbf16, #tpu.memory_space<vmem>>, vector<32x32xbf16>
    %cst = arith.constant dense<0.000000e+00> : vector<8x32xf32>
    %6 = tpu.matmul %4, %5, %cst {dimension_numbers = #tpu.dot_dimension_numbers<[1], [0], [0], [1], [0, 0, 1, 1], [], []>} : vector<8x32xbf16>, vector<32x32xbf16>, vector<8x32xf32> -> vector<8x32xf32>
    %c0_5 = arith.constant 0 : index
    %c0_6 = arith.constant 0 : index
    %7 = vector.load %arg8[%c0_5, %c0_6] : memref<1x32xf32, #tpu.memory_space<vmem>>, vector<1x32xf32>
    %8 = vector.broadcast %7 : vector<1x32xf32> to vector<8x32xf32>
    %9 = arith.addf %6, %8 : vector<8x32xf32>
    %10 = arith.truncf %9 : vector<8x32xf32> to vector<8x32xbf16>
    %11 = vector.shape_cast %10 : vector<8x32xbf16> to vector<8x4x8xbf16>
    %12 = tpu.transpose %11, [1, 0, 2] : vector<8x4x8xbf16> -> vector<4x8x8xbf16>
    %cst_7 = arith.constant 0xFF800000 : f32
    %13 = vector.broadcast %cst_7 : f32 to vector<4x8x1xf32>
    %c0_8 = arith.constant 0 : index
    %c0_9 = arith.constant 0 : index
    %c0_10 = arith.constant 0 : index
    %14 = vector.load %arg16[%c0_8, %c0_9, %c0_10] : memref<4x8x1xf32, #tpu.memory_space<vmem>>, vector<4x8x1xf32>
    tpu.vector_store %arg16[%c0_8, %c0_9, %c0_10], %13 {strides = array<i32>} : memref<4x8x1xf32, #tpu.memory_space<vmem>>, vector<4x8x1xf32>,
    %cst_11 = arith.constant 0.000000e+00 : f32
    %15 = vector.broadcast %cst_11 : f32 to vector<4x8x1xf32>
    %c0_12 = arith.constant 0 : index
    %c0_13 = arith.constant 0 : index
    %c0_14 = arith.constant 0 : index
    %16 = vector.load %arg17[%c0_12, %c0_13, %c0_14] : memref<4x8x1xf32, #tpu.memory_space<vmem>>, vector<4x8x1xf32>
    tpu.vector_store %arg17[%c0_12, %c0_13, %c0_14], %15 {strides = array<i32>} : memref<4x8x1xf32, #tpu.memory_space<vmem>>, vector<4x8x1xf32>,
    %cst_15 = arith.constant 0.000000e+00 : f32
    %17 = vector.broadcast %cst_15 : f32 to vector<4x8x8xf32>
    %c0_16 = arith.constant 0 : index
    %c0_17 = arith.constant 0 : index
    %c0_18 = arith.constant 0 : index
    %18 = vector.load %arg18[%c0_16, %c0_17, %c0_18] : memref<4x8x8xf32, #tpu.memory_space<vmem>>, vector<4x8x8xf32>
    tpu.vector_store %arg18[%c0_16, %c0_17, %c0_18], %17 {strides = array<i32>} : memref<4x8x8xf32, #tpu.memory_space<vmem>>, vector<4x8x8xf32>,
    %c0_i32_19 = arith.constant 0 : i32
    %19 = arith.index_cast %c0_i32_19 : i32 to index
    %c0_20 = arith.constant 0 : index
    %c0_21 = arith.constant 0 : index
    %c0_22 = arith.constant 0 : index
    %20 = vector.load %arg14[%19, %c0_20, %c0_21, %c0_22] : memref<1x4x8x8xbf16, #tpu.memory_space<vmem>>, vector<1x4x8x8xbf16>
    %21 = vector.shape_cast %20 : vector<1x4x8x8xbf16> to vector<4x8x8xbf16>
    %22 = arith.index_cast %c0_i32_19 : i32 to index
    %c0_23 = arith.constant 0 : index
    %c0_24 = arith.constant 0 : index
    %c0_25 = arith.constant 0 : index
    %23 = vector.load %arg15[%22, %c0_23, %c0_24, %c0_25] : memref<1x4x8x8xbf16, #tpu.memory_space<vmem>>, vector<1x4x8x8xbf16>
    %24 = vector.shape_cast %23 : vector<1x4x8x8xbf16> to vector<4x8x8xbf16>
    "tpu.trace_start"() <{level = 10 : i32, message = "hqd,hdk->hqk"}> : () -> ()
    %cst_26 = arith.constant dense<0.000000e+00> : vector<4x8x8xf32>
    %25 = tpu.matmul %12, %21, %cst_26 {dimension_numbers = #tpu.dot_dimension_numbers<[2], [1], [1], [2], [0, 0, 0, 1, 1, 2], [0], [0]>} : vector<4x8x8xbf16>, vector<4x8x8xbf16>, vector<4x8x8xf32> -> vector<4x8x8xf32>
    "tpu.trace_stop"() : () -> ()
    %c0_27 = arith.constant 0 : index
    %c0_28 = arith.constant 0 : index
    %c0_29 = arith.constant 0 : index
    %26 = vector.load %arg16[%c0_27, %c0_28, %c0_29] : memref<4x8x1xf32, #tpu.memory_space<vmem>>, vector<4x8x1xf32>
    %cst_30 = arith.constant dense<0xFF800000> : vector<4x8xf32>
    %27 = vector.multi_reduction <maximumf>, %25, %cst_30 [2] : vector<4x8x8xf32> to vector<4x8xf32>
    %28 = vector.shape_cast %27 : vector<4x8xf32> to vector<4x8x1xf32>
    %29 = arith.maximumf %26, %28 : vector<4x8x1xf32>
    %30 = arith.subf %26, %29 : vector<4x8x1xf32>
    %31 = math.exp %30 : vector<4x8x1xf32>
    %32 = vector.broadcast %29 : vector<4x8x1xf32> to vector<4x8x8xf32>
    %33 = arith.subf %25, %32 : vector<4x8x8xf32>
    %34 = math.exp %33 : vector<4x8x8xf32>
    %c0_31 = arith.constant 0 : index
    %c0_32 = arith.constant 0 : index
    %c0_33 = arith.constant 0 : index
    %35 = vector.load %arg17[%c0_31, %c0_32, %c0_33] : memref<4x8x1xf32, #tpu.memory_space<vmem>>, vector<4x8x1xf32>
    %36 = arith.mulf %31, %35 : vector<4x8x1xf32>
    %cst_34 = arith.constant dense<0.000000e+00> : vector<4x8xf32>
    %37 = vector.multi_reduction <add>, %34, %cst_34 [2] : vector<4x8x8xf32> to vector<4x8xf32>
    %38 = vector.shape_cast %37 : vector<4x8xf32> to vector<4x8x1xf32>
    %39 = arith.addf %36, %38 : vector<4x8x1xf32>
    %c0_35 = arith.constant 0 : index
    %c0_36 = arith.constant 0 : index
    %c0_37 = arith.constant 0 : index
    %40 = vector.load %arg17[%c0_35, %c0_36, %c0_37] : memref<4x8x1xf32, #tpu.memory_space<vmem>>, vector<4x8x1xf32>
    tpu.vector_store %arg17[%c0_35, %c0_36, %c0_37], %39 {strides = array<i32>} : memref<4x8x1xf32, #tpu.memory_space<vmem>>, vector<4x8x1xf32>,
    %c0_38 = arith.constant 0 : index
    %c0_39 = arith.constant 0 : index
    %c0_40 = arith.constant 0 : index
    %41 = vector.load %arg18[%c0_38, %c0_39, %c0_40] : memref<4x8x8xf32, #tpu.memory_space<vmem>>, vector<4x8x8xf32>
    %42 = vector.broadcast %31 : vector<4x8x1xf32> to vector<4x8x8xf32>
    %43 = arith.mulf %42, %41 : vector<4x8x8xf32>
    %44 = arith.truncf %34 : vector<4x8x8xf32> to vector<4x8x8xbf16>
    "tpu.trace_start"() <{level = 10 : i32, message = "hqk,hkd->hqd"}> : () -> ()
    %cst_41 = arith.constant dense<0.000000e+00> : vector<4x8x8xf32>
    %45 = tpu.matmul %44, %24, %cst_41 {dimension_numbers = #tpu.dot_dimension_numbers<[2], [1], [1], [2], [0, 0, 0, 1, 1, 2], [0], [0]>} : vector<4x8x8xbf16>, vector<4x8x8xbf16>, vector<4x8x8xf32> -> vector<4x8x8xf32>
    "tpu.trace_stop"() : () -> ()
    %46 = arith.addf %43, %45 : vector<4x8x8xf32>
    %c0_42 = arith.constant 0 : index
    %c0_43 = arith.constant 0 : index
    %c0_44 = arith.constant 0 : index
    %47 = vector.load %arg18[%c0_42, %c0_43, %c0_44] : memref<4x8x8xf32, #tpu.memory_space<vmem>>, vector<4x8x8xf32>
    tpu.vector_store %arg18[%c0_42, %c0_43, %c0_44], %46 {strides = array<i32>} : memref<4x8x8xf32, #tpu.memory_space<vmem>>, vector<4x8x8xf32>,
    %c0_45 = arith.constant 0 : index
    %c0_46 = arith.constant 0 : index
    %c0_47 = arith.constant 0 : index
    %48 = vector.load %arg16[%c0_45, %c0_46, %c0_47] : memref<4x8x1xf32, #tpu.memory_space<vmem>>, vector<4x8x1xf32>
    tpu.vector_store %arg16[%c0_45, %c0_46, %c0_47], %29 {strides = array<i32>} : memref<4x8x1xf32, #tpu.memory_space<vmem>>, vector<4x8x1xf32>,
    %c1_i32 = arith.constant 1 : i32
    %c0_48 = arith.constant 0 : index
    %c0_49 = arith.constant 0 : index
    %c0_50 = arith.constant 0 : index
    %49 = vector.load %arg18[%c0_48, %c0_49, %c0_50] : memref<4x8x8xf32, #tpu.memory_space<vmem>>, vector<4x8x8xf32>
    %c0_51 = arith.constant 0 : index
    %c0_52 = arith.constant 0 : index
    %c0_53 = arith.constant 0 : index
    %50 = vector.load %arg17[%c0_51, %c0_52, %c0_53] : memref<4x8x1xf32, #tpu.memory_space<vmem>>, vector<4x8x1xf32>
    %51 = tpu.reciprocal %50 {approx = true} : vector<4x8x1xf32> -> vector<4x8x1xf32>
    %52 = vector.broadcast %51 : vector<4x8x1xf32> to vector<4x8x8xf32>
    %53 = arith.mulf %49, %52 : vector<4x8x8xf32>
    %54 = arith.truncf %53 : vector<4x8x8xf32> to vector<4x8x8xbf16>
    %c0_54 = arith.constant 0 : index
    %c0_55 = arith.constant 0 : index
    %c0_56 = arith.constant 0 : index
    %55 = vector.load %arg11[%c0_54, %c0_55, %c0_56] : memref<4x8x32xbf16, #tpu.memory_space<vmem>>, vector<4x8x32xbf16>
    "tpu.trace_start"() <{level = 10 : i32, message = "hqd,hde->hqe"}> : () -> ()
    %cst_57 = arith.constant dense<0.000000e+00> : vector<4x8x32xf32>
    %56 = tpu.matmul %54, %55, %cst_57 {dimension_numbers = #tpu.dot_dimension_numbers<[2], [1], [1], [2], [0, 0, 0, 1, 1, 2], [0], [0]>} : vector<4x8x8xbf16>, vector<4x8x32xbf16>, vector<4x8x32xf32> -> vector<4x8x32xf32>
    "tpu.trace_stop"() : () -> ()
    %cst_58 = arith.constant dense<0.000000e+00> : vector<8x32xf32>
    %57 = vector.multi_reduction <add>, %56, %cst_58 [0] : vector<4x8x32xf32> to vector<8x32xf32>
    %c0_59 = arith.constant 0 : index
    %c0_60 = arith.constant 0 : index
    %58 = vector.load %arg12[%c0_59, %c0_60] : memref<1x32xf32, #tpu.memory_space<vmem>>, vector<1x32xf32>
    %59 = vector.broadcast %58 : vector<1x32xf32> to vector<8x32xf32>
    %60 = arith.addf %57, %59 : vector<8x32xf32>
    %c0_61 = arith.constant 0 : index
    %c0_62 = arith.constant 0 : index
    %c0_63 = arith.constant 0 : index
    %61 = vector.load %arg13[%c0_61, %c0_62, %c0_63] : memref<1x8x32xf32, #tpu.memory_space<vmem>>, vector<1x8x32xf32>
    %62 = vector.shape_cast %61 : vector<1x8x32xf32> to vector<8x32xf32>
    %63 = vector.shape_cast %60 : vector<8x32xf32> to vector<1x8x32xf32>
    tpu.vector_store %arg13[%c0_61, %c0_62, %c0_63], %63 {strides = array<i32>} : memref<1x8x32xf32, #tpu.memory_space<vmem>>, vector<1x8x32xf32>,
    return
  }
  func.func @transform_0(%arg0: i32, %arg1: i32) -> (i32, i32, i32) {
    %c0_i32 = arith.constant 0 : i32
    %c0_i32_0 = arith.constant 0 : i32
    %c0_i32_1 = arith.constant 0 : i32
    return %arg0, %c0_i32, %c0_i32_0 : i32, i32, i32
  }
  func.func @transform_1(%arg0: i32, %arg1: i32) -> (i32, i32, i32) {
    %c0_i32 = arith.constant 0 : i32
    %c0_i32_0 = arith.constant 0 : i32
    return %arg0, %arg1, %c0_i32 : i32, i32, i32
  }
  func.func @transform_2(%arg0: i32, %arg1: i32) -> (i32, i32, i32) {
    %c0_i32 = arith.constant 0 : i32
    %c0_i32_0 = arith.constant 0 : i32
    %c0_i32_1 = arith.constant 0 : i32
    return %arg0, %c0_i32, %c0_i32_0 : i32, i32, i32
  }
  func.func @transform_3(%arg0: i32, %arg1: i32) -> (i32, i32) {
    %c0_i32 = arith.constant 0 : i32
    %c0_i32_0 = arith.constant 0 : i32
    %c0_i32_1 = arith.constant 0 : i32
    return %c0_i32, %c0_i32_0 : i32, i32
  }
  func.func @transform_4(%arg0: i32, %arg1: i32) -> (i32, i32) {
    %c0_i32 = arith.constant 0 : i32
    %c0_i32_0 = arith.constant 0 : i32
    %c0_i32_1 = arith.constant 0 : i32
    return %c0_i32, %c0_i32_0 : i32, i32
  }
  func.func @transform_5(%arg0: i32, %arg1: i32) -> (i32, i32) {
    %c0_i32 = arith.constant 0 : i32
    %c0_i32_0 = arith.constant 0 : i32
    %c0_i32_1 = arith.constant 0 : i32
    return %c0_i32, %c0_i32_0 : i32, i32
  }
  func.func @transform_6(%arg0: i32, %arg1: i32) -> (i32, i32) {
    %c0_i32 = arith.constant 0 : i32
    %c0_i32_0 = arith.constant 0 : i32
    %c0_i32_1 = arith.constant 0 : i32
    return %c0_i32, %c0_i32_0 : i32, i32
  }
  func.func @transform_7(%arg0: i32, %arg1: i32) -> (i32, i32) {
    %c0_i32 = arith.constant 0 : i32
    %c0_i32_0 = arith.constant 0 : i32
    %c0_i32_1 = arith.constant 0 : i32
    return %c0_i32, %c0_i32_0 : i32, i32
  }
  func.func @transform_8(%arg0: i32, %arg1: i32) -> (i32, i32) {
    %c0_i32 = arith.constant 0 : i32
    %c0_i32_0 = arith.constant 0 : i32
    %c0_i32_1 = arith.constant 0 : i32
    return %c0_i32, %c0_i32_0 : i32, i32
  }
  func.func @transform_9(%arg0: i32, %arg1: i32) -> (i32, i32, i32) {
    %c0_i32 = arith.constant 0 : i32
    %c0_i32_0 = arith.constant 0 : i32
    %c0_i32_1 = arith.constant 0 : i32
    %c0_i32_2 = arith.constant 0 : i32
    return %c0_i32, %c0_i32_0, %c0_i32_1 : i32, i32, i32
  }
  func.func @transform_10(%arg0: i32, %arg1: i32) -> (i32, i32) {
    %c0_i32 = arith.constant 0 : i32
    %c0_i32_0 = arith.constant 0 : i32
    %c0_i32_1 = arith.constant 0 : i32
    return %c0_i32, %c0_i32_0 : i32, i32
  }
  func.func @transform_11(%arg0: i32, %arg1: i32) -> (i32, i32, i32) {
    %c0_i32 = arith.constant 0 : i32
    %c0_i32_0 = arith.constant 0 : i32
    return %arg0, %arg1, %c0_i32 : i32, i32, i32
  }
}

</mosaic_0001>

<llo_original>
// kernel: tpu_custom_call.1
$region0: #{tpu_custom_call.1}
  #allocation0 [shape = 'u32[]', space=smem, size = 0x4, offset = 0x4, fixed_abs, tag = 'smem constant byte address 0x4 - core index']
  #allocation1 [shape = 'u32[144,128]{1,0:T(1,128)}', space=vmem, size = 0x12000, scoped, tag = 'internal scratch']
  #allocation2 [shape = 'bf16[1,4,8,8]{3,2,1,0:T(8,128)(2,1)}', space=vmem, size = 0x2000, scoped, tag = 'scratch operand']
  #allocation3 [shape = 'bf16[1,4,8,8]{3,2,1,0:T(8,128)(2,1)}', space=vmem, size = 0x2000, scoped, tag = 'scratch operand']
  #allocation4 [shape = 'f32[4,8,1]{2,1,0:T(8,128)}', space=vmem, size = 0x4000, scoped, tag = 'scratch operand']
  #allocation5 [shape = 'f32[4,8,1]{2,1,0:T(8,128)}', space=vmem, size = 0x4000, scoped, tag = 'scratch operand']
  #allocation6 [shape = 'f32[4,8,8]{2,1,0:T(8,128)}', space=vmem, size = 0x4000, scoped, tag = 'scratch operand']
  %s0 = inlined_call_operand.hbm [shape: bf16[2,8,32], index: 0, kind: input, shape index: {}]
  %s1 = inlined_call_operand.hbm [shape: bf16[2,8,32], index: 1, kind: input, shape index: {}]
  %s2 = inlined_call_operand.hbm [shape: bf16[2,8,32], index: 2, kind: input, shape index: {}]
  %s3 = inlined_call_operand.hbm [shape: bf16[32,32], index: 3, kind: input, shape index: {}]
  %s4 = inlined_call_operand.vmem [shape: f32[1,32], index: 4, kind: input, shape index: {}]
  %s5 = inlined_call_operand.vmem [shape: bf16[32,32], index: 5, kind: input, shape index: {}]
  %s6 = inlined_call_operand.vmem [shape: f32[1,32], index: 6, kind: input, shape index: {}]
  %s7 = inlined_call_operand.hbm [shape: bf16[32,32], index: 7, kind: input, shape index: {}]
  %s8 = inlined_call_operand.hbm [shape: f32[1,32], index: 8, kind: input, shape index: {}]
  %s9 = inlined_call_operand.vmem [shape: bf16[4,8,32], index: 9, kind: input, shape index: {}]
  %s10 = inlined_call_operand.vmem [shape: f32[1,32], index: 10, kind: input, shape index: {}]
  %s11 = inlined_call_operand.hbm [shape: f32[2,8,32], index: 11, kind: output, shape index: {}]
  %s12 = sld [smem:[#allocation0]]
  $region105: #{tpu_custom_call.1} parent=0
    _
  %s14 = ssub.s32 1, %s12
  %s15 = scalar_select 0, %s14, %s12
  $region1: #{tpu_custom_call.1} parent=0
    #allocation7 [shape = 'u8[2048]{0}', space=vmem, size = 0x800, scoped, tag = 'input window, operand 0, single buffered']
    #allocation8 [shape = 's32[2]{0}', space=sflag, size = 0x8, scoped, tag = 'scoped memory for tpu_custom_call.1']
    #allocation9 [shape = 's32[2]{0}', space=sflag, size = 0x8, scoped, tag = 'scoped memory for tpu_custom_call.1']
    #allocation10 [shape = 'u8[4096]{0}', space=vmem, size = 0x1000, scoped, tag = 'input window, operand 1']
    #allocation11 [shape = 's32[2]{0}', space=sflag, size = 0x8, scoped, tag = 'scoped memory for tpu_custom_call.1']
    #allocation12 [shape = 'u8[2048]{0}', space=vmem, size = 0x800, scoped, tag = 'input window, operand 2, single buffered']
    #allocation13 [shape = 'u8[8192]{0}', space=vmem, size = 0x2000, scoped, tag = 'input window, operand 3, single buffered']
    #allocation14 [shape = 's32[1]{0}', space=sflag, size = 0x4, scoped, tag = 'scoped memory for tpu_custom_call.1']
    #allocation15 [shape = 'u8[8192]{0}', space=vmem, size = 0x2000, scoped, tag = 'input window, operand 7, single buffered']
    #allocation16 [shape = 'u8[512]{0}', space=vmem, size = 0x400, scoped, tag = 'input window, operand 8, single buffered']
    #allocation17 [shape = 's32[1]{0}', space=sflag, size = 0x4, scoped, tag = 'scoped memory for tpu_custom_call.1']
    #allocation18 [shape = 'u8[8192]{0}', space=vmem, size = 0x2000, scoped, tag = 'output window, operand 0']
    %16 = vsyncpa [#allocation8], 0
    %17 = vsyncpa [#allocation11], 0
    %s18 = scalar_lea.sflag [#allocation11], 1
    %19 = vsyncpa %s18, 0
    %20 = vsyncpa [#allocation14], 0
    %21 = vsyncpa [#allocation17], 0
    %22 = vsyncpa [#allocation9], 0
    %s23 = scalar_lea.sflag [#allocation9], 1
    %24 = vsyncpa %s23, 0
    loop: start=0, step=1, limit=4
    $region2: #{tpu_custom_call.1} parent=1 // loop_pre_header
      _
    $region3: #{tpu_custom_call.1} parent=1 // loop_header
      %s26 = sphi 0, %s30
      %p27 = scmp.ge.s32.totalorder %s26, 4
      %s33 = sphi 0, %s45
      %s34 = sphi 0, %s41
      %s35 = sphi 0, %s33
      %s36 = sphi 0, %s34
      %s37 = sphi 0, %s35
      %s38 = sphi 0, %s36
      %s48 = sphi 0, %s50
      %s51 = sphi 0, %s48
      %s52 = sphi 0, %s51
      %s68 = sphi 0, %s52
      %s76 = sphi 0, %s78
      %s79 = sphi 0, %s76
      %s80 = sphi 0, %s79
      %s96 = sphi 0, %s80
      %s102 = sphi 0, %s104
      %s105 = sphi 0, %s102
      %s106 = sphi 0, %s105
      %s122 = sphi 0, %s106
      %s126 = sphi 0, %s126
      %s128 = sphi 0, %s126
      %s129 = sphi 0, %s128
      %s143 = sphi 0, %s129
      %s147 = sphi 0, %s147
      %s149 = sphi 0, %s147
      %s150 = sphi 0, %s149
      %s164 = sphi 0, %s150
      %s168 = sphi 0, %s168
      %s170 = sphi 0, %s168
      %s171 = sphi 0, %s170
      %s185 = sphi 0, %s171
      %s189 = sphi 0, %s189
      %s191 = sphi 0, %s189
      %s192 = sphi 0, %s191
      %s206 = sphi 0, %s192
      %s210 = sphi 0, %s210
      %s212 = sphi 0, %s210
      %s213 = sphi 0, %s212
      %s227 = sphi 0, %s213
      %s231 = sphi 0, %s231
      %s233 = sphi 0, %s231
      %s234 = sphi 0, %s233
      %s248 = sphi 0, %s234
      %s252 = sphi 0, %s252
      %s254 = sphi 0, %s252
      %s255 = sphi 0, %s254
      %s269 = sphi 0, %s255
      %s273 = sphi 0, %s273
      %s275 = sphi 0, %s273
      %s276 = sphi 0, %s275
      %s290 = sphi 0, %s276
      %s298 = sphi 0, %s300
      %s301 = sphi 0, %s298
      %s302 = sphi 0, %s301
      %s318 = sphi 0, %s302
    $region4: #{tpu_custom_call.1} parent=1 // loop_header_branch
      %29 = sbr.rel (%p27) target = $region8
    $region5: #{tpu_custom_call.1} parent=1 // loop_body
      %s31 = ssub.s32 %s26, 1
      %s32 = ssub.s32 %s26, 2
      %s39 = sadd.s32 1, %s34
      %p40 = scmp.ge.s32.totalorder %s39, 1
      %s41 = scalar_select %p40, 0, %s39
      %s42 = sadd.s32 1, %s33
      %s43 = scalar_select %p40, %s42, %s33
      %p44 = scmp.ge.s32.totalorder %s43, 2
      %s45 = scalar_select %p44, 0, %s43
      %s46 = ssub.s32 %s33, %s45
      %p47 = scmp.eq.s32.totalorder %s46, 0
      %s49 = sadd.s32 %s48, 1
      %s50 = scalar_select %p47, %s48, %s49
      %p53 = pneg %p47
      %p54 = scmp.eq.s32.totalorder %s26, 1
      %p55 = por %p53, %p54
      %p56 = scmp.ne.s32.totalorder %s48, %s51
      %p57 = scmp.eq.s32.totalorder %s26, 0
      %p58 = por %p56, %p57
      %p59 = scmp.ne.s32.totalorder %s48, %s51
      %p60 = scmp.eq.s32.totalorder %s31, 1
      %p61 = por %p59, %p60
      %p62 = scmp.ne.s32.totalorder %s51, %s52
      %p63 = scmp.eq.s32.totalorder %s31, 0
      %p64 = por %p62, %p63
      %p65 = scmp.ne.s32.totalorder %s51, %s52
      %p66 = scmp.eq.s32.totalorder %s32, 1
      %p67 = por %p65, %p66
      %p69 = scmp.ne.s32.totalorder %s52, %s68
      %p70 = scmp.eq.s32.totalorder %s32, 0
      %p71 = por %p69, %p70
      %s72 = ssub.s32 %s33, %s45
      %s73 = ssub.s32 %s34, %s41
      %s74 = sor.u32 %s72, %s73
      %p75 = scmp.eq.s32.totalorder %s74, 0
      %s77 = sadd.s32 %s76, 1
      %s78 = scalar_select %p75, %s76, %s77
      %p81 = pneg %p75
      %p82 = scmp.eq.s32.totalorder %s26, 1
      %p83 = por %p81, %p82
      %p84 = scmp.ne.s32.totalorder %s76, %s79
      %p85 = scmp.eq.s32.totalorder %s26, 0
      %p86 = por %p84, %p85
      %p87 = scmp.ne.s32.totalorder %s76, %s79
      %p88 = scmp.eq.s32.totalorder %s31, 1
      %p89 = por %p87, %p88
      %p90 = scmp.ne.s32.totalorder %s79, %s80
      %p91 = scmp.eq.s32.totalorder %s31, 0
      %p92 = por %p90, %p91
      %p93 = scmp.ne.s32.totalorder %s79, %s80
      %p94 = scmp.eq.s32.totalorder %s32, 1
      %p95 = por %p93, %p94
      %p97 = scmp.ne.s32.totalorder %s80, %s96
      %p98 = scmp.eq.s32.totalorder %s32, 0
      %p99 = por %p97, %p98
      %s100 = ssub.s32 %s33, %s45
      %p101 = scmp.eq.s32.totalorder %s100, 0
      %s103 = sadd.s32 %s102, 1
      %s104 = scalar_select %p101, %s102, %s103
      %p107 = pneg %p101
      %p108 = scmp.eq.s32.totalorder %s26, 1
      %p109 = por %p107, %p108
      %p110 = scmp.ne.s32.totalorder %s102, %s105
      %p111 = scmp.eq.s32.totalorder %s26, 0
      %p112 = por %p110, %p111
      %p113 = scmp.ne.s32.totalorder %s102, %s105
      %p114 = scmp.eq.s32.totalorder %s31, 1
      %p115 = por %p113, %p114
      %p116 = scmp.ne.s32.totalorder %s105, %s106
      %p117 = scmp.eq.s32.totalorder %s31, 0
      %p118 = por %p116, %p117
      %p119 = scmp.ne.s32.totalorder %s105, %s106
      %p120 = scmp.eq.s32.totalorder %s32, 1
      %p121 = por %p119, %p120
      %p123 = scmp.ne.s32.totalorder %s106, %s122
      %p124 = scmp.eq.s32.totalorder %s32, 0
      %p125 = por %p123, %p124
      %s127 = sadd.s32 %s126, 1
      %p130 = scmp.eq.s32.totalorder %s26, 1
      %p131 = scmp.ne.s32.totalorder %s126, %s128
      %p132 = scmp.eq.s32.totalorder %s26, 0
      %p133 = por %p131, %p132
      %p134 = scmp.ne.s32.totalorder %s126, %s128
      %p135 = scmp.eq.s32.totalorder %s31, 1
      %p136 = por %p134, %p135
      %p137 = scmp.ne.s32.totalorder %s128, %s129
      %p138 = scmp.eq.s32.totalorder %s31, 0
      %p139 = por %p137, %p138
      %p140 = scmp.ne.s32.totalorder %s128, %s129
      %p141 = scmp.eq.s32.totalorder %s32, 1
      %p142 = por %p140, %p141
      %p144 = scmp.ne.s32.totalorder %s129, %s143
      %p145 = scmp.eq.s32.totalorder %s32, 0
      %p146 = por %p144, %p145
      %s148 = sadd.s32 %s147, 1
      %p151 = scmp.eq.s32.totalorder %s26, 1
      %p152 = scmp.ne.s32.totalorder %s147, %s149
      %p153 = scmp.eq.s32.totalorder %s26, 0
      %p154 = por %p152, %p153
      %p155 = scmp.ne.s32.totalorder %s147, %s149
      %p156 = scmp.eq.s32.totalorder %s31, 1
      %p157 = por %p155, %p156
      %p158 = scmp.ne.s32.totalorder %s149, %s150
      %p159 = scmp.eq.s32.totalorder %s31, 0
      %p160 = por %p158, %p159
      %p161 = scmp.ne.s32.totalorder %s149, %s150
      %p162 = scmp.eq.s32.totalorder %s32, 1
      %p163 = por %p161, %p162
      %p165 = scmp.ne.s32.totalorder %s150, %s164
      %p166 = scmp.eq.s32.totalorder %s32, 0
      %p167 = por %p165, %p166
      %s169 = sadd.s32 %s168, 1
      %p172 = scmp.eq.s32.totalorder %s26, 1
      %p173 = scmp.ne.s32.totalorder %s168, %s170
      %p174 = scmp.eq.s32.totalorder %s26, 0
      %p175 = por %p173, %p174
      %p176 = scmp.ne.s32.totalorder %s168, %s170
      %p177 = scmp.eq.s32.totalorder %s31, 1
      %p178 = por %p176, %p177
      %p179 = scmp.ne.s32.totalorder %s170, %s171
      %p180 = scmp.eq.s32.totalorder %s31, 0
      %p181 = por %p179, %p180
      %p182 = scmp.ne.s32.totalorder %s170, %s171
      %p183 = scmp.eq.s32.totalorder %s32, 1
      %p184 = por %p182, %p183
      %p186 = scmp.ne.s32.totalorder %s171, %s185
      %p187 = scmp.eq.s32.totalorder %s32, 0
      %p188 = por %p186, %p187
      %s190 = sadd.s32 %s189, 1
      %p193 = scmp.eq.s32.totalorder %s26, 1
      %p194 = scmp.ne.s32.totalorder %s189, %s191
      %p195 = scmp.eq.s32.totalorder %s26, 0
      %p196 = por %p194, %p195
      %p197 = scmp.ne.s32.totalorder %s189, %s191
      %p198 = scmp.eq.s32.totalorder %s31, 1
      %p199 = por %p197, %p198
      %p200 = scmp.ne.s32.totalorder %s191, %s192
      %p201 = scmp.eq.s32.totalorder %s31, 0
      %p202 = por %p200, %p201
      %p203 = scmp.ne.s32.totalorder %s191, %s192
      %p204 = scmp.eq.s32.totalorder %s32, 1
      %p205 = por %p203, %p204
      %p207 = scmp.ne.s32.totalorder %s192, %s206
      %p208 = scmp.eq.s32.totalorder %s32, 0
      %p209 = por %p207, %p208
      %s211 = sadd.s32 %s210, 1
      %p214 = scmp.eq.s32.totalorder %s26, 1
      %p215 = scmp.ne.s32.totalorder %s210, %s212
      %p216 = scmp.eq.s32.totalorder %s26, 0
      %p217 = por %p215, %p216
      %p218 = scmp.ne.s32.totalorder %s210, %s212
      %p219 = scmp.eq.s32.totalorder %s31, 1
      %p220 = por %p218, %p219
      %p221 = scmp.ne.s32.totalorder %s212, %s213
      %p222 = scmp.eq.s32.totalorder %s31, 0
      %p223 = por %p221, %p222
      %p224 = scmp.ne.s32.totalorder %s212, %s213
      %p225 = scmp.eq.s32.totalorder %s32, 1
      %p226 = por %p224, %p225
      %p228 = scmp.ne.s32.totalorder %s213, %s227
      %p229 = scmp.eq.s32.totalorder %s32, 0
      %p230 = por %p228, %p229
      %s232 = sadd.s32 %s231, 1
      %p235 = scmp.eq.s32.totalorder %s26, 1
      %p236 = scmp.ne.s32.totalorder %s231, %s233
      %p237 = scmp.eq.s32.totalorder %s26, 0
      %p238 = por %p236, %p237
      %p239 = scmp.ne.s32.totalorder %s231, %s233
      %p240 = scmp.eq.s32.totalorder %s31, 1
      %p241 = por %p239, %p240
      %p242 = scmp.ne.s32.totalorder %s233, %s234
      %p243 = scmp.eq.s32.totalorder %s31, 0
      %p244 = por %p242, %p243
      %p245 = scmp.ne.s32.totalorder %s233, %s234
      %p246 = scmp.eq.s32.totalorder %s32, 1
      %p247 = por %p245, %p246
      %p249 = scmp.ne.s32.totalorder %s234, %s248
      %p250 = scmp.eq.s32.totalorder %s32, 0
      %p251 = por %p249, %p250
      %s253 = sadd.s32 %s252, 1
      %p256 = scmp.eq.s32.totalorder %s26, 1
      %p257 = scmp.ne.s32.totalorder %s252, %s254
      %p258 = scmp.eq.s32.totalorder %s26, 0
      %p259 = por %p257, %p258
      %p260 = scmp.ne.s32.totalorder %s252, %s254
      %p261 = scmp.eq.s32.totalorder %s31, 1
      %p262 = por %p260, %p261
      %p263 = scmp.ne.s32.totalorder %s254, %s255
      %p264 = scmp.eq.s32.totalorder %s31, 0
      %p265 = por %p263, %p264
      %p266 = scmp.ne.s32.totalorder %s254, %s255
      %p267 = scmp.eq.s32.totalorder %s32, 1
      %p268 = por %p266, %p267
      %p270 = scmp.ne.s32.totalorder %s255, %s269
      %p271 = scmp.eq.s32.totalorder %s32, 0
      %p272 = por %p270, %p271
      %s274 = sadd.s32 %s273, 1
      %p277 = scmp.eq.s32.totalorder %s26, 1
      %p278 = scmp.ne.s32.totalorder %s273, %s275
      %p279 = scmp.eq.s32.totalorder %s26, 0
      %p280 = por %p278, %p279
      %p281 = scmp.ne.s32.totalorder %s273, %s275
      %p282 = scmp.eq.s32.totalorder %s31, 1
      %p283 = por %p281, %p282
      %p284 = scmp.ne.s32.totalorder %s275, %s276
      %p285 = scmp.eq.s32.totalorder %s31, 0
      %p286 = por %p284, %p285
      %p287 = scmp.ne.s32.totalorder %s275, %s276
      %p288 = scmp.eq.s32.totalorder %s32, 1
      %p289 = por %p287, %p288
      %p291 = scmp.ne.s32.totalorder %s276, %s290
      %p292 = scmp.eq.s32.totalorder %s32, 0
      %p293 = por %p291, %p292
      %s294 = ssub.s32 %s33, %s45
      %s295 = ssub.s32 %s34, %s41
      %s296 = sor.u32 %s294, %s295
      %p297 = scmp.eq.s32.totalorder %s296, 0
      %s299 = sadd.s32 %s298, 1
      %s300 = scalar_select %p297, %s298, %s299
      %p303 = pneg %p297
      %p304 = scmp.eq.s32.totalorder %s26, 1
      %p305 = por %p303, %p304
      %p306 = scmp.ne.s32.totalorder %s298, %s301
      %p307 = scmp.eq.s32.totalorder %s26, 0
      %p308 = por %p306, %p307
      %p309 = scmp.ne.s32.totalorder %s298, %s301
      %p310 = scmp.eq.s32.totalorder %s31, 1
      %p311 = por %p309, %p310
      %p312 = scmp.ne.s32.totalorder %s301, %s302
      %p313 = scmp.eq.s32.totalorder %s31, 0
      %p314 = por %p312, %p313
      %p315 = scmp.ne.s32.totalorder %s301, %s302
      %p316 = scmp.eq.s32.totalorder %s32, 1
      %p317 = por %p315, %p316
      %p319 = scmp.ne.s32.totalorder %s302, %s318
      %p320 = scmp.eq.s32.totalorder %s32, 0
      %p321 = por %p319, %p320
      %p322 = scmp.le.s32.totalorder 1, %s26
      %p323 = scmp.lt.s32.totalorder %s26, 3
      %p324 = pnand %p322, %p323
      %p325 = pneg %p324
      // Predicated region
      $region9: #{tpu_custom_call.1} parent=5 // pred_check
        _
      $region10: #{tpu_custom_call.1} parent=5 // pred_check_branch
        %327 = sbr.rel (%p324) target = $region12
      $region11: #{tpu_custom_call.1} parent=5 // pred_region
        %s328 = ssub.s32 %s26, 1
        // Predicated region
        $region13: #{tpu_custom_call.1} parent=11 // pred_check
          %p329 = pneg %p64
        $region14: #{tpu_custom_call.1} parent=11 // pred_check_branch
          %331 = sbr.rel (%p329) target = $region16
        $region15: #{tpu_custom_call.1} parent=11 // pred_region
          %s333 = ssub.s32 64, 64
          %334 = vsyncadd [#allocation8], %s333
          %s335 = smul.addr %s35, 64
          %s336 = scalar_lea.hbm %s0, %s335
          %s338 = sshll.u32 [#allocation7], 4
          %s339 = int_to_ptr.vmem [resolvable:$true] %s338
          %341 = dma.hbm_to_vmem [thread:$0]  %s336, 64, %s339, [#allocation8]
        $region16: #{tpu_custom_call.1} parent=11 // pred_fallthru
          _
        // Predicated region
        $region17: #{tpu_custom_call.1} parent=11 // pred_check
          %p342 = pneg %p118
        $region18: #{tpu_custom_call.1} parent=11 // pred_check_branch
          %344 = sbr.rel (%p342) target = $region20
        $region19: #{tpu_custom_call.1} parent=11 // pred_region
          %s346 = ssub.s32 64, 64
          %347 = vsyncadd [#allocation11], %s346
          %s348 = smul.addr %s35, 64
          %s349 = scalar_lea.hbm %s2, %s348
          %s351 = sshll.u32 [#allocation12], 4
          %s352 = int_to_ptr.vmem [resolvable:$true] %s351
          %354 = dma.hbm_to_vmem [thread:$0]  %s349, 64, %s352, [#allocation11]
        $region20: #{tpu_custom_call.1} parent=11 // pred_fallthru
          _
        // Predicated region
        $region21: #{tpu_custom_call.1} parent=11 // pred_check
          %p355 = pneg %p139
        $region22: #{tpu_custom_call.1} parent=11 // pred_check_branch
          %357 = sbr.rel (%p355) target = $region24
        $region23: #{tpu_custom_call.1} parent=11 // pred_region
          %s359 = ssub.s32 256, 256
          %360 = vsyncadd [#allocation14], %s359
          %s361 = sshll.u32 [#allocation13], 4
          %s362 = int_to_ptr.vmem [resolvable:$true] %s361
          %367 = dma.hbm_to_vmem [thread:$0]  %s3, 256, %s362, [#allocation14], 64, 64, 4
        $region24: #{tpu_custom_call.1} parent=11 // pred_fallthru
          _
        // Predicated region
        $region25: #{tpu_custom_call.1} parent=11 // pred_check
          %p368 = pneg %p160
        $region26: #{tpu_custom_call.1} parent=11 // pred_check_branch
          %370 = sbr.rel (%p368) target = $region28
        $region27: #{tpu_custom_call.1} parent=11 // pred_region
          _
        $region28: #{tpu_custom_call.1} parent=11 // pred_fallthru
          _
        // Predicated region
        $region29: #{tpu_custom_call.1} parent=11 // pred_check
          %p371 = pneg %p181
        $region30: #{tpu_custom_call.1} parent=11 // pred_check_branch
          %373 = sbr.rel (%p371) target = $region32
        $region31: #{tpu_custom_call.1} parent=11 // pred_region
          _
        $region32: #{tpu_custom_call.1} parent=11 // pred_fallthru
          _
        // Predicated region
        $region33: #{tpu_custom_call.1} parent=11 // pred_check
          %p374 = pneg %p202
        $region34: #{tpu_custom_call.1} parent=11 // pred_check_branch
          %376 = sbr.rel (%p374) target = $region36
        $region35: #{tpu_custom_call.1} parent=11 // pred_region
          _
        $region36: #{tpu_custom_call.1} parent=11 // pred_fallthru
          _
        // Predicated region
        $region37: #{tpu_custom_call.1} parent=11 // pred_check
          %p377 = pneg %p223
        $region38: #{tpu_custom_call.1} parent=11 // pred_check_branch
          %379 = sbr.rel (%p377) target = $region40
        $region39: #{tpu_custom_call.1} parent=11 // pred_region
          %s381 = ssub.s32 256, 256
          %382 = vsyncadd [#allocation14], %s381
          %s383 = sshll.u32 [#allocation15], 4
          %s384 = int_to_ptr.vmem [resolvable:$true] %s383
          %389 = dma.hbm_to_vmem [thread:$0]  %s7, 256, %s384, [#allocation14], 64, 64, 4
        $region40: #{tpu_custom_call.1} parent=11 // pred_fallthru
          _
        // Predicated region
        $region41: #{tpu_custom_call.1} parent=11 // pred_check
          %p390 = pneg %p244
        $region42: #{tpu_custom_call.1} parent=11 // pred_check_branch
          %392 = sbr.rel (%p390) target = $region44
        $region43: #{tpu_custom_call.1} parent=11 // pred_region
          %s394 = ssub.s32 16, 16
          %395 = vsyncadd [#allocation17], %s394
          %s397 = sshll.u32 [#allocation16], 4
          %s398 = int_to_ptr.vmem [resolvable:$true] %s397
          %400 = dma.hbm_to_vmem [thread:$0]  %s8, 16, %s398, [#allocation17]
        $region44: #{tpu_custom_call.1} parent=11 // pred_fallthru
          _
        // Predicated region
        $region45: #{tpu_custom_call.1} parent=11 // pred_check
          %p401 = pneg %p265
        $region46: #{tpu_custom_call.1} parent=11 // pred_check_branch
          %403 = sbr.rel (%p401) target = $region48
        $region47: #{tpu_custom_call.1} parent=11 // pred_region
          _
        $region48: #{tpu_custom_call.1} parent=11 // pred_fallthru
          _
        // Predicated region
        $region49: #{tpu_custom_call.1} parent=11 // pred_check
          %p404 = pneg %p286
        $region50: #{tpu_custom_call.1} parent=11 // pred_check_branch
          %406 = sbr.rel (%p404) target = $region52
        $region51: #{tpu_custom_call.1} parent=11 // pred_region
          _
        $region52: #{tpu_custom_call.1} parent=11 // pred_fallthru
          _
      $region12: #{tpu_custom_call.1} parent=5 // pred_fallthru
        _
      %p407 = scmp.lt.s32.totalorder %s26, 2
      // Predicated region
      $region53: #{tpu_custom_call.1} parent=5 // pred_check
        %p408 = pneg %p407
      $region54: #{tpu_custom_call.1} parent=5 // pred_check_branch
        %410 = sbr.rel (%p408) target = $region56
      $region55: #{tpu_custom_call.1} parent=5 // pred_region
        // Predicated region
        $region57: #{tpu_custom_call.1} parent=55 // pred_check
          %p411 = pneg %p86
        $region58: #{tpu_custom_call.1} parent=55 // pred_check_branch
          %413 = sbr.rel (%p411) target = $region60
        $region59: #{tpu_custom_call.1} parent=55 // pred_region
          %s414 = sand.u32 %s26, 1
          %s415 = scalar_lea.sflag [#allocation11], %s414
          %s416 = sand.u32 %s76, 1
          %s417 = smul.addr %s416, 4
          %s418 = scalar_lea.vmem [#allocation10], %s417
          %s420 = ssub.s32 64, 64
          %421 = vsyncadd %s415, %s420
          %s422 = sadd.s32 %s34, %s33
          %s423 = smul.addr %s422, 64
          %s424 = scalar_lea.hbm %s1, %s423
          %s426 = sshll.u32 %s418, 4
          %s427 = int_to_ptr.vmem [resolvable:$true] %s426
          %429 = dma.hbm_to_vmem [thread:$0]  %s424, 64, %s427, %s415
        $region60: #{tpu_custom_call.1} parent=55 // pred_fallthru
          _
      $region56: #{tpu_custom_call.1} parent=5 // pred_fallthru
        _
      %p430 = scmp.le.s32.totalorder 1, %s26
      %p431 = scmp.lt.s32.totalorder %s26, 3
      %p432 = pnand %p430, %p431
      %p433 = pneg %p432
      // Predicated region
      $region61: #{tpu_custom_call.1} parent=5 // pred_check
        _
      $region62: #{tpu_custom_call.1} parent=5 // pred_check_branch
        %435 = sbr.rel (%p432) target = $region64
      $region63: #{tpu_custom_call.1} parent=5 // pred_region
        %s436 = ssub.s32 %s26, 1
        // Predicated region
        $region65: #{tpu_custom_call.1} parent=63 // pred_check
          %p437 = pneg %p64
        $region66: #{tpu_custom_call.1} parent=63 // pred_check_branch
          %439 = sbr.rel (%p437) target = $region68
        $region67: #{tpu_custom_call.1} parent=63 // pred_region
          %440 = dma.done [#allocation8], 64
        $region68: #{tpu_custom_call.1} parent=63 // pred_fallthru
          _
        %s441 = sand.u32 %s31, 1
        %s442 = scalar_lea.sflag [#allocation11], %s441
        %s443 = sand.u32 %s79, 1
        %s444 = smul.addr %s443, 4
        %s445 = scalar_lea.vmem [#allocation10], %s444
        // Predicated region
        $region69: #{tpu_custom_call.1} parent=63 // pred_check
          %p446 = pneg %p92
        $region70: #{tpu_custom_call.1} parent=63 // pred_check_branch
          %448 = sbr.rel (%p446) target = $region72
        $region71: #{tpu_custom_call.1} parent=63 // pred_region
          %449 = dma.done %s442, 64
        $region72: #{tpu_custom_call.1} parent=63 // pred_fallthru
          _
        // Predicated region
        $region73: #{tpu_custom_call.1} parent=63 // pred_check
          %p450 = pneg %p118
        $region74: #{tpu_custom_call.1} parent=63 // pred_check_branch
          %452 = sbr.rel (%p450) target = $region76
        $region75: #{tpu_custom_call.1} parent=63 // pred_region
          %453 = dma.done [#allocation11], 64
        $region76: #{tpu_custom_call.1} parent=63 // pred_fallthru
          _
        // Predicated region
        $region77: #{tpu_custom_call.1} parent=63 // pred_check
          %p454 = pneg %p139
        $region78: #{tpu_custom_call.1} parent=63 // pred_check_branch
          %456 = sbr.rel (%p454) target = $region80
        $region79: #{tpu_custom_call.1} parent=63 // pred_region
          %457 = dma.done [#allocation14], 256
        $region80: #{tpu_custom_call.1} parent=63 // pred_fallthru
          _
        // Predicated region
        $region81: #{tpu_custom_call.1} parent=63 // pred_check
          %p458 = pneg %p223
        $region82: #{tpu_custom_call.1} parent=63 // pred_check_branch
          %460 = sbr.rel (%p458) target = $region84
        $region83: #{tpu_custom_call.1} parent=63 // pred_region
          %461 = dma.done [#allocation14], 256
        $region84: #{tpu_custom_call.1} parent=63 // pred_fallthru
          _
        // Predicated region
        $region85: #{tpu_custom_call.1} parent=63 // pred_check
          %p462 = pneg %p244
        $region86: #{tpu_custom_call.1} parent=63 // pred_check_branch
          %464 = sbr.rel (%p462) target = $region88
        $region87: #{tpu_custom_call.1} parent=63 // pred_region
          %465 = dma.done [#allocation17], 16
        $region88: #{tpu_custom_call.1} parent=63 // pred_fallthru
          _
        %p466 = pneg %p64
        %p467 = pneg %p61
        %s468 = sand.u32 %s31, 1
        %s469 = scalar_lea.sflag [#allocation11], %s468
        %s470 = sand.u32 %s79, 1
        %s471 = smul.addr %s470, 4
        %s472 = scalar_lea.vmem [#allocation10], %s471
        %p473 = pneg %p92
        %p474 = pneg %p89
        %p475 = pneg %p118
        %p476 = pneg %p115
        %p477 = pneg %p139
        %p478 = pneg %p136
        %p479 = pneg %p160
        %p480 = pneg %p157
        %p481 = pneg %p181
        %p482 = pneg %p178
        %p483 = pneg %p202
        %p484 = pneg %p199
        %p485 = pneg %p223
        %p486 = pneg %p220
        %p487 = pneg %p244
        %p488 = pneg %p241
        %p489 = pneg %p265
        %p490 = pneg %p262
        %p491 = pneg %p286
        %p492 = pneg %p283
        %p493 = pneg %p314
        %p494 = pneg %p311
        %s495 = sand.u32 %s301, 1
        %s496 = scalar_lea.sflag [#allocation9], %s495
        %s497 = sand.u32 %s301, 1
        %s498 = smul.addr %s497, 8
        %s499 = scalar_lea.vmem [#allocation18], %s498
        %p501 = scmp.eq.s32.totalorder %s36, 0
        // Predicated region
        $region89: #{tpu_custom_call.1} parent=63 // pred_check
          %p502 = pneg %p501
        $region90: #{tpu_custom_call.1} parent=63 // pred_check_branch
          %504 = sbr.rel (%p502) target = $region92
        $region91: #{tpu_custom_call.1} parent=63 // pred_region
          %v505 = vld [vmem:[#allocation7] sm:$0xf]
          %v506 = vld [vmem:[#allocation12] sm:$0xf]
          %v507 = vld [vmem:[#allocation13] sm:$0xf]
          %v508 = vld [vmem:[#allocation13 + $0x4] sm:$0xf]
          %v509 = vld [vmem:[#allocation13 + $0x8] sm:$0xf]
          %v510 = vld [vmem:[#allocation13 + $0xc] sm:$0xf]
          %v511 = vld [vmem:[%s4] sm:$0x1]
          %v513 = vlaneseq
          %v514 = vshrl.u32 %v513, 7
          %v515 = vsub.s32 0, %v514
          %v516 = vrot.slane %v511, %v515
          %v522 = vunpack.c.l.b16 %v507
          %v523 = vunpack.c.l.b16 %v508
          %v524 = vunpack.c.l.b16 %v509
          %v525 = vunpack.c.l.b16 %v510
          %v526 = vpack.c.b16 %v523, %v522
          %v527 = vpack.c.b16 %v525, %v524
          %vm530 = vcmask 261120
          %v532 = vsel %vm530, %v505, 0
          %534 = vmatprep.subr.bf16.mxu0 0
          %535 = vmatpush1.bf16.msra.mxu0 %v526
          %536 = vmatprep.subr.bf16.mxu0 0
          %537 = vmatpush1.bf16.msra.mxu0 %v527
          %538 = vmatprep.subr.bf16.mxu0 0
          %539 = vmatpush1.bf16.msra.mxu0 0
          %540 = vmatprep.subr.bf16.mxu0 0
          %541 = vmatpush1.bf16.msra.mxu0 0
          %542 = vmatprep.subr.bf16.mxu0 0
          %543 = vmatpush1.bf16.msra.mxu0 0
          %544 = vmatprep.subr.bf16.mxu0 0
          %545 = vmatpush1.bf16.msra.mxu0 0
          %546 = vmatprep.subr.bf16.mxu0 0
          %547 = vmatpush1.bf16.msra.mxu0 0
          %548 = vmatprep.subr.bf16.mxu0 0
          %549 = vmatpush1.bf16.msra.mxu0 0
          %550 = vmatprep.subr.bf16.mxu0 0
          %551 = vmatpush1.bf16.msra.mxu0 0
          %552 = vmatprep.subr.bf16.mxu0 0
          %553 = vmatpush1.bf16.msra.mxu0 0
          %554 = vmatprep.subr.bf16.mxu0 0
          %555 = vmatpush1.bf16.msra.mxu0 0
          %556 = vmatprep.subr.bf16.mxu0 0
          %557 = vmatpush1.bf16.msra.mxu0 0
          %558 = vmatprep.subr.bf16.mxu0 0
          %559 = vmatpush1.bf16.msra.mxu0 0
          %560 = vmatprep.subr.bf16.mxu0 0
          %561 = vmatpush1.bf16.msra.mxu0 0
          %562 = vmatprep.subr.bf16.mxu0 0
          %563 = vmatpush1.bf16.msra.mxu0 0
          %564 = vmatprep.subr.bf16.mxu0 0
          %565 = vmatpush1.bf16.msra.mxu0 0
          %566 = vmatprep.mubr.bf16.mxu0 0
          %567 = vmatmul.mubr.bf16.gmra.mrb[0].mxu0 %v532
          %v568 = vpop.f32.mrb[0].mxu0
          %v569 = vadd.f32 %v516, %v568
          %v570 = vpop.f32.mrb[0].mxu0
          %v571 = vpop.f32.mrb[0].mxu0
          %v572 = vpop.f32.mrb[0].mxu0
          %573 = vdwg.mxu0
          %v574 = vld [vmem:[#allocation15] sm:$0xf]
          %v575 = vld [vmem:[#allocation15 + $0x4] sm:$0xf]
          %v576 = vld [vmem:[#allocation15 + $0x8] sm:$0xf]
          %v577 = vld [vmem:[#allocation15 + $0xc] sm:$0xf]
          %v578 = vld [vmem:[#allocation16] sm:$0x1]
          %v580 = vlaneseq
          %v581 = vshrl.u32 %v580, 7
          %v582 = vsub.s32 0, %v581
          %v583 = vrot.slane %v578, %v582
          %v589 = vunpack.c.l.b16 %v574
          %v590 = vunpack.c.l.b16 %v575
          %v591 = vunpack.c.l.b16 %v576
          %v592 = vunpack.c.l.b16 %v577
          %v593 = vpack.c.b16 %v590, %v589
          %v594 = vpack.c.b16 %v592, %v591
          %v598 = vsel %vm530, %v506, 0
          %600 = vmatprep.subr.bf16.mxu0 0
          %601 = vmatpush1.bf16.msra.mxu0 %v593
          %602 = vmatprep.subr.bf16.mxu0 0
          %603 = vmatpush1.bf16.msra.mxu0 %v594
          %604 = vmatprep.subr.bf16.mxu0 0
          %605 = vmatpush1.bf16.msra.mxu0 0
          %606 = vmatprep.subr.bf16.mxu0 0
          %607 = vmatpush1.bf16.msra.mxu0 0
          %608 = vmatprep.subr.bf16.mxu0 0
          %609 = vmatpush1.bf16.msra.mxu0 0
          %610 = vmatprep.subr.bf16.mxu0 0
          %611 = vmatpush1.bf16.msra.mxu0 0
          %612 = vmatprep.subr.bf16.mxu0 0
          %613 = vmatpush1.bf16.msra.mxu0 0
          %614 = vmatprep.subr.bf16.mxu0 0
          %615 = vmatpush1.bf16.msra.mxu0 0
          %616 = vmatprep.subr.bf16.mxu0 0
          %617 = vmatpush1.bf16.msra.mxu0 0
          %618 = vmatprep.subr.bf16.mxu0 0
          %619 = vmatpush1.bf16.msra.mxu0 0
          %620 = vmatprep.subr.bf16.mxu0 0
          %621 = vmatpush1.bf16.msra.mxu0 0
          %622 = vmatprep.subr.bf16.mxu0 0
          %623 = vmatpush1.bf16.msra.mxu0 0
          %624 = vmatprep.subr.bf16.mxu0 0
          %625 = vmatpush1.bf16.msra.mxu0 0
          %626 = vmatprep.subr.bf16.mxu0 0
          %627 = vmatpush1.bf16.msra.mxu0 0
          %628 = vmatprep.subr.bf16.mxu0 0
          %629 = vmatpush1.bf16.msra.mxu0 0
          %630 = vmatprep.subr.bf16.mxu0 0
          %631 = vmatpush1.bf16.msra.mxu0 0
          %632 = vmatprep.mubr.bf16.mxu0 0
          %633 = vmatmul.mubr.bf16.gmra.mrb[0].mxu0 %v598
          %v634 = vpop.f32.mrb[0].mxu0
          %v635 = vadd.f32 %v583, %v634
          %v636 = vpop.f32.mrb[0].mxu0
          %v637 = vpop.f32.mrb[0].mxu0
          %v638 = vpop.f32.mrb[0].mxu0
          %639 = vdwg.mxu0
          %640 = vxpose.xlu0.b32.start [1/16] %v569, 128
          %641 = vxpose.xlu0.b32.cont [2/16] 0.0, 128
          %642 = vxpose.xlu0.b32.cont [3/16] 0.0, 128
          %643 = vxpose.xlu0.b32.cont [4/16] 0.0, 128
          %644 = vxpose.xlu0.b32.cont [5/16] 0.0, 128
          %645 = vxpose.xlu0.b32.cont [6/16] 0.0, 128
          %646 = vxpose.xlu0.b32.cont [7/16] 0.0, 128
          %647 = vxpose.xlu0.b32.cont [8/16] 0.0, 128
          %648 = vxpose.xlu0.b32.cont [9/16] 0.0, 128
          %649 = vxpose.xlu0.b32.cont [10/16] 0.0, 128
          %650 = vxpose.xlu0.b32.cont [11/16] 0.0, 128
          %651 = vxpose.xlu0.b32.cont [12/16] 0.0, 128
          %652 = vxpose.xlu0.b32.cont [13/16] 0.0, 128
          %653 = vxpose.xlu0.b32.cont [14/16] 0.0, 128
          %654 = vxpose.xlu0.b32.cont [15/16] 0.0, 128
          %655 = vxpose.xlu0.b32.end [16/16] 0.0, 128
          %v656 = vpop.trf.xlu0
          %v657 = vpop.trf.xlu0
          %v658 = vpop.trf.xlu0
          %v659 = vpop.trf.xlu0
          %v660 = vpop.trf.xlu0
          %v661 = vpop.trf.xlu0
          %v662 = vpop.trf.xlu0
          %v663 = vpop.trf.xlu0
          %v664 = vpop.trf.xlu0
          %v665 = vpop.trf.xlu0
          %v666 = vpop.trf.xlu0
          %v667 = vpop.trf.xlu0
          %v668 = vpop.trf.xlu0
          %v669 = vpop.trf.xlu0
          %v670 = vpop.trf.xlu0
          %v671 = vpop.trf.xlu0
          %v672 = vpack.c.bf16 %v656, %v656
          %v673 = vpack.c.bf16 %v657, %v657
          %v674 = vpack.c.bf16 %v658, %v658
          %v675 = vpack.c.bf16 %v659, %v659
          %vm676 = vcmask 60416
          %677 = vst.msk [vmem:[#allocation2] sm:$0xf] %vm676, %v672
          %678 = vst.msk [vmem:[#allocation2 + $0x4] sm:$0xf] %vm676, %v673
          %679 = vst.msk [vmem:[#allocation2 + $0x8] sm:$0xf] %vm676, %v674
          %680 = vst.msk [vmem:[#allocation2 + $0xc] sm:$0xf] %vm676, %v675
          %682 = vrot.lane.b32.xlu0 %v635, 120
          %v683 = vpop.permute.xlu0 %682
          %685 = vrot.lane.b32.xlu0 %v635, 112
          %v686 = vpop.permute.xlu0 %685
          %688 = vrot.lane.b32.xlu0 %v635, 104
          %v689 = vpop.permute.xlu0 %688
          %v691 = vcombine.low %v635, %v686
          %v692 = vcombine.high %v635, %v686
          %v694 = vunpack.c.l.s4 1983009808
          %v695 = vunpack.c.0.s8 %v694
          %v696 = vlaneseq
          %v697 = vshrl.u32 %v696, 7
          %v698 = vsub.s32 %v695, %v697
          %v699 = vrot.slane %v691, %v698
          %v701 = vunpack.c.l.s4 1983009808
          %v702 = vunpack.c.0.s8 %v701
          %v703 = vlaneseq
          %v704 = vshrl.u32 %v703, 7
          %v705 = vsub.s32 %v702, %v704
          %v706 = vrot.slane %v692, %v705
          %v707 = vcombine.low %v683, %v689
          %v708 = vcombine.high %v683, %v689
          %v710 = vunpack.c.l.s4 1983009808
          %v711 = vunpack.c.0.s8 %v710
          %v712 = vlaneseq
          %v713 = vshrl.u32 %v712, 7
          %v714 = vsub.s32 %v711, %v713
          %v715 = vrot.slane %v707, %v714
          %v717 = vunpack.c.l.s4 1983009808
          %v718 = vunpack.c.0.s8 %v717
          %v719 = vlaneseq
          %v720 = vshrl.u32 %v719, 7
          %v721 = vsub.s32 %v718, %v720
          %v722 = vrot.slane %v708, %v721
          %v723 = vcombine.low %v699, %v715
          %v724 = vcombine.high %v699, %v715
          %v726 = vunpack.c.l.s4 1934713408
          %v727 = vunpack.c.0.s8 %v726
          %v728 = vlaneseq
          %v729 = vshrl.u32 %v728, 7
          %v730 = vsub.s32 %v727, %v729
          %v731 = vrot.slane %v723, %v730
          %v733 = vunpack.c.l.s4 1934713408
          %v734 = vunpack.c.0.s8 %v733
          %v735 = vlaneseq
          %v736 = vshrl.u32 %v735, 7
          %v737 = vsub.s32 %v734, %v736
          %v738 = vrot.slane %v724, %v737
          %v739 = vcombine.low %v706, %v722
          %v740 = vcombine.high %v706, %v722
          %v742 = vunpack.c.l.s4 1934713408
          %v743 = vunpack.c.0.s8 %v742
          %v744 = vlaneseq
          %v745 = vshrl.u32 %v744, 7
          %v746 = vsub.s32 %v743, %v745
          %v747 = vrot.slane %v739, %v746
          %v749 = vunpack.c.l.s4 1934713408
          %v750 = vunpack.c.0.s8 %v749
          %v751 = vlaneseq
          %v752 = vshrl.u32 %v751, 7
          %v753 = vsub.s32 %v750, %v752
          %v754 = vrot.slane %v740, %v753
          %v755 = vcombine.high %v731, 0.0
          %v756 = vcombine.high %v738, 0.0
          %v757 = vcombine.high %v747, 0.0
          %v758 = vcombine.high %v754, 0.0
          %v759 = vcombine.low %v731, %v738
          %v761 = vunpack.c.l.s4 1983009808
          %v762 = vunpack.c.0.s8 %v761
          %v763 = vlaneseq
          %v764 = vshrl.u32 %v763, 7
          %v765 = vsub.s32 %v762, %v764
          %v766 = vrot.slane %v759, %v765
          %v767 = vcombine.low %v755, %v756
          %v769 = vunpack.c.l.s4 1983009808
          %v770 = vunpack.c.0.s8 %v769
          %v771 = vlaneseq
          %v772 = vshrl.u32 %v771, 7
          %v773 = vsub.s32 %v770, %v772
          %v774 = vrot.slane %v767, %v773
          %v775 = vcombine.low %v747, %v754
          %v777 = vunpack.c.l.s4 1983009808
          %v778 = vunpack.c.0.s8 %v777
          %v779 = vlaneseq
          %v780 = vshrl.u32 %v779, 7
          %v781 = vsub.s32 %v778, %v780
          %v782 = vrot.slane %v775, %v781
          %v783 = vcombine.low %v757, %v758
          %v785 = vunpack.c.l.s4 1983009808
          %v786 = vunpack.c.0.s8 %v785
          %v787 = vlaneseq
          %v788 = vshrl.u32 %v787, 7
          %v789 = vsub.s32 %v786, %v788
          %v790 = vrot.slane %v783, %v789
          %v791 = vcombine.low %v766, %v774
          %v792 = vcombine.high %v766, %v774
          %v794 = vunpack.c.l.s4 1934713408
          %v795 = vunpack.c.0.s8 %v794
          %v796 = vlaneseq
          %v797 = vshrl.u32 %v796, 7
          %v798 = vsub.s32 %v795, %v797
          %v799 = vrot.slane %v791, %v798
          %v801 = vunpack.c.l.s4 1934713408
          %v802 = vunpack.c.0.s8 %v801
          %v803 = vlaneseq
          %v804 = vshrl.u32 %v803, 7
          %v805 = vsub.s32 %v802, %v804
          %v806 = vrot.slane %v792, %v805
          %v807 = vcombine.low %v782, %v790
          %v808 = vcombine.high %v782, %v790
          %v810 = vunpack.c.l.s4 1934713408
          %v811 = vunpack.c.0.s8 %v810
          %v812 = vlaneseq
          %v813 = vshrl.u32 %v812, 7
          %v814 = vsub.s32 %v811, %v813
          %v815 = vrot.slane %v807, %v814
          %v817 = vunpack.c.l.s4 1934713408
          %v818 = vunpack.c.0.s8 %v817
          %v819 = vlaneseq
          %v820 = vshrl.u32 %v819, 7
          %v821 = vsub.s32 %v818, %v820
          %v822 = vrot.slane %v808, %v821
          %v823 = vcombine.low %v799, %v815
          %v824 = vcombine.high %v799, %v815
          %v825 = vcombine.low %v806, %v822
          %v826 = vcombine.high %v806, %v822
          %v827 = vpack.c.bf16 %v823, %v823
          %v828 = vpack.c.bf16 %v824, %v824
          %v829 = vpack.c.bf16 %v825, %v825
          %v830 = vpack.c.bf16 %v826, %v826
          %831 = vst.msk [vmem:[#allocation3] sm:$0xf] %vm676, %v827
          %832 = vst.msk [vmem:[#allocation3 + $0x4] sm:$0xf] %vm676, %v828
          %833 = vst.msk [vmem:[#allocation3 + $0x8] sm:$0xf] %vm676, %v829
          %834 = vst.msk [vmem:[#allocation3 + $0xc] sm:$0xf] %vm676, %v830
        $region92: #{tpu_custom_call.1} parent=63 // pred_fallthru
          _
        %v835 = vld [vmem:[%s445] sm:$0xf]
        %v836 = vld [vmem:[%s5] sm:$0xf]
        %v837 = vld [vmem:[%s5 + $0x4] sm:$0xf]
        %v838 = vld [vmem:[%s5 + $0x8] sm:$0xf]
        %v839 = vld [vmem:[%s5 + $0xc] sm:$0xf]
        %v840 = vld [vmem:[%s6] sm:$0x1]
        %v842 = vlaneseq
        %v843 = vshrl.u32 %v842, 7
        %v844 = vsub.s32 0, %v843
        %v845 = vrot.slane %v840, %v844
        %v851 = vunpack.c.l.b16 %v836
        %v852 = vunpack.c.l.b16 %v837
        %v853 = vunpack.c.l.b16 %v838
        %v854 = vunpack.c.l.b16 %v839
        %v855 = vpack.c.b16 %v852, %v851
        %v856 = vpack.c.b16 %v854, %v853
        %vm859 = vcmask 261120
        %v861 = vsel %vm859, %v835, 0
        %863 = vmatprep.subr.bf16.mxu0 0
        %864 = vmatpush1.bf16.msra.mxu0 %v855
        %865 = vmatprep.subr.bf16.mxu0 0
        %866 = vmatpush1.bf16.msra.mxu0 %v856
        %867 = vmatprep.subr.bf16.mxu0 0
        %868 = vmatpush1.bf16.msra.mxu0 0
        %869 = vmatprep.subr.bf16.mxu0 0
        %870 = vmatpush1.bf16.msra.mxu0 0
        %871 = vmatprep.subr.bf16.mxu0 0
        %872 = vmatpush1.bf16.msra.mxu0 0
        %873 = vmatprep.subr.bf16.mxu0 0
        %874 = vmatpush1.bf16.msra.mxu0 0
        %875 = vmatprep.subr.bf16.mxu0 0
        %876 = vmatpush1.bf16.msra.mxu0 0
        %877 = vmatprep.subr.bf16.mxu0 0
        %878 = vmatpush1.bf16.msra.mxu0 0
        %879 = vmatprep.subr.bf16.mxu0 0
        %880 = vmatpush1.bf16.msra.mxu0 0
        %881 = vmatprep.subr.bf16.mxu0 0
        %882 = vmatpush1.bf16.msra.mxu0 0
        %883 = vmatprep.subr.bf16.mxu0 0
        %884 = vmatpush1.bf16.msra.mxu0 0
        %885 = vmatprep.subr.bf16.mxu0 0
        %886 = vmatpush1.bf16.msra.mxu0 0
        %887 = vmatprep.subr.bf16.mxu0 0
        %888 = vmatpush1.bf16.msra.mxu0 0
        %889 = vmatprep.subr.bf16.mxu0 0
        %890 = vmatpush1.bf16.msra.mxu0 0
        %891 = vmatprep.subr.bf16.mxu0 0
        %892 = vmatpush1.bf16.msra.mxu0 0
        %893 = vmatprep.subr.bf16.mxu0 0
        %894 = vmatpush1.bf16.msra.mxu0 0
        %895 = vmatprep.mubr.bf16.mxu0 0
        %896 = vmatmul.mubr.bf16.gmra.mrb[0].mxu0 %v861
        %v897 = vpop.f32.mrb[0].mxu0
        %v898 = vadd.f32 %v845, %v897
        %v899 = vpop.f32.mrb[0].mxu0
        %v900 = vpop.f32.mrb[0].mxu0
        %v901 = vpop.f32.mrb[0].mxu0
        %902 = vdwg.mxu0
        %v903 = vpack.c.bf16 %v898, %v898
        %905 = vrot.lane.b32.xlu0 %v903, 120
        %v906 = vpop.permute.xlu0 %905
        %907 = vrot.lane.b32.xlu0 %v903, 112
        %v908 = vpop.permute.xlu0 %907
        %909 = vrot.lane.b32.xlu0 %v903, 104
        %v910 = vpop.permute.xlu0 %909
        %v912 = vunpack.c.l.s4 1983009808
        %v913 = vunpack.c.0.s8 %v912
        %v914 = vlaneseq
        %v915 = vshrl.u32 %v914, 7
        %v916 = vsub.s32 %v913, %v915
        %v917 = vrot.slane %v903, %v916
        %v920 = vunpack.c.l.s4 1983009808
        %v921 = vunpack.c.0.s8 %v920
        %v922 = vlaneseq
        %v923 = vshrl.u32 %v922, 7
        %v924 = vsub.s32 %v921, %v923
        %v925 = vrot.slane %v908, %v924
        %v926 = vcombine.low %v917, %v925
        %v927 = vcombine.high %v917, %v925
        %v929 = vunpack.c.l.s4 1934713408
        %v930 = vunpack.c.0.s8 %v929
        %v931 = vlaneseq
        %v932 = vshrl.u32 %v931, 7
        %v933 = vsub.s32 %v930, %v932
        %v934 = vrot.slane %v926, %v933
        %v936 = vunpack.c.l.s4 1934713408
        %v937 = vunpack.c.0.s8 %v936
        %v938 = vlaneseq
        %v939 = vshrl.u32 %v938, 7
        %v940 = vsub.s32 %v937, %v939
        %v941 = vrot.slane %v927, %v940
        %v942 = vcombine.high %v934, 0
        %v943 = vcombine.high %v941, 0
        %v946 = vunpack.c.l.s4 1983009808
        %v947 = vunpack.c.0.s8 %v946
        %v948 = vlaneseq
        %v949 = vshrl.u32 %v948, 7
        %v950 = vsub.s32 %v947, %v949
        %v951 = vrot.slane %v906, %v950
        %v954 = vunpack.c.l.s4 1983009808
        %v955 = vunpack.c.0.s8 %v954
        %v956 = vlaneseq
        %v957 = vshrl.u32 %v956, 7
        %v958 = vsub.s32 %v955, %v957
        %v959 = vrot.slane %v910, %v958
        %v960 = vcombine.low %v951, %v959
        %v961 = vcombine.high %v951, %v959
        %v963 = vunpack.c.l.s4 1934713408
        %v964 = vunpack.c.0.s8 %v963
        %v965 = vlaneseq
        %v966 = vshrl.u32 %v965, 7
        %v967 = vsub.s32 %v964, %v966
        %v968 = vrot.slane %v960, %v967
        %v970 = vunpack.c.l.s4 1934713408
        %v971 = vunpack.c.0.s8 %v970
        %v972 = vlaneseq
        %v973 = vshrl.u32 %v972, 7
        %v974 = vsub.s32 %v971, %v973
        %v975 = vrot.slane %v961, %v974
        %v976 = vcombine.high %v968, 0
        %v977 = vcombine.high %v975, 0
        %v980 = vpack.i.b16 %v968, %v934
        %v982 = vshrl.u32 %v934, 16
        %v983 = vshrl.u32 %v968, 16
        %v984 = vpack.i.b16 %v983, %v982
        %v988 = vpack.i.b16 %v976, %v942
        %v990 = vshrl.u32 %v942, 16
        %v991 = vshrl.u32 %v976, 16
        %v992 = vpack.i.b16 %v991, %v990
        %v996 = vpack.i.b16 %v975, %v941
        %v998 = vshrl.u32 %v941, 16
        %v999 = vshrl.u32 %v975, 16
        %v1000 = vpack.i.b16 %v999, %v998
        %v1004 = vpack.i.b16 %v977, %v943
        %v1006 = vshrl.u32 %v943, 16
        %v1007 = vshrl.u32 %v977, 16
        %v1008 = vpack.i.b16 %v1007, %v1006
        %v1010 = vcombine.low %v980, %v996
        %v1012 = vunpack.c.l.s4 1983009808
        %v1013 = vunpack.c.0.s8 %v1012
        %v1014 = vlaneseq
        %v1015 = vshrl.u32 %v1014, 7
        %v1016 = vsub.s32 %v1013, %v1015
        %v1017 = vrot.slane %v1010, %v1016
        %v1018 = vcombine.low %v988, %v1004
        %v1020 = vunpack.c.l.s4 1983009808
        %v1021 = vunpack.c.0.s8 %v1020
        %v1022 = vlaneseq
        %v1023 = vshrl.u32 %v1022, 7
        %v1024 = vsub.s32 %v1021, %v1023
        %v1025 = vrot.slane %v1018, %v1024
        %v1026 = vcombine.low %v1017, %v1025
        %v1028 = vunpack.c.l.s4 1934713408
        %v1029 = vunpack.c.0.s8 %v1028
        %v1030 = vlaneseq
        %v1031 = vshrl.u32 %v1030, 7
        %v1032 = vsub.s32 %v1029, %v1031
        %v1033 = vrot.slane %v1026, %v1032
        %v1034 = vcombine.high %v1033, 0
        %v1035 = vcombine.low %v984, %v1000
        %v1037 = vunpack.c.l.s4 1983009808
        %v1038 = vunpack.c.0.s8 %v1037
        %v1039 = vlaneseq
        %v1040 = vshrl.u32 %v1039, 7
        %v1041 = vsub.s32 %v1038, %v1040
        %v1042 = vrot.slane %v1035, %v1041
        %v1043 = vcombine.low %v992, %v1008
        %v1045 = vunpack.c.l.s4 1983009808
        %v1046 = vunpack.c.0.s8 %v1045
        %v1047 = vlaneseq
        %v1048 = vshrl.u32 %v1047, 7
        %v1049 = vsub.s32 %v1046, %v1048
        %v1050 = vrot.slane %v1043, %v1049
        %v1051 = vcombine.low %v1042, %v1050
        %v1053 = vunpack.c.l.s4 1934713408
        %v1054 = vunpack.c.0.s8 %v1053
        %v1055 = vlaneseq
        %v1056 = vshrl.u32 %v1055, 7
        %v1057 = vsub.s32 %v1054, %v1056
        %v1058 = vrot.slane %v1051, %v1057
        %v1059 = vcombine.high %v1058, 0
        %v1062 = vpack.i.b16 %v1058, %v1033
        %v1063 = vshrl.u32 %v1033, 16
        %v1064 = vshrl.u32 %v1058, 16
        %v1065 = vpack.i.b16 %v1064, %v1063
        %v1068 = vpack.i.b16 %v1059, %v1034
        %v1069 = vshrl.u32 %v1034, 16
        %v1070 = vshrl.u32 %v1059, 16
        %v1071 = vpack.i.b16 %v1070, %v1069
        %vm1072 = vcmask 7168
        %1073 = vst.msk [vmem:[#allocation4] sm:$0xff] %vm1072, -inf
        %1074 = vst.msk [vmem:[#allocation4 + $0x8] sm:$0xff] %vm1072, -inf
        %1075 = vst.msk [vmem:[#allocation4 + $0x10] sm:$0xff] %vm1072, -inf
        %1076 = vst.msk [vmem:[#allocation4 + $0x18] sm:$0xff] %vm1072, -inf
        %1077 = vst.msk [vmem:[#allocation5] sm:$0xff] %vm1072, 0.0
        %1078 = vst.msk [vmem:[#allocation5 + $0x8] sm:$0xff] %vm1072, 0.0
        %1079 = vst.msk [vmem:[#allocation5 + $0x10] sm:$0xff] %vm1072, 0.0
        %1080 = vst.msk [vmem:[#allocation5 + $0x18] sm:$0xff] %vm1072, 0.0
        %vm1081 = vcmask 64512
        %1082 = vst.msk [vmem:[#allocation6] sm:$0xff] %vm1081, 0.0
        %1083 = vst.msk [vmem:[#allocation6 + $0x8] sm:$0xff] %vm1081, 0.0
        %1084 = vst.msk [vmem:[#allocation6 + $0x10] sm:$0xff] %vm1081, 0.0
        %1085 = vst.msk [vmem:[#allocation6 + $0x18] sm:$0xff] %vm1081, 0.0
        %v1086 = vld [vmem:[#allocation2] sm:$0xf]
        %v1087 = vld [vmem:[#allocation2 + $0x4] sm:$0xf]
        %v1088 = vld [vmem:[#allocation2 + $0x8] sm:$0xf]
        %v1089 = vld [vmem:[#allocation2 + $0xc] sm:$0xf]
        %v1090 = vld [vmem:[#allocation3] sm:$0xf]
        %v1091 = vld [vmem:[#allocation3 + $0x4] sm:$0xf]
        %v1092 = vld [vmem:[#allocation3 + $0x8] sm:$0xf]
        %v1093 = vld [vmem:[#allocation3 + $0xc] sm:$0xf]
        %v1095 = vsel %vm1081, %v1062, 0
        %vm1097 = vcmask 1043456
        %v1099 = vsel %vm1097, %v1086, 0
        %1101 = vmatprep.subr.bf16.mxu0 0
        %1102 = vmatpush1.bf16.msra.mxu0 %v1099
        %1103 = vmatprep.subr.bf16.mxu0 0
        %1104 = vmatpush1.bf16.msra.mxu0 0
        %1105 = vmatprep.subr.bf16.mxu0 0
        %1106 = vmatpush1.bf16.msra.mxu0 0
        %1107 = vmatprep.subr.bf16.mxu0 0
        %1108 = vmatpush1.bf16.msra.mxu0 0
        %1109 = vmatprep.subr.bf16.mxu0 0
        %1110 = vmatpush1.bf16.msra.mxu0 0
        %1111 = vmatprep.subr.bf16.mxu0 0
        %1112 = vmatpush1.bf16.msra.mxu0 0
        %1113 = vmatprep.subr.bf16.mxu0 0
        %1114 = vmatpush1.bf16.msra.mxu0 0
        %1115 = vmatprep.subr.bf16.mxu0 0
        %1116 = vmatpush1.bf16.msra.mxu0 0
        %1117 = vmatprep.subr.bf16.mxu0 0
        %1118 = vmatpush1.bf16.msra.mxu0 0
        %1119 = vmatprep.subr.bf16.mxu0 0
        %1120 = vmatpush1.bf16.msra.mxu0 0
        %1121 = vmatprep.subr.bf16.mxu0 0
        %1122 = vmatpush1.bf16.msra.mxu0 0
        %1123 = vmatprep.subr.bf16.mxu0 0
        %1124 = vmatpush1.bf16.msra.mxu0 0
        %1125 = vmatprep.subr.bf16.mxu0 0
        %1126 = vmatpush1.bf16.msra.mxu0 0
        %1127 = vmatprep.subr.bf16.mxu0 0
        %1128 = vmatpush1.bf16.msra.mxu0 0
        %1129 = vmatprep.subr.bf16.mxu0 0
        %1130 = vmatpush1.bf16.msra.mxu0 0
        %1131 = vmatprep.subr.bf16.mxu0 0
        %1132 = vmatpush1.bf16.msra.mxu0 0
        %1133 = vmatprep.mubr.bf16.mxu0 0
        %1134 = vmatmul.mubr.bf16.gmra.mrb[0].mxu0 %v1095
        %v1135 = vpop.f32.mrb[0].mxu0
        %v1136 = vadd.f32 0.0, %v1135
        %v1137 = vpop.f32.mrb[0].mxu0
        %v1138 = vpop.f32.mrb[0].mxu0
        %v1139 = vpop.f32.mrb[0].mxu0
        %1140 = vdwg.mxu0
        %v1142 = vsel %vm1081, %v1065, 0
        %v1145 = vsel %vm1097, %v1087, 0
        %1147 = vmatprep.subr.bf16.mxu0 0
        %1148 = vmatpush1.bf16.msra.mxu0 %v1145
        %1149 = vmatprep.subr.bf16.mxu0 0
        %1150 = vmatpush1.bf16.msra.mxu0 0
        %1151 = vmatprep.subr.bf16.mxu0 0
        %1152 = vmatpush1.bf16.msra.mxu0 0
        %1153 = vmatprep.subr.bf16.mxu0 0
        %1154 = vmatpush1.bf16.msra.mxu0 0
        %1155 = vmatprep.subr.bf16.mxu0 0
        %1156 = vmatpush1.bf16.msra.mxu0 0
        %1157 = vmatprep.subr.bf16.mxu0 0
        %1158 = vmatpush1.bf16.msra.mxu0 0
        %1159 = vmatprep.subr.bf16.mxu0 0
        %1160 = vmatpush1.bf16.msra.mxu0 0
        %1161 = vmatprep.subr.bf16.mxu0 0
        %1162 = vmatpush1.bf16.msra.mxu0 0
        %1163 = vmatprep.subr.bf16.mxu0 0
        %1164 = vmatpush1.bf16.msra.mxu0 0
        %1165 = vmatprep.subr.bf16.mxu0 0
        %1166 = vmatpush1.bf16.msra.mxu0 0
        %1167 = vmatprep.subr.bf16.mxu0 0
        %1168 = vmatpush1.bf16.msra.mxu0 0
        %1169 = vmatprep.subr.bf16.mxu0 0
        %1170 = vmatpush1.bf16.msra.mxu0 0
        %1171 = vmatprep.subr.bf16.mxu0 0
        %1172 = vmatpush1.bf16.msra.mxu0 0
        %1173 = vmatprep.subr.bf16.mxu0 0
        %1174 = vmatpush1.bf16.msra.mxu0 0
        %1175 = vmatprep.subr.bf16.mxu0 0
        %1176 = vmatpush1.bf16.msra.mxu0 0
        %1177 = vmatprep.subr.bf16.mxu0 0
        %1178 = vmatpush1.bf16.msra.mxu0 0
        %1179 = vmatprep.mubr.bf16.mxu0 0
        %1180 = vmatmul.mubr.bf16.gmra.mrb[0].mxu0 %v1142
        %v1181 = vpop.f32.mrb[0].mxu0
        %v1182 = vadd.f32 0.0, %v1181
        %v1183 = vpop.f32.mrb[0].mxu0
        %v1184 = vpop.f32.mrb[0].mxu0
        %v1185 = vpop.f32.mrb[0].mxu0
        %1186 = vdwg.mxu0
        %v1188 = vsel %vm1081, %v1068, 0
        %v1191 = vsel %vm1097, %v1088, 0
        %1193 = vmatprep.subr.bf16.mxu0 0
        %1194 = vmatpush1.bf16.msra.mxu0 %v1191
        %1195 = vmatprep.subr.bf16.mxu0 0
        %1196 = vmatpush1.bf16.msra.mxu0 0
        %1197 = vmatprep.subr.bf16.mxu0 0
        %1198 = vmatpush1.bf16.msra.mxu0 0
        %1199 = vmatprep.subr.bf16.mxu0 0
        %1200 = vmatpush1.bf16.msra.mxu0 0
        %1201 = vmatprep.subr.bf16.mxu0 0
        %1202 = vmatpush1.bf16.msra.mxu0 0
        %1203 = vmatprep.subr.bf16.mxu0 0
        %1204 = vmatpush1.bf16.msra.mxu0 0
        %1205 = vmatprep.subr.bf16.mxu0 0
        %1206 = vmatpush1.bf16.msra.mxu0 0
        %1207 = vmatprep.subr.bf16.mxu0 0
        %1208 = vmatpush1.bf16.msra.mxu0 0
        %1209 = vmatprep.subr.bf16.mxu0 0
        %1210 = vmatpush1.bf16.msra.mxu0 0
        %1211 = vmatprep.subr.bf16.mxu0 0
        %1212 = vmatpush1.bf16.msra.mxu0 0
        %1213 = vmatprep.subr.bf16.mxu0 0
        %1214 = vmatpush1.bf16.msra.mxu0 0
        %1215 = vmatprep.subr.bf16.mxu0 0
        %1216 = vmatpush1.bf16.msra.mxu0 0
        %1217 = vmatprep.subr.bf16.mxu0 0
        %1218 = vmatpush1.bf16.msra.mxu0 0
        %1219 = vmatprep.subr.bf16.mxu0 0
        %1220 = vmatpush1.bf16.msra.mxu0 0
        %1221 = vmatprep.subr.bf16.mxu0 0
        %1222 = vmatpush1.bf16.msra.mxu0 0
        %1223 = vmatprep.subr.bf16.mxu0 0
        %1224 = vmatpush1.bf16.msra.mxu0 0
        %1225 = vmatprep.mubr.bf16.mxu0 0
        %1226 = vmatmul.mubr.bf16.gmra.mrb[0].mxu0 %v1188
        %v1227 = vpop.f32.mrb[0].mxu0
        %v1228 = vadd.f32 0.0, %v1227
        %v1229 = vpop.f32.mrb[0].mxu0
        %v1230 = vpop.f32.mrb[0].mxu0
        %v1231 = vpop.f32.mrb[0].mxu0
        %1232 = vdwg.mxu0
        %v1234 = vsel %vm1081, %v1071, 0
        %v1237 = vsel %vm1097, %v1089, 0
        %1239 = vmatprep.subr.bf16.mxu0 0
        %1240 = vmatpush1.bf16.msra.mxu0 %v1237
        %1241 = vmatprep.subr.bf16.mxu0 0
        %1242 = vmatpush1.bf16.msra.mxu0 0
        %1243 = vmatprep.subr.bf16.mxu0 0
        %1244 = vmatpush1.bf16.msra.mxu0 0
        %1245 = vmatprep.subr.bf16.mxu0 0
        %1246 = vmatpush1.bf16.msra.mxu0 0
        %1247 = vmatprep.subr.bf16.mxu0 0
        %1248 = vmatpush1.bf16.msra.mxu0 0
        %1249 = vmatprep.subr.bf16.mxu0 0
        %1250 = vmatpush1.bf16.msra.mxu0 0
        %1251 = vmatprep.subr.bf16.mxu0 0
        %1252 = vmatpush1.bf16.msra.mxu0 0
        %1253 = vmatprep.subr.bf16.mxu0 0
        %1254 = vmatpush1.bf16.msra.mxu0 0
        %1255 = vmatprep.subr.bf16.mxu0 0
        %1256 = vmatpush1.bf16.msra.mxu0 0
        %1257 = vmatprep.subr.bf16.mxu0 0
        %1258 = vmatpush1.bf16.msra.mxu0 0
        %1259 = vmatprep.subr.bf16.mxu0 0
        %1260 = vmatpush1.bf16.msra.mxu0 0
        %1261 = vmatprep.subr.bf16.mxu0 0
        %1262 = vmatpush1.bf16.msra.mxu0 0
        %1263 = vmatprep.subr.bf16.mxu0 0
        %1264 = vmatpush1.bf16.msra.mxu0 0
        %1265 = vmatprep.subr.bf16.mxu0 0
        %1266 = vmatpush1.bf16.msra.mxu0 0
        %1267 = vmatprep.subr.bf16.mxu0 0
        %1268 = vmatpush1.bf16.msra.mxu0 0
        %1269 = vmatprep.subr.bf16.mxu0 0
        %1270 = vmatpush1.bf16.msra.mxu0 0
        %1271 = vmatprep.mubr.bf16.mxu0 0
        %1272 = vmatmul.mubr.bf16.gmra.mrb[0].mxu0 %v1234
        %v1273 = vpop.f32.mrb[0].mxu0
        %v1274 = vadd.f32 0.0, %v1273
        %v1275 = vpop.f32.mrb[0].mxu0
        %v1276 = vpop.f32.mrb[0].mxu0
        %v1277 = vpop.f32.mrb[0].mxu0
        %1278 = vdwg.mxu0
        %v1279 = vld [vmem:[#allocation4] sm:$0xff]
        %v1280 = vld [vmem:[#allocation4 + $0x8] sm:$0xff]
        %v1281 = vld [vmem:[#allocation4 + $0x10] sm:$0xff]
        %v1282 = vld [vmem:[#allocation4 + $0x18] sm:$0xff]
        %v1283 = vsel %vm1081, %v1136, -inf
        %1284 = vmax.xlane.f32.xlu0 %v1283
        %v1285 = vpop.xlane.xlu0 %1284
        %v1286 = vsel %vm1081, %v1182, -inf
        %1287 = vmax.xlane.f32.xlu0 %v1286
        %v1288 = vpop.xlane.xlu0 %1287
        %v1289 = vsel %vm1081, %v1228, -inf
        %1290 = vmax.xlane.f32.xlu0 %v1289
        %v1291 = vpop.xlane.xlu0 %1290
        %v1292 = vsel %vm1081, %v1274, -inf
        %1293 = vmax.xlane.f32.xlu0 %v1292
        %v1294 = vpop.xlane.xlu0 %1293
        %v1295 = vmax.f32 %v1279, %v1285
        %v1296 = vmax.f32 %v1280, %v1288
        %v1297 = vmax.f32 %v1281, %v1291
        %v1298 = vmax.f32 %v1282, %v1294
        %v1299 = vsub.f32 %v1279, %v1295
        %v1300 = vsub.f32 %v1280, %v1296
        %v1301 = vsub.f32 %v1281, %v1297
        %v1302 = vsub.f32 %v1282, %v1298
        %v1303 = vmul.f32 %v1299, 1.442695
        %v1304 = vpow.pop %v1303
        %v1305 = vmul.f32 %v1300, 1.442695
        %v1306 = vpow.pop %v1305
        %v1307 = vmul.f32 %v1301, 1.442695
        %v1308 = vpow.pop %v1307
        %v1309 = vmul.f32 %v1302, 1.442695
        %v1310 = vpow.pop %v1309
        %1312 = vset.pattern.permute.xlu0 0
        %1313 = vperm.xlu0 %1312, %v1295
        %v1314 = vpop.permute.xlu0 %1313
        %1317 = vset.pattern.permute.xlu0 0
        %1318 = vperm.xlu0 %1317, %v1296
        %v1319 = vpop.permute.xlu0 %1318
        %1322 = vset.pattern.permute.xlu0 0
        %1323 = vperm.xlu0 %1322, %v1297
        %v1324 = vpop.permute.xlu0 %1323
        %1327 = vset.pattern.permute.xlu0 0
        %1328 = vperm.xlu0 %1327, %v1298
        %v1329 = vpop.permute.xlu0 %1328
        %v1331 = vsub.f32 %v1136, %v1314
        %v1332 = vsub.f32 %v1182, %v1319
        %v1333 = vsub.f32 %v1228, %v1324
        %v1334 = vsub.f32 %v1274, %v1329
        %v1335 = vmul.f32 %v1331, 1.442695
        %v1336 = vpow.pop %v1335
        %v1337 = vmul.f32 %v1332, 1.442695
        %v1338 = vpow.pop %v1337
        %v1339 = vmul.f32 %v1333, 1.442695
        %v1340 = vpow.pop %v1339
        %v1341 = vmul.f32 %v1334, 1.442695
        %v1342 = vpow.pop %v1341
        %v1343 = vld [vmem:[#allocation5] sm:$0xff]
        %v1344 = vld [vmem:[#allocation5 + $0x8] sm:$0xff]
        %v1345 = vld [vmem:[#allocation5 + $0x10] sm:$0xff]
        %v1346 = vld [vmem:[#allocation5 + $0x18] sm:$0xff]
        %v1347 = vmul.f32 %v1304, %v1343
        %v1348 = vmul.f32 %v1306, %v1344
        %v1349 = vmul.f32 %v1308, %v1345
        %v1350 = vmul.f32 %v1310, %v1346
        %v1351 = vsel %vm1081, %v1336, 0.0
        %1352 = vadd.xlane.f32.xlu0 %v1351
        %v1353 = vpop.xlane.xlu0 %1352
        %v1354 = vsel %vm1081, %v1338, 0.0
        %1355 = vadd.xlane.f32.xlu0 %v1354
        %v1356 = vpop.xlane.xlu0 %1355
        %v1357 = vsel %vm1081, %v1340, 0.0
        %1358 = vadd.xlane.f32.xlu0 %v1357
        %v1359 = vpop.xlane.xlu0 %1358
        %v1360 = vsel %vm1081, %v1342, 0.0
        %1361 = vadd.xlane.f32.xlu0 %v1360
        %v1362 = vpop.xlane.xlu0 %1361
        %v1363 = vadd.f32 %v1347, %v1353
        %v1364 = vadd.f32 %v1348, %v1356
        %v1365 = vadd.f32 %v1349, %v1359
        %v1366 = vadd.f32 %v1350, %v1362
        %1367 = vst.msk [vmem:[#allocation5] sm:$0xff] %vm1072, %v1363
        %1368 = vst.msk [vmem:[#allocation5 + $0x8] sm:$0xff] %vm1072, %v1364
        %1369 = vst.msk [vmem:[#allocation5 + $0x10] sm:$0xff] %vm1072, %v1365
        %1370 = vst.msk [vmem:[#allocation5 + $0x18] sm:$0xff] %vm1072, %v1366
        %v1371 = vld [vmem:[#allocation6] sm:$0xff]
        %v1372 = vld [vmem:[#allocation6 + $0x8] sm:$0xff]
        %v1373 = vld [vmem:[#allocation6 + $0x10] sm:$0xff]
        %v1374 = vld [vmem:[#allocation6 + $0x18] sm:$0xff]
        %1376 = vset.pattern.permute.xlu0 0
        %1377 = vperm.xlu0 %1376, %v1304
        %v1378 = vpop.permute.xlu0 %1377
        %1381 = vset.pattern.permute.xlu0 0
        %1382 = vperm.xlu0 %1381, %v1306
        %v1383 = vpop.permute.xlu0 %1382
        %1386 = vset.pattern.permute.xlu0 0
        %1387 = vperm.xlu0 %1386, %v1308
        %v1388 = vpop.permute.xlu0 %1387
        %1391 = vset.pattern.permute.xlu0 0
        %1392 = vperm.xlu0 %1391, %v1310
        %v1393 = vpop.permute.xlu0 %1392
        %v1395 = vmul.f32 %v1378, %v1371
        %v1396 = vmul.f32 %v1383, %v1372
        %v1397 = vmul.f32 %v1388, %v1373
        %v1398 = vmul.f32 %v1393, %v1374
        %v1399 = vpack.c.bf16 %v1336, %v1336
        %v1400 = vpack.c.bf16 %v1338, %v1338
        %v1401 = vpack.c.bf16 %v1340, %v1340
        %v1402 = vpack.c.bf16 %v1342, %v1342
        %v1404 = vsel %vm1081, %v1399, 0
        %v1407 = vsel %vm1097, %v1090, 0
        %1409 = vmatprep.subr.bf16.mxu0 0
        %1410 = vmatpush1.bf16.msra.mxu0 %v1407
        %1411 = vmatprep.subr.bf16.mxu0 0
        %1412 = vmatpush1.bf16.msra.mxu0 0
        %1413 = vmatprep.subr.bf16.mxu0 0
        %1414 = vmatpush1.bf16.msra.mxu0 0
        %1415 = vmatprep.subr.bf16.mxu0 0
        %1416 = vmatpush1.bf16.msra.mxu0 0
        %1417 = vmatprep.subr.bf16.mxu0 0
        %1418 = vmatpush1.bf16.msra.mxu0 0
        %1419 = vmatprep.subr.bf16.mxu0 0
        %1420 = vmatpush1.bf16.msra.mxu0 0
        %1421 = vmatprep.subr.bf16.mxu0 0
        %1422 = vmatpush1.bf16.msra.mxu0 0
        %1423 = vmatprep.subr.bf16.mxu0 0
        %1424 = vmatpush1.bf16.msra.mxu0 0
        %1425 = vmatprep.subr.bf16.mxu0 0
        %1426 = vmatpush1.bf16.msra.mxu0 0
        %1427 = vmatprep.subr.bf16.mxu0 0
        %1428 = vmatpush1.bf16.msra.mxu0 0
        %1429 = vmatprep.subr.bf16.mxu0 0
        %1430 = vmatpush1.bf16.msra.mxu0 0
        %1431 = vmatprep.subr.bf16.mxu0 0
        %1432 = vmatpush1.bf16.msra.mxu0 0
        %1433 = vmatprep.subr.bf16.mxu0 0
        %1434 = vmatpush1.bf16.msra.mxu0 0
        %1435 = vmatprep.subr.bf16.mxu0 0
        %1436 = vmatpush1.bf16.msra.mxu0 0
        %1437 = vmatprep.subr.bf16.mxu0 0
        %1438 = vmatpush1.bf16.msra.mxu0 0
        %1439 = vmatprep.subr.bf16.mxu0 0
        %1440 = vmatpush1.bf16.msra.mxu0 0
        %1441 = vmatprep.mubr.bf16.mxu0 0
        %1442 = vmatmul.mubr.bf16.gmra.mrb[0].mxu0 %v1404
        %v1443 = vpop.f32.mrb[0].mxu0
        %v1444 = vadd.f32 0.0, %v1443
        %v1445 = vpop.f32.mrb[0].mxu0
        %v1446 = vpop.f32.mrb[0].mxu0
        %v1447 = vpop.f32.mrb[0].mxu0
        %1448 = vdwg.mxu0
        %v1450 = vsel %vm1081, %v1400, 0
        %v1453 = vsel %vm1097, %v1091, 0
        %1455 = vmatprep.subr.bf16.mxu0 0
        %1456 = vmatpush1.bf16.msra.mxu0 %v1453
        %1457 = vmatprep.subr.bf16.mxu0 0
        %1458 = vmatpush1.bf16.msra.mxu0 0
        %1459 = vmatprep.subr.bf16.mxu0 0
        %1460 = vmatpush1.bf16.msra.mxu0 0
        %1461 = vmatprep.subr.bf16.mxu0 0
        %1462 = vmatpush1.bf16.msra.mxu0 0
        %1463 = vmatprep.subr.bf16.mxu0 0
        %1464 = vmatpush1.bf16.msra.mxu0 0
        %1465 = vmatprep.subr.bf16.mxu0 0
        %1466 = vmatpush1.bf16.msra.mxu0 0
        %1467 = vmatprep.subr.bf16.mxu0 0
        %1468 = vmatpush1.bf16.msra.mxu0 0
        %1469 = vmatprep.subr.bf16.mxu0 0
        %1470 = vmatpush1.bf16.msra.mxu0 0
        %1471 = vmatprep.subr.bf16.mxu0 0
        %1472 = vmatpush1.bf16.msra.mxu0 0
        %1473 = vmatprep.subr.bf16.mxu0 0
        %1474 = vmatpush1.bf16.msra.mxu0 0
        %1475 = vmatprep.subr.bf16.mxu0 0
        %1476 = vmatpush1.bf16.msra.mxu0 0
        %1477 = vmatprep.subr.bf16.mxu0 0
        %1478 = vmatpush1.bf16.msra.mxu0 0
        %1479 = vmatprep.subr.bf16.mxu0 0
        %1480 = vmatpush1.bf16.msra.mxu0 0
        %1481 = vmatprep.subr.bf16.mxu0 0
        %1482 = vmatpush1.bf16.msra.mxu0 0
        %1483 = vmatprep.subr.bf16.mxu0 0
        %1484 = vmatpush1.bf16.msra.mxu0 0
        %1485 = vmatprep.subr.bf16.mxu0 0
        %1486 = vmatpush1.bf16.msra.mxu0 0
        %1487 = vmatprep.mubr.bf16.mxu0 0
        %1488 = vmatmul.mubr.bf16.gmra.mrb[0].mxu0 %v1450
        %v1489 = vpop.f32.mrb[0].mxu0
        %v1490 = vadd.f32 0.0, %v1489
        %v1491 = vpop.f32.mrb[0].mxu0
        %v1492 = vpop.f32.mrb[0].mxu0
        %v1493 = vpop.f32.mrb[0].mxu0
        %1494 = vdwg.mxu0
        %v1496 = vsel %vm1081, %v1401, 0
        %v1499 = vsel %vm1097, %v1092, 0
        %1501 = vmatprep.subr.bf16.mxu0 0
        %1502 = vmatpush1.bf16.msra.mxu0 %v1499
        %1503 = vmatprep.subr.bf16.mxu0 0
        %1504 = vmatpush1.bf16.msra.mxu0 0
        %1505 = vmatprep.subr.bf16.mxu0 0
        %1506 = vmatpush1.bf16.msra.mxu0 0
        %1507 = vmatprep.subr.bf16.mxu0 0
        %1508 = vmatpush1.bf16.msra.mxu0 0
        %1509 = vmatprep.subr.bf16.mxu0 0
        %1510 = vmatpush1.bf16.msra.mxu0 0
        %1511 = vmatprep.subr.bf16.mxu0 0
        %1512 = vmatpush1.bf16.msra.mxu0 0
        %1513 = vmatprep.subr.bf16.mxu0 0
        %1514 = vmatpush1.bf16.msra.mxu0 0
        %1515 = vmatprep.subr.bf16.mxu0 0
        %1516 = vmatpush1.bf16.msra.mxu0 0
        %1517 = vmatprep.subr.bf16.mxu0 0
        %1518 = vmatpush1.bf16.msra.mxu0 0
        %1519 = vmatprep.subr.bf16.mxu0 0
        %1520 = vmatpush1.bf16.msra.mxu0 0
        %1521 = vmatprep.subr.bf16.mxu0 0
        %1522 = vmatpush1.bf16.msra.mxu0 0
        %1523 = vmatprep.subr.bf16.mxu0 0
        %1524 = vmatpush1.bf16.msra.mxu0 0
        %1525 = vmatprep.subr.bf16.mxu0 0
        %1526 = vmatpush1.bf16.msra.mxu0 0
        %1527 = vmatprep.subr.bf16.mxu0 0
        %1528 = vmatpush1.bf16.msra.mxu0 0
        %1529 = vmatprep.subr.bf16.mxu0 0
        %1530 = vmatpush1.bf16.msra.mxu0 0
        %1531 = vmatprep.subr.bf16.mxu0 0
        %1532 = vmatpush1.bf16.msra.mxu0 0
        %1533 = vmatprep.mubr.bf16.mxu0 0
        %1534 = vmatmul.mubr.bf16.gmra.mrb[0].mxu0 %v1496
        %v1535 = vpop.f32.mrb[0].mxu0
        %v1536 = vadd.f32 0.0, %v1535
        %v1537 = vpop.f32.mrb[0].mxu0
        %v1538 = vpop.f32.mrb[0].mxu0
        %v1539 = vpop.f32.mrb[0].mxu0
        %1540 = vdwg.mxu0
        %v1542 = vsel %vm1081, %v1402, 0
        %v1545 = vsel %vm1097, %v1093, 0
        %1547 = vmatprep.subr.bf16.mxu0 0
        %1548 = vmatpush1.bf16.msra.mxu0 %v1545
        %1549 = vmatprep.subr.bf16.mxu0 0
        %1550 = vmatpush1.bf16.msra.mxu0 0
        %1551 = vmatprep.subr.bf16.mxu0 0
        %1552 = vmatpush1.bf16.msra.mxu0 0
        %1553 = vmatprep.subr.bf16.mxu0 0
        %1554 = vmatpush1.bf16.msra.mxu0 0
        %1555 = vmatprep.subr.bf16.mxu0 0
        %1556 = vmatpush1.bf16.msra.mxu0 0
        %1557 = vmatprep.subr.bf16.mxu0 0
        %1558 = vmatpush1.bf16.msra.mxu0 0
        %1559 = vmatprep.subr.bf16.mxu0 0
        %1560 = vmatpush1.bf16.msra.mxu0 0
        %1561 = vmatprep.subr.bf16.mxu0 0
        %1562 = vmatpush1.bf16.msra.mxu0 0
        %1563 = vmatprep.subr.bf16.mxu0 0
        %1564 = vmatpush1.bf16.msra.mxu0 0
        %1565 = vmatprep.subr.bf16.mxu0 0
        %1566 = vmatpush1.bf16.msra.mxu0 0
        %1567 = vmatprep.subr.bf16.mxu0 0
        %1568 = vmatpush1.bf16.msra.mxu0 0
        %1569 = vmatprep.subr.bf16.mxu0 0
        %1570 = vmatpush1.bf16.msra.mxu0 0
        %1571 = vmatprep.subr.bf16.mxu0 0
        %1572 = vmatpush1.bf16.msra.mxu0 0
        %1573 = vmatprep.subr.bf16.mxu0 0
        %1574 = vmatpush1.bf16.msra.mxu0 0
        %1575 = vmatprep.subr.bf16.mxu0 0
        %1576 = vmatpush1.bf16.msra.mxu0 0
        %1577 = vmatprep.subr.bf16.mxu0 0
        %1578 = vmatpush1.bf16.msra.mxu0 0
        %1579 = vmatprep.mubr.bf16.mxu0 0
        %1580 = vmatmul.mubr.bf16.gmra.mrb[0].mxu0 %v1542
        %v1581 = vpop.f32.mrb[0].mxu0
        %v1582 = vadd.f32 0.0, %v1581
        %v1583 = vpop.f32.mrb[0].mxu0
        %v1584 = vpop.f32.mrb[0].mxu0
        %v1585 = vpop.f32.mrb[0].mxu0
        %1586 = vdwg.mxu0
        %v1587 = vadd.f32 %v1395, %v1444
        %v1588 = vadd.f32 %v1396, %v1490
        %v1589 = vadd.f32 %v1397, %v1536
        %v1590 = vadd.f32 %v1398, %v1582
        %1591 = vst.msk [vmem:[#allocation6] sm:$0xff] %vm1081, %v1587
        %1592 = vst.msk [vmem:[#allocation6 + $0x8] sm:$0xff] %vm1081, %v1588
        %1593 = vst.msk [vmem:[#allocation6 + $0x10] sm:$0xff] %vm1081, %v1589
        %1594 = vst.msk [vmem:[#allocation6 + $0x18] sm:$0xff] %vm1081, %v1590
        %1595 = vst.msk [vmem:[#allocation4] sm:$0xff] %vm1072, %v1295
        %1596 = vst.msk [vmem:[#allocation4 + $0x8] sm:$0xff] %vm1072, %v1296
        %1597 = vst.msk [vmem:[#allocation4 + $0x10] sm:$0xff] %vm1072, %v1297
        %1598 = vst.msk [vmem:[#allocation4 + $0x18] sm:$0xff] %vm1072, %v1298
        %v1599 = vld [vmem:[#allocation6] sm:$0xff]
        %v1600 = vld [vmem:[#allocation6 + $0x8] sm:$0xff]
        %v1601 = vld [vmem:[#allocation6 + $0x10] sm:$0xff]
        %v1602 = vld [vmem:[#allocation6 + $0x18] sm:$0xff]
        %v1603 = vld [vmem:[#allocation5] sm:$0xff]
        %v1604 = vld [vmem:[#allocation5 + $0x8] sm:$0xff]
        %v1605 = vld [vmem:[#allocation5 + $0x10] sm:$0xff]
        %v1606 = vld [vmem:[#allocation5 + $0x18] sm:$0xff]
        %v1607 = vrcp.pop %v1603
        %v1608 = vrcp.pop %v1604
        %v1609 = vrcp.pop %v1605
        %v1610 = vrcp.pop %v1606
        %1612 = vset.pattern.permute.xlu0 0
        %1613 = vperm.xlu0 %1612, %v1607
        %v1614 = vpop.permute.xlu0 %1613
        %1617 = vset.pattern.permute.xlu0 0
        %1618 = vperm.xlu0 %1617, %v1608
        %v1619 = vpop.permute.xlu0 %1618
        %1622 = vset.pattern.permute.xlu0 0
        %1623 = vperm.xlu0 %1622, %v1609
        %v1624 = vpop.permute.xlu0 %1623
        %1627 = vset.pattern.permute.xlu0 0
        %1628 = vperm.xlu0 %1627, %v1610
        %v1629 = vpop.permute.xlu0 %1628
        %v1631 = vmul.f32 %v1599, %v1614
        %v1632 = vmul.f32 %v1600, %v1619
        %v1633 = vmul.f32 %v1601, %v1624
        %v1634 = vmul.f32 %v1602, %v1629
        %v1635 = vpack.c.bf16 %v1631, %v1631
        %v1636 = vpack.c.bf16 %v1632, %v1632
        %v1637 = vpack.c.bf16 %v1633, %v1633
        %v1638 = vpack.c.bf16 %v1634, %v1634
        %v1639 = vld [vmem:[%s9] sm:$0xf]
        %v1640 = vld [vmem:[%s9 + $0x4] sm:$0xf]
        %v1641 = vld [vmem:[%s9 + $0x8] sm:$0xf]
        %v1642 = vld [vmem:[%s9 + $0xc] sm:$0xf]
        %v1644 = vsel %vm1081, %v1635, 0
        %v1647 = vsel %vm1097, %v1639, 0
        %1649 = vmatprep.subr.bf16.mxu0 0
        %1650 = vmatpush1.bf16.msra.mxu0 %v1647
        %1651 = vmatprep.subr.bf16.mxu0 0
        %1652 = vmatpush1.bf16.msra.mxu0 0
        %1653 = vmatprep.subr.bf16.mxu0 0
        %1654 = vmatpush1.bf16.msra.mxu0 0
        %1655 = vmatprep.subr.bf16.mxu0 0
        %1656 = vmatpush1.bf16.msra.mxu0 0
        %1657 = vmatprep.subr.bf16.mxu0 0
        %1658 = vmatpush1.bf16.msra.mxu0 0
        %1659 = vmatprep.subr.bf16.mxu0 0
        %1660 = vmatpush1.bf16.msra.mxu0 0
        %1661 = vmatprep.subr.bf16.mxu0 0
        %1662 = vmatpush1.bf16.msra.mxu0 0
        %1663 = vmatprep.subr.bf16.mxu0 0
        %1664 = vmatpush1.bf16.msra.mxu0 0
        %1665 = vmatprep.subr.bf16.mxu0 0
        %1666 = vmatpush1.bf16.msra.mxu0 0
        %1667 = vmatprep.subr.bf16.mxu0 0
        %1668 = vmatpush1.bf16.msra.mxu0 0
        %1669 = vmatprep.subr.bf16.mxu0 0
        %1670 = vmatpush1.bf16.msra.mxu0 0
        %1671 = vmatprep.subr.bf16.mxu0 0
        %1672 = vmatpush1.bf16.msra.mxu0 0
        %1673 = vmatprep.subr.bf16.mxu0 0
        %1674 = vmatpush1.bf16.msra.mxu0 0
        %1675 = vmatprep.subr.bf16.mxu0 0
        %1676 = vmatpush1.bf16.msra.mxu0 0
        %1677 = vmatprep.subr.bf16.mxu0 0
        %1678 = vmatpush1.bf16.msra.mxu0 0
        %1679 = vmatprep.subr.bf16.mxu0 0
        %1680 = vmatpush1.bf16.msra.mxu0 0
        %1681 = vmatprep.mubr.bf16.mxu0 0
        %1682 = vmatmul.mubr.bf16.gmra.mrb[0].mxu0 %v1644
        %v1683 = vpop.f32.mrb[0].mxu0
        %v1684 = vadd.f32 0.0, %v1683
        %v1685 = vpop.f32.mrb[0].mxu0
        %v1686 = vpop.f32.mrb[0].mxu0
        %v1687 = vpop.f32.mrb[0].mxu0
        %1688 = vdwg.mxu0
        %v1690 = vsel %vm1081, %v1636, 0
        %v1693 = vsel %vm1097, %v1640, 0
        %1695 = vmatprep.subr.bf16.mxu0 0
        %1696 = vmatpush1.bf16.msra.mxu0 %v1693
        %1697 = vmatprep.subr.bf16.mxu0 0
        %1698 = vmatpush1.bf16.msra.mxu0 0
        %1699 = vmatprep.subr.bf16.mxu0 0
        %1700 = vmatpush1.bf16.msra.mxu0 0
        %1701 = vmatprep.subr.bf16.mxu0 0
        %1702 = vmatpush1.bf16.msra.mxu0 0
        %1703 = vmatprep.subr.bf16.mxu0 0
        %1704 = vmatpush1.bf16.msra.mxu0 0
        %1705 = vmatprep.subr.bf16.mxu0 0
        %1706 = vmatpush1.bf16.msra.mxu0 0
        %1707 = vmatprep.subr.bf16.mxu0 0
        %1708 = vmatpush1.bf16.msra.mxu0 0
        %1709 = vmatprep.subr.bf16.mxu0 0
        %1710 = vmatpush1.bf16.msra.mxu0 0
        %1711 = vmatprep.subr.bf16.mxu0 0
        %1712 = vmatpush1.bf16.msra.mxu0 0
        %1713 = vmatprep.subr.bf16.mxu0 0
        %1714 = vmatpush1.bf16.msra.mxu0 0
        %1715 = vmatprep.subr.bf16.mxu0 0
        %1716 = vmatpush1.bf16.msra.mxu0 0
        %1717 = vmatprep.subr.bf16.mxu0 0
        %1718 = vmatpush1.bf16.msra.mxu0 0
        %1719 = vmatprep.subr.bf16.mxu0 0
        %1720 = vmatpush1.bf16.msra.mxu0 0
        %1721 = vmatprep.subr.bf16.mxu0 0
        %1722 = vmatpush1.bf16.msra.mxu0 0
        %1723 = vmatprep.subr.bf16.mxu0 0
        %1724 = vmatpush1.bf16.msra.mxu0 0
        %1725 = vmatprep.subr.bf16.mxu0 0
        %1726 = vmatpush1.bf16.msra.mxu0 0
        %1727 = vmatprep.mubr.bf16.mxu0 0
        %1728 = vmatmul.mubr.bf16.gmra.mrb[0].mxu0 %v1690
        %v1729 = vpop.f32.mrb[0].mxu0
        %v1730 = vadd.f32 0.0, %v1729
        %v1731 = vpop.f32.mrb[0].mxu0
        %v1732 = vpop.f32.mrb[0].mxu0
        %v1733 = vpop.f32.mrb[0].mxu0
        %1734 = vdwg.mxu0
        %v1736 = vsel %vm1081, %v1637, 0
        %v1739 = vsel %vm1097, %v1641, 0
        %1741 = vmatprep.subr.bf16.mxu0 0
        %1742 = vmatpush1.bf16.msra.mxu0 %v1739
        %1743 = vmatprep.subr.bf16.mxu0 0
        %1744 = vmatpush1.bf16.msra.mxu0 0
        %1745 = vmatprep.subr.bf16.mxu0 0
        %1746 = vmatpush1.bf16.msra.mxu0 0
        %1747 = vmatprep.subr.bf16.mxu0 0
        %1748 = vmatpush1.bf16.msra.mxu0 0
        %1749 = vmatprep.subr.bf16.mxu0 0
        %1750 = vmatpush1.bf16.msra.mxu0 0
        %1751 = vmatprep.subr.bf16.mxu0 0
        %1752 = vmatpush1.bf16.msra.mxu0 0
        %1753 = vmatprep.subr.bf16.mxu0 0
        %1754 = vmatpush1.bf16.msra.mxu0 0
        %1755 = vmatprep.subr.bf16.mxu0 0
        %1756 = vmatpush1.bf16.msra.mxu0 0
        %1757 = vmatprep.subr.bf16.mxu0 0
        %1758 = vmatpush1.bf16.msra.mxu0 0
        %1759 = vmatprep.subr.bf16.mxu0 0
        %1760 = vmatpush1.bf16.msra.mxu0 0
        %1761 = vmatprep.subr.bf16.mxu0 0
        %1762 = vmatpush1.bf16.msra.mxu0 0
        %1763 = vmatprep.subr.bf16.mxu0 0
        %1764 = vmatpush1.bf16.msra.mxu0 0
        %1765 = vmatprep.subr.bf16.mxu0 0
        %1766 = vmatpush1.bf16.msra.mxu0 0
        %1767 = vmatprep.subr.bf16.mxu0 0
        %1768 = vmatpush1.bf16.msra.mxu0 0
        %1769 = vmatprep.subr.bf16.mxu0 0
        %1770 = vmatpush1.bf16.msra.mxu0 0
        %1771 = vmatprep.subr.bf16.mxu0 0
        %1772 = vmatpush1.bf16.msra.mxu0 0
        %1773 = vmatprep.mubr.bf16.mxu0 0
        %1774 = vmatmul.mubr.bf16.gmra.mrb[0].mxu0 %v1736
        %v1775 = vpop.f32.mrb[0].mxu0
        %v1776 = vadd.f32 0.0, %v1775
        %v1777 = vpop.f32.mrb[0].mxu0
        %v1778 = vpop.f32.mrb[0].mxu0
        %v1779 = vpop.f32.mrb[0].mxu0
        %1780 = vdwg.mxu0
        %v1782 = vsel %vm1081, %v1638, 0
        %v1785 = vsel %vm1097, %v1642, 0
        %1787 = vmatprep.subr.bf16.mxu0 0
        %1788 = vmatpush1.bf16.msra.mxu0 %v1785
        %1789 = vmatprep.subr.bf16.mxu0 0
        %1790 = vmatpush1.bf16.msra.mxu0 0
        %1791 = vmatprep.subr.bf16.mxu0 0
        %1792 = vmatpush1.bf16.msra.mxu0 0
        %1793 = vmatprep.subr.bf16.mxu0 0
        %1794 = vmatpush1.bf16.msra.mxu0 0
        %1795 = vmatprep.subr.bf16.mxu0 0
        %1796 = vmatpush1.bf16.msra.mxu0 0
        %1797 = vmatprep.subr.bf16.mxu0 0
        %1798 = vmatpush1.bf16.msra.mxu0 0
        %1799 = vmatprep.subr.bf16.mxu0 0
        %1800 = vmatpush1.bf16.msra.mxu0 0
        %1801 = vmatprep.subr.bf16.mxu0 0
        %1802 = vmatpush1.bf16.msra.mxu0 0
        %1803 = vmatprep.subr.bf16.mxu0 0
        %1804 = vmatpush1.bf16.msra.mxu0 0
        %1805 = vmatprep.subr.bf16.mxu0 0
        %1806 = vmatpush1.bf16.msra.mxu0 0
        %1807 = vmatprep.subr.bf16.mxu0 0
        %1808 = vmatpush1.bf16.msra.mxu0 0
        %1809 = vmatprep.subr.bf16.mxu0 0
        %1810 = vmatpush1.bf16.msra.mxu0 0
        %1811 = vmatprep.subr.bf16.mxu0 0
        %1812 = vmatpush1.bf16.msra.mxu0 0
        %1813 = vmatprep.subr.bf16.mxu0 0
        %1814 = vmatpush1.bf16.msra.mxu0 0
        %1815 = vmatprep.subr.bf16.mxu0 0
        %1816 = vmatpush1.bf16.msra.mxu0 0
        %1817 = vmatprep.subr.bf16.mxu0 0
        %1818 = vmatpush1.bf16.msra.mxu0 0
        %1819 = vmatprep.mubr.bf16.mxu0 0
        %1820 = vmatmul.mubr.bf16.gmra.mrb[0].mxu0 %v1782
        %v1821 = vpop.f32.mrb[0].mxu0
        %v1822 = vadd.f32 0.0, %v1821
        %v1823 = vpop.f32.mrb[0].mxu0
        %v1824 = vpop.f32.mrb[0].mxu0
        %v1825 = vpop.f32.mrb[0].mxu0
        %1826 = vdwg.mxu0
        %v1827 = vsel %vm859, %v1684, 0.0
        %v1828 = vsel %vm859, %v1730, 0.0
        %v1829 = vadd.f32 %v1827, %v1828
        %v1830 = vsel %vm859, %v1776, 0.0
        %v1831 = vadd.f32 %v1829, %v1830
        %v1832 = vsel %vm859, %v1822, 0.0
        %v1833 = vadd.f32 %v1831, %v1832
        %v1834 = vld [vmem:[%s10] sm:$0x1]
        %v1836 = vlaneseq
        %v1837 = vshrl.u32 %v1836, 7
        %v1838 = vsub.s32 0, %v1837
        %v1839 = vrot.slane %v1834, %v1838
        %v1841 = vadd.f32 %v1833, %v1839
        %1842 = vst.msk [vmem:[%s499] sm:$0xff] %vm859, %v1841
        %s1843 = sand.u32 %s301, 1
        %s1844 = scalar_lea.sflag [#allocation9], %s1843
        %s1845 = sand.u32 %s301, 1
        %s1846 = smul.addr %s1845, 8
        %s1847 = scalar_lea.vmem [#allocation18], %s1846
        // Predicated region
        $region93: #{tpu_custom_call.1} parent=63 // pred_check
          %p1848 = pneg %p311
        $region94: #{tpu_custom_call.1} parent=63 // pred_check_branch
          %1850 = sbr.rel (%p1848) target = $region96
        $region95: #{tpu_custom_call.1} parent=63 // pred_region
          %s1852 = ssub.s32 128, 128
          %1853 = vsyncadd %s1844, %s1852
          %s1854 = sadd.s32 %s36, %s35
          %s1855 = smul.addr %s1854, 128
          %s1856 = scalar_lea.hbm %s11, %s1855
          %s1858 = sshll.u32 %s1847, 4
          %s1859 = int_to_ptr.vmem [resolvable:$true] %s1858
          %1861 = dma.vmem_to_hbm [thread:$0]  %s1859, 128, %s1856, %s1844
        $region96: #{tpu_custom_call.1} parent=63 // pred_fallthru
          _
      $region64: #{tpu_custom_call.1} parent=5 // pred_fallthru
        _
      %p1862 = scmp.le.s32.totalorder 2, %s26
      // Predicated region
      $region97: #{tpu_custom_call.1} parent=5 // pred_check
        %p1863 = pneg %p1862
      $region98: #{tpu_custom_call.1} parent=5 // pred_check_branch
        %1865 = sbr.rel (%p1863) target = $region100
      $region99: #{tpu_custom_call.1} parent=5 // pred_region
        %s1866 = ssub.s32 %s26, 2
        // Predicated region
        $region101: #{tpu_custom_call.1} parent=99 // pred_check
          %p1867 = pneg %p317
        $region102: #{tpu_custom_call.1} parent=99 // pred_check_branch
          %1869 = sbr.rel (%p1867) target = $region104
        $region103: #{tpu_custom_call.1} parent=99 // pred_region
          %s1870 = sand.u32 %s302, 1
          %s1871 = scalar_lea.sflag [#allocation9], %s1870
          %s1872 = sand.u32 %s302, 1
          %s1873 = smul.addr %s1872, 8
          %s1874 = scalar_lea.vmem [#allocation18], %s1873
          %1875 = dma.done %s1871, 128
        $region104: #{tpu_custom_call.1} parent=99 // pred_fallthru
          _
      $region100: #{tpu_custom_call.1} parent=5 // pred_fallthru
        _
    $region6: #{tpu_custom_call.1} parent=1 // loop_footer
      %s30 = sadd.s32 1, %s26
    $region7: #{tpu_custom_call.1} parent=1 // loop_footer_branch
      %25 = sbr.rel target = $region3
    $region8: #{tpu_custom_call.1} parent=1 // loop_exit
      _
    %1876 = vsyncpa [#allocation8], 1
    %s1877 = scalar_lea.sflag [#allocation8], 1
    %1878 = vsyncpa %s1877, 1
    %1879 = vsyncpa [#allocation11], 1
    %s1880 = scalar_lea.sflag [#allocation11], 1
    %1881 = vsyncpa %s1880, 1
    %1882 = vsyncpa [#allocation14], 1
    %1883 = vsyncpa [#allocation17], 1
    %1884 = vsyncpa [#allocation9], 1
    %s1885 = scalar_lea.sflag [#allocation9], 1
    %1886 = vsyncpa %s1885, 1

// kernel: tpu_custom_call.1
$region0: #{tpu_custom_call.1}
  #allocation0 [shape = 'u32[]', space=smem, size = 0x4, offset = 0x4, fixed_abs, tag = 'smem constant byte address 0x4 - core index']
  #allocation1 [shape = 'u32[144,128]{1,0:T(1,128)}', space=vmem, size = 0x12000, scoped, tag = 'internal scratch']
  #allocation2 [shape = 'bf16[1,4,8,8]{3,2,1,0:T(8,128)(2,1)}', space=vmem, size = 0x2000, scoped, tag = 'scratch operand']
  #allocation3 [shape = 'bf16[1,4,8,8]{3,2,1,0:T(8,128)(2,1)}', space=vmem, size = 0x2000, scoped, tag = 'scratch operand']
  #allocation4 [shape = 'f32[4,8,1]{2,1,0:T(8,128)}', space=vmem, size = 0x4000, scoped, tag = 'scratch operand']
  #allocation5 [shape = 'f32[4,8,1]{2,1,0:T(8,128)}', space=vmem, size = 0x4000, scoped, tag = 'scratch operand']
  #allocation6 [shape = 'f32[4,8,8]{2,1,0:T(8,128)}', space=vmem, size = 0x4000, scoped, tag = 'scratch operand']
  %s0 = inlined_call_operand.hbm [shape: bf16[2,8,32], index: 0, kind: input, shape index: {}]
  %s1 = inlined_call_operand.hbm [shape: bf16[2,8,32], index: 1, kind: input, shape index: {}]
  %s2 = inlined_call_operand.hbm [shape: bf16[2,8,32], index: 2, kind: input, shape index: {}]
  %s3 = inlined_call_operand.hbm [shape: bf16[32,32], index: 3, kind: input, shape index: {}]
  %s4 = inlined_call_operand.vmem [shape: f32[1,32], index: 4, kind: input, shape index: {}]
  %s5 = inlined_call_operand.vmem [shape: bf16[32,32], index: 5, kind: input, shape index: {}]
  %s6 = inlined_call_operand.vmem [shape: f32[1,32], index: 6, kind: input, shape index: {}]
  %s7 = inlined_call_operand.hbm [shape: bf16[32,32], index: 7, kind: input, shape index: {}]
  %s8 = inlined_call_operand.hbm [shape: f32[1,32], index: 8, kind: input, shape index: {}]
  %s9 = inlined_call_operand.vmem [shape: bf16[4,8,32], index: 9, kind: input, shape index: {}]
  %s10 = inlined_call_operand.vmem [shape: f32[1,32], index: 10, kind: input, shape index: {}]
  %s11 = inlined_call_operand.hbm [shape: f32[2,8,32], index: 11, kind: output, shape index: {}]
  %s12 = sld [smem:[#allocation0]]
  $region105: #{tpu_custom_call.1} parent=0
    _
  %s14 = ssub.s32 1, %s12
  %s15 = scalar_select 0, %s14, %s12
  $region1: #{tpu_custom_call.1} parent=0
    #allocation7 [shape = 'u8[4096]{0}', space=vmem, size = 0x1000, scoped, tag = 'input window, operand 0']
    #allocation8 [shape = 's32[2]{0}', space=sflag, size = 0x8, scoped, tag = 'scoped memory for tpu_custom_call.1']
    #allocation9 [shape = 's32[2]{0}', space=sflag, size = 0x8, scoped, tag = 'scoped memory for tpu_custom_call.1']
    #allocation10 [shape = 'u8[4096]{0}', space=vmem, size = 0x1000, scoped, tag = 'input window, operand 1']
    #allocation11 [shape = 's32[2]{0}', space=sflag, size = 0x8, scoped, tag = 'scoped memory for tpu_custom_call.1']
    #allocation12 [shape = 'u8[4096]{0}', space=vmem, size = 0x1000, scoped, tag = 'input window, operand 2']
    #allocation13 [shape = 'u8[8192]{0}', space=vmem, size = 0x2000, scoped, tag = 'input window, operand 3, single buffered']
    #allocation14 [shape = 's32[1]{0}', space=sflag, size = 0x4, scoped, tag = 'scoped memory for tpu_custom_call.1']
    #allocation15 [shape = 'u8[8192]{0}', space=vmem, size = 0x2000, scoped, tag = 'input window, operand 7, single buffered']
    #allocation16 [shape = 'u8[512]{0}', space=vmem, size = 0x400, scoped, tag = 'input window, operand 8, single buffered']
    #allocation17 [shape = 's32[1]{0}', space=sflag, size = 0x4, scoped, tag = 'scoped memory for tpu_custom_call.1']
    #allocation18 [shape = 'u8[8192]{0}', space=vmem, size = 0x2000, scoped, tag = 'output window, operand 0']
    %16 = vsyncpa [#allocation8], 0
    %s17 = scalar_lea.sflag [#allocation8], 1
    %18 = vsyncpa %s17, 0
    %19 = vsyncpa [#allocation11], 0
    %s20 = scalar_lea.sflag [#allocation11], 1
    %21 = vsyncpa %s20, 0
    %22 = vsyncpa [#allocation14], 0
    %23 = vsyncpa [#allocation17], 0
    %24 = vsyncpa [#allocation9], 0
    %s25 = scalar_lea.sflag [#allocation9], 1
    %26 = vsyncpa %s25, 0
    loop: start=0, step=1, limit=4
    $region2: #{tpu_custom_call.1} parent=1 // loop_pre_header
      _
    $region3: #{tpu_custom_call.1} parent=1 // loop_header
      %s28 = sphi 0, %s32
      %p29 = scmp.ge.s32.totalorder %s28, 4
      %s35 = sphi 0, %s47
      %s36 = sphi 0, %s43
      %s37 = sphi 0, %s35
      %s38 = sphi 0, %s36
      %s39 = sphi 0, %s37
      %s40 = sphi 0, %s38
      %s50 = sphi 0, %s52
      %s53 = sphi 0, %s50
      %s54 = sphi 0, %s53
      %s70 = sphi 0, %s54
      %s78 = sphi 0, %s80
      %s81 = sphi 0, %s78
      %s82 = sphi 0, %s81
      %s98 = sphi 0, %s82
      %s104 = sphi 0, %s106
      %s107 = sphi 0, %s104
      %s108 = sphi 0, %s107
      %s124 = sphi 0, %s108
      %s128 = sphi 0, %s128
      %s130 = sphi 0, %s128
      %s131 = sphi 0, %s130
      %s145 = sphi 0, %s131
      %s149 = sphi 0, %s149
      %s151 = sphi 0, %s149
      %s152 = sphi 0, %s151
      %s166 = sphi 0, %s152
      %s170 = sphi 0, %s170
      %s172 = sphi 0, %s170
      %s173 = sphi 0, %s172
      %s187 = sphi 0, %s173
      %s191 = sphi 0, %s191
      %s193 = sphi 0, %s191
      %s194 = sphi 0, %s193
      %s208 = sphi 0, %s194
      %s212 = sphi 0, %s212
      %s214 = sphi 0, %s212
      %s215 = sphi 0, %s214
      %s229 = sphi 0, %s215
      %s233 = sphi 0, %s233
      %s235 = sphi 0, %s233
      %s236 = sphi 0, %s235
      %s250 = sphi 0, %s236
      %s254 = sphi 0, %s254
      %s256 = sphi 0, %s254
      %s257 = sphi 0, %s256
      %s271 = sphi 0, %s257
      %s275 = sphi 0, %s275
      %s277 = sphi 0, %s275
      %s278 = sphi 0, %s277
      %s292 = sphi 0, %s278
      %s300 = sphi 0, %s302
      %s303 = sphi 0, %s300
      %s304 = sphi 0, %s303
      %s320 = sphi 0, %s304
    $region4: #{tpu_custom_call.1} parent=1 // loop_header_branch
      %31 = sbr.rel (%p29) target = $region8
    $region5: #{tpu_custom_call.1} parent=1 // loop_body
      %s33 = ssub.s32 %s28, 1
      %s34 = ssub.s32 %s28, 2
      %s41 = sadd.s32 1, %s36
      %p42 = scmp.ge.s32.totalorder %s41, 1
      %s43 = scalar_select %p42, 0, %s41
      %s44 = sadd.s32 1, %s35
      %s45 = scalar_select %p42, %s44, %s35
      %p46 = scmp.ge.s32.totalorder %s45, 2
      %s47 = scalar_select %p46, 0, %s45
      %s48 = ssub.s32 %s35, %s47
      %p49 = scmp.eq.s32.totalorder %s48, 0
      %s51 = sadd.s32 %s50, 1
      %s52 = scalar_select %p49, %s50, %s51
      %p55 = pneg %p49
      %p56 = scmp.eq.s32.totalorder %s28, 1
      %p57 = por %p55, %p56
      %p58 = scmp.ne.s32.totalorder %s50, %s53
      %p59 = scmp.eq.s32.totalorder %s28, 0
      %p60 = por %p58, %p59
      %p61 = scmp.ne.s32.totalorder %s50, %s53
      %p62 = scmp.eq.s32.totalorder %s33, 1
      %p63 = por %p61, %p62
      %p64 = scmp.ne.s32.totalorder %s53, %s54
      %p65 = scmp.eq.s32.totalorder %s33, 0
      %p66 = por %p64, %p65
      %p67 = scmp.ne.s32.totalorder %s53, %s54
      %p68 = scmp.eq.s32.totalorder %s34, 1
      %p69 = por %p67, %p68
      %p71 = scmp.ne.s32.totalorder %s54, %s70
      %p72 = scmp.eq.s32.totalorder %s34, 0
      %p73 = por %p71, %p72
      %s74 = ssub.s32 %s35, %s47
      %s75 = ssub.s32 %s36, %s43
      %s76 = sor.u32 %s74, %s75
      %p77 = scmp.eq.s32.totalorder %s76, 0
      %s79 = sadd.s32 %s78, 1
      %s80 = scalar_select %p77, %s78, %s79
      %p83 = pneg %p77
      %p84 = scmp.eq.s32.totalorder %s28, 1
      %p85 = por %p83, %p84
      %p86 = scmp.ne.s32.totalorder %s78, %s81
      %p87 = scmp.eq.s32.totalorder %s28, 0
      %p88 = por %p86, %p87
      %p89 = scmp.ne.s32.totalorder %s78, %s81
      %p90 = scmp.eq.s32.totalorder %s33, 1
      %p91 = por %p89, %p90
      %p92 = scmp.ne.s32.totalorder %s81, %s82
      %p93 = scmp.eq.s32.totalorder %s33, 0
      %p94 = por %p92, %p93
      %p95 = scmp.ne.s32.totalorder %s81, %s82
      %p96 = scmp.eq.s32.totalorder %s34, 1
      %p97 = por %p95, %p96
      %p99 = scmp.ne.s32.totalorder %s82, %s98
      %p100 = scmp.eq.s32.totalorder %s34, 0
      %p101 = por %p99, %p100
      %s102 = ssub.s32 %s35, %s47
      %p103 = scmp.eq.s32.totalorder %s102, 0
      %s105 = sadd.s32 %s104, 1
      %s106 = scalar_select %p103, %s104, %s105
      %p109 = pneg %p103
      %p110 = scmp.eq.s32.totalorder %s28, 1
      %p111 = por %p109, %p110
      %p112 = scmp.ne.s32.totalorder %s104, %s107
      %p113 = scmp.eq.s32.totalorder %s28, 0
      %p114 = por %p112, %p113
      %p115 = scmp.ne.s32.totalorder %s104, %s107
      %p116 = scmp.eq.s32.totalorder %s33, 1
      %p117 = por %p115, %p116
      %p118 = scmp.ne.s32.totalorder %s107, %s108
      %p119 = scmp.eq.s32.totalorder %s33, 0
      %p120 = por %p118, %p119
      %p121 = scmp.ne.s32.totalorder %s107, %s108
      %p122 = scmp.eq.s32.totalorder %s34, 1
      %p123 = por %p121, %p122
      %p125 = scmp.ne.s32.totalorder %s108, %s124
      %p126 = scmp.eq.s32.totalorder %s34, 0
      %p127 = por %p125, %p126
      %s129 = sadd.s32 %s128, 1
      %p132 = scmp.eq.s32.totalorder %s28, 1
      %p133 = scmp.ne.s32.totalorder %s128, %s130
      %p134 = scmp.eq.s32.totalorder %s28, 0
      %p135 = por %p133, %p134
      %p136 = scmp.ne.s32.totalorder %s128, %s130
      %p137 = scmp.eq.s32.totalorder %s33, 1
      %p138 = por %p136, %p137
      %p139 = scmp.ne.s32.totalorder %s130, %s131
      %p140 = scmp.eq.s32.totalorder %s33, 0
      %p141 = por %p139, %p140
      %p142 = scmp.ne.s32.totalorder %s130, %s131
      %p143 = scmp.eq.s32.totalorder %s34, 1
      %p144 = por %p142, %p143
      %p146 = scmp.ne.s32.totalorder %s131, %s145
      %p147 = scmp.eq.s32.totalorder %s34, 0
      %p148 = por %p146, %p147
      %s150 = sadd.s32 %s149, 1
      %p153 = scmp.eq.s32.totalorder %s28, 1
      %p154 = scmp.ne.s32.totalorder %s149, %s151
      %p155 = scmp.eq.s32.totalorder %s28, 0
      %p156 = por %p154, %p155
      %p157 = scmp.ne.s32.totalorder %s149, %s151
      %p158 = scmp.eq.s32.totalorder %s33, 1
      %p159 = por %p157, %p158
      %p160 = scmp.ne.s32.totalorder %s151, %s152
      %p161 = scmp.eq.s32.totalorder %s33, 0
      %p162 = por %p160, %p161
      %p163 = scmp.ne.s32.totalorder %s151, %s152
      %p164 = scmp.eq.s32.totalorder %s34, 1
      %p165 = por %p163, %p164
      %p167 = scmp.ne.s32.totalorder %s152, %s166
      %p168 = scmp.eq.s32.totalorder %s34, 0
      %p169 = por %p167, %p168
      %s171 = sadd.s32 %s170, 1
      %p174 = scmp.eq.s32.totalorder %s28, 1
      %p175 = scmp.ne.s32.totalorder %s170, %s172
      %p176 = scmp.eq.s32.totalorder %s28, 0
      %p177 = por %p175, %p176
      %p178 = scmp.ne.s32.totalorder %s170, %s172
      %p179 = scmp.eq.s32.totalorder %s33, 1
      %p180 = por %p178, %p179
      %p181 = scmp.ne.s32.totalorder %s172, %s173
      %p182 = scmp.eq.s32.totalorder %s33, 0
      %p183 = por %p181, %p182
      %p184 = scmp.ne.s32.totalorder %s172, %s173
      %p185 = scmp.eq.s32.totalorder %s34, 1
      %p186 = por %p184, %p185
      %p188 = scmp.ne.s32.totalorder %s173, %s187
      %p189 = scmp.eq.s32.totalorder %s34, 0
      %p190 = por %p188, %p189
      %s192 = sadd.s32 %s191, 1
      %p195 = scmp.eq.s32.totalorder %s28, 1
      %p196 = scmp.ne.s32.totalorder %s191, %s193
      %p197 = scmp.eq.s32.totalorder %s28, 0
      %p198 = por %p196, %p197
      %p199 = scmp.ne.s32.totalorder %s191, %s193
      %p200 = scmp.eq.s32.totalorder %s33, 1
      %p201 = por %p199, %p200
      %p202 = scmp.ne.s32.totalorder %s193, %s194
      %p203 = scmp.eq.s32.totalorder %s33, 0
      %p204 = por %p202, %p203
      %p205 = scmp.ne.s32.totalorder %s193, %s194
      %p206 = scmp.eq.s32.totalorder %s34, 1
      %p207 = por %p205, %p206
      %p209 = scmp.ne.s32.totalorder %s194, %s208
      %p210 = scmp.eq.s32.totalorder %s34, 0
      %p211 = por %p209, %p210
      %s213 = sadd.s32 %s212, 1
      %p216 = scmp.eq.s32.totalorder %s28, 1
      %p217 = scmp.ne.s32.totalorder %s212, %s214
      %p218 = scmp.eq.s32.totalorder %s28, 0
      %p219 = por %p217, %p218
      %p220 = scmp.ne.s32.totalorder %s212, %s214
      %p221 = scmp.eq.s32.totalorder %s33, 1
      %p222 = por %p220, %p221
      %p223 = scmp.ne.s32.totalorder %s214, %s215
      %p224 = scmp.eq.s32.totalorder %s33, 0
      %p225 = por %p223, %p224
      %p226 = scmp.ne.s32.totalorder %s214, %s215
      %p227 = scmp.eq.s32.totalorder %s34, 1
      %p228 = por %p226, %p227
      %p230 = scmp.ne.s32.totalorder %s215, %s229
      %p231 = scmp.eq.s32.totalorder %s34, 0
      %p232 = por %p230, %p231
      %s234 = sadd.s32 %s233, 1
      %p237 = scmp.eq.s32.totalorder %s28, 1
      %p238 = scmp.ne.s32.totalorder %s233, %s235
      %p239 = scmp.eq.s32.totalorder %s28, 0
      %p240 = por %p238, %p239
      %p241 = scmp.ne.s32.totalorder %s233, %s235
      %p242 = scmp.eq.s32.totalorder %s33, 1
      %p243 = por %p241, %p242
      %p244 = scmp.ne.s32.totalorder %s235, %s236
      %p245 = scmp.eq.s32.totalorder %s33, 0
      %p246 = por %p244, %p245
      %p247 = scmp.ne.s32.totalorder %s235, %s236
      %p248 = scmp.eq.s32.totalorder %s34, 1
      %p249 = por %p247, %p248
      %p251 = scmp.ne.s32.totalorder %s236, %s250
      %p252 = scmp.eq.s32.totalorder %s34, 0
      %p253 = por %p251, %p252
      %s255 = sadd.s32 %s254, 1
      %p258 = scmp.eq.s32.totalorder %s28, 1
      %p259 = scmp.ne.s32.totalorder %s254, %s256
      %p260 = scmp.eq.s32.totalorder %s28, 0
      %p261 = por %p259, %p260
      %p262 = scmp.ne.s32.totalorder %s254, %s256
      %p263 = scmp.eq.s32.totalorder %s33, 1
      %p264 = por %p262, %p263
      %p265 = scmp.ne.s32.totalorder %s256, %s257
      %p266 = scmp.eq.s32.totalorder %s33, 0
      %p267 = por %p265, %p266
      %p268 = scmp.ne.s32.totalorder %s256, %s257
      %p269 = scmp.eq.s32.totalorder %s34, 1
      %p270 = por %p268, %p269
      %p272 = scmp.ne.s32.totalorder %s257, %s271
      %p273 = scmp.eq.s32.totalorder %s34, 0
      %p274 = por %p272, %p273
      %s276 = sadd.s32 %s275, 1
      %p279 = scmp.eq.s32.totalorder %s28, 1
      %p280 = scmp.ne.s32.totalorder %s275, %s277
      %p281 = scmp.eq.s32.totalorder %s28, 0
      %p282 = por %p280, %p281
      %p283 = scmp.ne.s32.totalorder %s275, %s277
      %p284 = scmp.eq.s32.totalorder %s33, 1
      %p285 = por %p283, %p284
      %p286 = scmp.ne.s32.totalorder %s277, %s278
      %p287 = scmp.eq.s32.totalorder %s33, 0
      %p288 = por %p286, %p287
      %p289 = scmp.ne.s32.totalorder %s277, %s278
      %p290 = scmp.eq.s32.totalorder %s34, 1
      %p291 = por %p289, %p290
      %p293 = scmp.ne.s32.totalorder %s278, %s292
      %p294 = scmp.eq.s32.totalorder %s34, 0
      %p295 = por %p293, %p294
      %s296 = ssub.s32 %s35, %s47
      %s297 = ssub.s32 %s36, %s43
      %s298 = sor.u32 %s296, %s297
      %p299 = scmp.eq.s32.totalorder %s298, 0
      %s301 = sadd.s32 %s300, 1
      %s302 = scalar_select %p299, %s300, %s301
      %p305 = pneg %p299
      %p306 = scmp.eq.s32.totalorder %s28, 1
      %p307 = por %p305, %p306
      %p308 = scmp.ne.s32.totalorder %s300, %s303
      %p309 = scmp.eq.s32.totalorder %s28, 0
      %p310 = por %p308, %p309
      %p311 = scmp.ne.s32.totalorder %s300, %s303
      %p312 = scmp.eq.s32.totalorder %s33, 1
      %p313 = por %p311, %p312
      %p314 = scmp.ne.s32.totalorder %s303, %s304
      %p315 = scmp.eq.s32.totalorder %s33, 0
      %p316 = por %p314, %p315
      %p317 = scmp.ne.s32.totalorder %s303, %s304
      %p318 = scmp.eq.s32.totalorder %s34, 1
      %p319 = por %p317, %p318
      %p321 = scmp.ne.s32.totalorder %s304, %s320
      %p322 = scmp.eq.s32.totalorder %s34, 0
      %p323 = por %p321, %p322
      %p324 = scmp.le.s32.totalorder 1, %s28
      %p325 = scmp.lt.s32.totalorder %s28, 3
      %p326 = pnand %p324, %p325
      %p327 = pneg %p326
      // Predicated region
      $region9: #{tpu_custom_call.1} parent=5 // pred_check
        _
      $region10: #{tpu_custom_call.1} parent=5 // pred_check_branch
        %329 = sbr.rel (%p326) target = $region12
      $region11: #{tpu_custom_call.1} parent=5 // pred_region
        %s330 = ssub.s32 %s28, 1
        // Predicated region
        $region13: #{tpu_custom_call.1} parent=11 // pred_check
          %p331 = pneg %p141
        $region14: #{tpu_custom_call.1} parent=11 // pred_check_branch
          %333 = sbr.rel (%p331) target = $region16
        $region15: #{tpu_custom_call.1} parent=11 // pred_region
          %s335 = ssub.s32 256, 256
          %336 = vsyncadd [#allocation14], %s335
          %s337 = sshll.u32 [#allocation13], 4
          %s338 = int_to_ptr.vmem [resolvable:$true] %s337
          %343 = dma.hbm_to_vmem [thread:$0]  %s3, 256, %s338, [#allocation14], 64, 64, 4
        $region16: #{tpu_custom_call.1} parent=11 // pred_fallthru
          _
        // Predicated region
        $region17: #{tpu_custom_call.1} parent=11 // pred_check
          %p344 = pneg %p162
        $region18: #{tpu_custom_call.1} parent=11 // pred_check_branch
          %346 = sbr.rel (%p344) target = $region20
        $region19: #{tpu_custom_call.1} parent=11 // pred_region
          _
        $region20: #{tpu_custom_call.1} parent=11 // pred_fallthru
          _
        // Predicated region
        $region21: #{tpu_custom_call.1} parent=11 // pred_check
          %p347 = pneg %p183
        $region22: #{tpu_custom_call.1} parent=11 // pred_check_branch
          %349 = sbr.rel (%p347) target = $region24
        $region23: #{tpu_custom_call.1} parent=11 // pred_region
          _
        $region24: #{tpu_custom_call.1} parent=11 // pred_fallthru
          _
        // Predicated region
        $region25: #{tpu_custom_call.1} parent=11 // pred_check
          %p350 = pneg %p204
        $region26: #{tpu_custom_call.1} parent=11 // pred_check_branch
          %352 = sbr.rel (%p350) target = $region28
        $region27: #{tpu_custom_call.1} parent=11 // pred_region
          _
        $region28: #{tpu_custom_call.1} parent=11 // pred_fallthru
          _
        // Predicated region
        $region29: #{tpu_custom_call.1} parent=11 // pred_check
          %p353 = pneg %p225
        $region30: #{tpu_custom_call.1} parent=11 // pred_check_branch
          %355 = sbr.rel (%p353) target = $region32
        $region31: #{tpu_custom_call.1} parent=11 // pred_region
          %s357 = ssub.s32 256, 256
          %358 = vsyncadd [#allocation14], %s357
          %s359 = sshll.u32 [#allocation15], 4
          %s360 = int_to_ptr.vmem [resolvable:$true] %s359
          %365 = dma.hbm_to_vmem [thread:$0]  %s7, 256, %s360, [#allocation14], 64, 64, 4
        $region32: #{tpu_custom_call.1} parent=11 // pred_fallthru
          _
        // Predicated region
        $region33: #{tpu_custom_call.1} parent=11 // pred_check
          %p366 = pneg %p246
        $region34: #{tpu_custom_call.1} parent=11 // pred_check_branch
          %368 = sbr.rel (%p366) target = $region36
        $region35: #{tpu_custom_call.1} parent=11 // pred_region
          %s370 = ssub.s32 16, 16
          %371 = vsyncadd [#allocation17], %s370
          %s373 = sshll.u32 [#allocation16], 4
          %s374 = int_to_ptr.vmem [resolvable:$true] %s373
          %376 = dma.hbm_to_vmem [thread:$0]  %s8, 16, %s374, [#allocation17]
        $region36: #{tpu_custom_call.1} parent=11 // pred_fallthru
          _
        // Predicated region
        $region37: #{tpu_custom_call.1} parent=11 // pred_check
          %p377 = pneg %p267
        $region38: #{tpu_custom_call.1} parent=11 // pred_check_branch
          %379 = sbr.rel (%p377) target = $region40
        $region39: #{tpu_custom_call.1} parent=11 // pred_region
          _
        $region40: #{tpu_custom_call.1} parent=11 // pred_fallthru
          _
        // Predicated region
        $region41: #{tpu_custom_call.1} parent=11 // pred_check
          %p380 = pneg %p288
        $region42: #{tpu_custom_call.1} parent=11 // pred_check_branch
          %382 = sbr.rel (%p380) target = $region44
        $region43: #{tpu_custom_call.1} parent=11 // pred_region
          _
        $region44: #{tpu_custom_call.1} parent=11 // pred_fallthru
          _
      $region12: #{tpu_custom_call.1} parent=5 // pred_fallthru
        _
      %p383 = scmp.lt.s32.totalorder %s28, 2
      // Predicated region
      $region45: #{tpu_custom_call.1} parent=5 // pred_check
        %p384 = pneg %p383
      $region46: #{tpu_custom_call.1} parent=5 // pred_check_branch
        %386 = sbr.rel (%p384) target = $region48
      $region47: #{tpu_custom_call.1} parent=5 // pred_region
        // Predicated region
        $region49: #{tpu_custom_call.1} parent=47 // pred_check
          %p387 = pneg %p60
        $region50: #{tpu_custom_call.1} parent=47 // pred_check_branch
          %389 = sbr.rel (%p387) target = $region52
        $region51: #{tpu_custom_call.1} parent=47 // pred_region
          %s390 = sand.u32 %s50, 1
          %s391 = scalar_lea.sflag [#allocation8], %s390
          %s392 = sand.u32 %s50, 1
          %s393 = smul.addr %s392, 4
          %s394 = scalar_lea.vmem [#allocation7], %s393
          %s396 = ssub.s32 64, 64
          %397 = vsyncadd %s391, %s396
          %s398 = smul.addr %s35, 64
          %s399 = scalar_lea.hbm %s0, %s398
          %s401 = sshll.u32 %s394, 4
          %s402 = int_to_ptr.vmem [resolvable:$true] %s401
          %404 = dma.hbm_to_vmem [thread:$0]  %s399, 64, %s402, %s391
        $region52: #{tpu_custom_call.1} parent=47 // pred_fallthru
          _
        // Predicated region
        $region53: #{tpu_custom_call.1} parent=47 // pred_check
          %p405 = pneg %p88
        $region54: #{tpu_custom_call.1} parent=47 // pred_check_branch
          %407 = sbr.rel (%p405) target = $region56
        $region55: #{tpu_custom_call.1} parent=47 // pred_region
          %s408 = sand.u32 %s28, 1
          %s409 = scalar_lea.sflag [#allocation11], %s408
          %s410 = sand.u32 %s78, 1
          %s411 = smul.addr %s410, 4
          %s412 = scalar_lea.vmem [#allocation10], %s411
          %s414 = ssub.s32 64, 64
          %415 = vsyncadd %s409, %s414
          %s416 = sadd.s32 %s36, %s35
          %s417 = smul.addr %s416, 64
          %s418 = scalar_lea.hbm %s1, %s417
          %s420 = sshll.u32 %s412, 4
          %s421 = int_to_ptr.vmem [resolvable:$true] %s420
          %423 = dma.hbm_to_vmem [thread:$0]  %s418, 64, %s421, %s409
        $region56: #{tpu_custom_call.1} parent=47 // pred_fallthru
          _
        // Predicated region
        $region57: #{tpu_custom_call.1} parent=47 // pred_check
          %p424 = pneg %p114
        $region58: #{tpu_custom_call.1} parent=47 // pred_check_branch
          %426 = sbr.rel (%p424) target = $region60
        $region59: #{tpu_custom_call.1} parent=47 // pred_region
          %s427 = sand.u32 %s28, 1
          %s428 = scalar_lea.sflag [#allocation11], %s427
          %s429 = sand.u32 %s104, 1
          %s430 = smul.addr %s429, 4
          %s431 = scalar_lea.vmem [#allocation12], %s430
          %s433 = ssub.s32 64, 64
          %434 = vsyncadd %s428, %s433
          %s435 = smul.addr %s35, 64
          %s436 = scalar_lea.hbm %s2, %s435
          %s438 = sshll.u32 %s431, 4
          %s439 = int_to_ptr.vmem [resolvable:$true] %s438
          %441 = dma.hbm_to_vmem [thread:$0]  %s436, 64, %s439, %s428
        $region60: #{tpu_custom_call.1} parent=47 // pred_fallthru
          _
      $region48: #{tpu_custom_call.1} parent=5 // pred_fallthru
        _
      %p442 = scmp.le.s32.totalorder 1, %s28
      %p443 = scmp.lt.s32.totalorder %s28, 3
      %p444 = pnand %p442, %p443
      %p445 = pneg %p444
      // Predicated region
      $region61: #{tpu_custom_call.1} parent=5 // pred_check
        _
      $region62: #{tpu_custom_call.1} parent=5 // pred_check_branch
        %447 = sbr.rel (%p444) target = $region64
      $region63: #{tpu_custom_call.1} parent=5 // pred_region
        %s448 = ssub.s32 %s28, 1
        %s449 = sand.u32 %s53, 1
        %s450 = scalar_lea.sflag [#allocation8], %s449
        %s451 = sand.u32 %s53, 1
        %s452 = smul.addr %s451, 4
        %s453 = scalar_lea.vmem [#allocation7], %s452
        // Predicated region
        $region65: #{tpu_custom_call.1} parent=63 // pred_check
          %p454 = pneg %p66
        $region66: #{tpu_custom_call.1} parent=63 // pred_check_branch
          %456 = sbr.rel (%p454) target = $region68
        $region67: #{tpu_custom_call.1} parent=63 // pred_region
          %457 = dma.done %s450, 64
        $region68: #{tpu_custom_call.1} parent=63 // pred_fallthru
          _
        %s458 = sand.u32 %s33, 1
        %s459 = scalar_lea.sflag [#allocation11], %s458
        %s460 = sand.u32 %s81, 1
        %s461 = smul.addr %s460, 4
        %s462 = scalar_lea.vmem [#allocation10], %s461
        // Predicated region
        $region69: #{tpu_custom_call.1} parent=63 // pred_check
          %p463 = pneg %p94
        $region70: #{tpu_custom_call.1} parent=63 // pred_check_branch
          %465 = sbr.rel (%p463) target = $region72
        $region71: #{tpu_custom_call.1} parent=63 // pred_region
          %466 = dma.done %s459, 64
        $region72: #{tpu_custom_call.1} parent=63 // pred_fallthru
          _
        %s467 = sand.u32 %s33, 1
        %s468 = scalar_lea.sflag [#allocation11], %s467
        %s469 = sand.u32 %s107, 1
        %s470 = smul.addr %s469, 4
        %s471 = scalar_lea.vmem [#allocation12], %s470
        // Predicated region
        $region73: #{tpu_custom_call.1} parent=63 // pred_check
          %p472 = pneg %p120
        $region74: #{tpu_custom_call.1} parent=63 // pred_check_branch
          %474 = sbr.rel (%p472) target = $region76
        $region75: #{tpu_custom_call.1} parent=63 // pred_region
          %475 = dma.done %s468, 64
        $region76: #{tpu_custom_call.1} parent=63 // pred_fallthru
          _
        // Predicated region
        $region77: #{tpu_custom_call.1} parent=63 // pred_check
          %p476 = pneg %p141
        $region78: #{tpu_custom_call.1} parent=63 // pred_check_branch
          %478 = sbr.rel (%p476) target = $region80
        $region79: #{tpu_custom_call.1} parent=63 // pred_region
          %479 = dma.done [#allocation14], 256
        $region80: #{tpu_custom_call.1} parent=63 // pred_fallthru
          _
        // Predicated region
        $region81: #{tpu_custom_call.1} parent=63 // pred_check
          %p480 = pneg %p225
        $region82: #{tpu_custom_call.1} parent=63 // pred_check_branch
          %482 = sbr.rel (%p480) target = $region84
        $region83: #{tpu_custom_call.1} parent=63 // pred_region
          %483 = dma.done [#allocation14], 256
        $region84: #{tpu_custom_call.1} parent=63 // pred_fallthru
          _
        // Predicated region
        $region85: #{tpu_custom_call.1} parent=63 // pred_check
          %p484 = pneg %p246
        $region86: #{tpu_custom_call.1} parent=63 // pred_check_branch
          %486 = sbr.rel (%p484) target = $region88
        $region87: #{tpu_custom_call.1} parent=63 // pred_region
          %487 = dma.done [#allocation17], 16
        $region88: #{tpu_custom_call.1} parent=63 // pred_fallthru
          _
        %s488 = sand.u32 %s53, 1
        %s489 = scalar_lea.sflag [#allocation8], %s488
        %s490 = sand.u32 %s53, 1
        %s491 = smul.addr %s490, 4
        %s492 = scalar_lea.vmem [#allocation7], %s491
        %p493 = pneg %p66
        %p494 = pneg %p63
        %s495 = sand.u32 %s33, 1
        %s496 = scalar_lea.sflag [#allocation11], %s495
        %s497 = sand.u32 %s81, 1
        %s498 = smul.addr %s497, 4
        %s499 = scalar_lea.vmem [#allocation10], %s498
        %p500 = pneg %p94
        %p501 = pneg %p91
        %s502 = sand.u32 %s33, 1
        %s503 = scalar_lea.sflag [#allocation11], %s502
        %s504 = sand.u32 %s107, 1
        %s505 = smul.addr %s504, 4
        %s506 = scalar_lea.vmem [#allocation12], %s505
        %p507 = pneg %p120
        %p508 = pneg %p117
        %p509 = pneg %p141
        %p510 = pneg %p138
        %p511 = pneg %p162
        %p512 = pneg %p159
        %p513 = pneg %p183
        %p514 = pneg %p180
        %p515 = pneg %p204
        %p516 = pneg %p201
        %p517 = pneg %p225
        %p518 = pneg %p222
        %p519 = pneg %p246
        %p520 = pneg %p243
        %p521 = pneg %p267
        %p522 = pneg %p264
        %p523 = pneg %p288
        %p524 = pneg %p285
        %p525 = pneg %p316
        %p526 = pneg %p313
        %s527 = sand.u32 %s303, 1
        %s528 = scalar_lea.sflag [#allocation9], %s527
        %s529 = sand.u32 %s303, 1
        %s530 = smul.addr %s529, 8
        %s531 = scalar_lea.vmem [#allocation18], %s530
        %p533 = scmp.eq.s32.totalorder %s38, 0
        // Predicated region
        $region89: #{tpu_custom_call.1} parent=63 // pred_check
          %p534 = pneg %p533
        $region90: #{tpu_custom_call.1} parent=63 // pred_check_branch
          %536 = sbr.rel (%p534) target = $region92
        $region91: #{tpu_custom_call.1} parent=63 // pred_region
          %v537 = vld [vmem:[%s453] sm:$0xf]
          %v538 = vld [vmem:[%s471] sm:$0xf]
          %v539 = vld [vmem:[#allocation13] sm:$0xf]
          %v540 = vld [vmem:[#allocation13 + $0x4] sm:$0xf]
          %v541 = vld [vmem:[#allocation13 + $0x8] sm:$0xf]
          %v542 = vld [vmem:[#allocation13 + $0xc] sm:$0xf]
          %v543 = vld [vmem:[%s4] sm:$0x1]
          %v545 = vlaneseq
          %v546 = vshrl.u32 %v545, 7
          %v547 = vsub.s32 0, %v546
          %v548 = vrot.slane %v543, %v547
          %v554 = vunpack.c.l.b16 %v539
          %v555 = vunpack.c.l.b16 %v540
          %v556 = vunpack.c.l.b16 %v541
          %v557 = vunpack.c.l.b16 %v542
          %v558 = vpack.c.b16 %v555, %v554
          %v559 = vpack.c.b16 %v557, %v556
          %vm562 = vcmask 261120
          %v564 = vsel %vm562, %v537, 0
          %566 = vmatprep.subr.bf16.mxu0 0
          %567 = vmatpush1.bf16.msra.mxu0 %v558
          %568 = vmatprep.subr.bf16.mxu0 0
          %569 = vmatpush1.bf16.msra.mxu0 %v559
          %570 = vmatprep.subr.bf16.mxu0 0
          %571 = vmatpush1.bf16.msra.mxu0 0
          %572 = vmatprep.subr.bf16.mxu0 0
          %573 = vmatpush1.bf16.msra.mxu0 0
          %574 = vmatprep.subr.bf16.mxu0 0
          %575 = vmatpush1.bf16.msra.mxu0 0
          %576 = vmatprep.subr.bf16.mxu0 0
          %577 = vmatpush1.bf16.msra.mxu0 0
          %578 = vmatprep.subr.bf16.mxu0 0
          %579 = vmatpush1.bf16.msra.mxu0 0
          %580 = vmatprep.subr.bf16.mxu0 0
          %581 = vmatpush1.bf16.msra.mxu0 0
          %582 = vmatprep.subr.bf16.mxu0 0
          %583 = vmatpush1.bf16.msra.mxu0 0
          %584 = vmatprep.subr.bf16.mxu0 0
          %585 = vmatpush1.bf16.msra.mxu0 0
          %586 = vmatprep.subr.bf16.mxu0 0
          %587 = vmatpush1.bf16.msra.mxu0 0
          %588 = vmatprep.subr.bf16.mxu0 0
          %589 = vmatpush1.bf16.msra.mxu0 0
          %590 = vmatprep.subr.bf16.mxu0 0
          %591 = vmatpush1.bf16.msra.mxu0 0
          %592 = vmatprep.subr.bf16.mxu0 0
          %593 = vmatpush1.bf16.msra.mxu0 0
          %594 = vmatprep.subr.bf16.mxu0 0
          %595 = vmatpush1.bf16.msra.mxu0 0
          %596 = vmatprep.subr.bf16.mxu0 0
          %597 = vmatpush1.bf16.msra.mxu0 0
          %598 = vmatprep.mubr.bf16.mxu0 0
          %599 = vmatmul.mubr.bf16.gmra.mrb[0].mxu0 %v564
          %v600 = vpop.f32.mrb[0].mxu0
          %v601 = vadd.f32 %v548, %v600
          %v602 = vpop.f32.mrb[0].mxu0
          %v603 = vpop.f32.mrb[0].mxu0
          %v604 = vpop.f32.mrb[0].mxu0
          %605 = vdwg.mxu0
          %v606 = vld [vmem:[#allocation15] sm:$0xf]
          %v607 = vld [vmem:[#allocation15 + $0x4] sm:$0xf]
          %v608 = vld [vmem:[#allocation15 + $0x8] sm:$0xf]
          %v609 = vld [vmem:[#allocation15 + $0xc] sm:$0xf]
          %v610 = vld [vmem:[#allocation16] sm:$0x1]
          %v612 = vlaneseq
          %v613 = vshrl.u32 %v612, 7
          %v614 = vsub.s32 0, %v613
          %v615 = vrot.slane %v610, %v614
          %v621 = vunpack.c.l.b16 %v606
          %v622 = vunpack.c.l.b16 %v607
          %v623 = vunpack.c.l.b16 %v608
          %v624 = vunpack.c.l.b16 %v609
          %v625 = vpack.c.b16 %v622, %v621
          %v626 = vpack.c.b16 %v624, %v623
          %v630 = vsel %vm562, %v538, 0
          %632 = vmatprep.subr.bf16.mxu0 0
          %633 = vmatpush1.bf16.msra.mxu0 %v625
          %634 = vmatprep.subr.bf16.mxu0 0
          %635 = vmatpush1.bf16.msra.mxu0 %v626
          %636 = vmatprep.subr.bf16.mxu0 0
          %637 = vmatpush1.bf16.msra.mxu0 0
          %638 = vmatprep.subr.bf16.mxu0 0
          %639 = vmatpush1.bf16.msra.mxu0 0
          %640 = vmatprep.subr.bf16.mxu0 0
          %641 = vmatpush1.bf16.msra.mxu0 0
          %642 = vmatprep.subr.bf16.mxu0 0
          %643 = vmatpush1.bf16.msra.mxu0 0
          %644 = vmatprep.subr.bf16.mxu0 0
          %645 = vmatpush1.bf16.msra.mxu0 0
          %646 = vmatprep.subr.bf16.mxu0 0
          %647 = vmatpush1.bf16.msra.mxu0 0
          %648 = vmatprep.subr.bf16.mxu0 0
          %649 = vmatpush1.bf16.msra.mxu0 0
          %650 = vmatprep.subr.bf16.mxu0 0
          %651 = vmatpush1.bf16.msra.mxu0 0
          %652 = vmatprep.subr.bf16.mxu0 0
          %653 = vmatpush1.bf16.msra.mxu0 0
          %654 = vmatprep.subr.bf16.mxu0 0
          %655 = vmatpush1.bf16.msra.mxu0 0
          %656 = vmatprep.subr.bf16.mxu0 0
          %657 = vmatpush1.bf16.msra.mxu0 0
          %658 = vmatprep.subr.bf16.mxu0 0
          %659 = vmatpush1.bf16.msra.mxu0 0
          %660 = vmatprep.subr.bf16.mxu0 0
          %661 = vmatpush1.bf16.msra.mxu0 0
          %662 = vmatprep.subr.bf16.mxu0 0
          %663 = vmatpush1.bf16.msra.mxu0 0
          %664 = vmatprep.mubr.bf16.mxu0 0
          %665 = vmatmul.mubr.bf16.gmra.mrb[0].mxu0 %v630
          %v666 = vpop.f32.mrb[0].mxu0
          %v667 = vadd.f32 %v615, %v666
          %v668 = vpop.f32.mrb[0].mxu0
          %v669 = vpop.f32.mrb[0].mxu0
          %v670 = vpop.f32.mrb[0].mxu0
          %671 = vdwg.mxu0
          %672 = vxpose.xlu0.b32.start [1/16] %v601, 128
          %673 = vxpose.xlu0.b32.cont [2/16] 0.0, 128
          %674 = vxpose.xlu0.b32.cont [3/16] 0.0, 128
          %675 = vxpose.xlu0.b32.cont [4/16] 0.0, 128
          %676 = vxpose.xlu0.b32.cont [5/16] 0.0, 128
          %677 = vxpose.xlu0.b32.cont [6/16] 0.0, 128
          %678 = vxpose.xlu0.b32.cont [7/16] 0.0, 128
          %679 = vxpose.xlu0.b32.cont [8/16] 0.0, 128
          %680 = vxpose.xlu0.b32.cont [9/16] 0.0, 128
          %681 = vxpose.xlu0.b32.cont [10/16] 0.0, 128
          %682 = vxpose.xlu0.b32.cont [11/16] 0.0, 128
          %683 = vxpose.xlu0.b32.cont [12/16] 0.0, 128
          %684 = vxpose.xlu0.b32.cont [13/16] 0.0, 128
          %685 = vxpose.xlu0.b32.cont [14/16] 0.0, 128
          %686 = vxpose.xlu0.b32.cont [15/16] 0.0, 128
          %687 = vxpose.xlu0.b32.end [16/16] 0.0, 128
          %v688 = vpop.trf.xlu0
          %v689 = vpop.trf.xlu0
          %v690 = vpop.trf.xlu0
          %v691 = vpop.trf.xlu0
          %v692 = vpop.trf.xlu0
          %v693 = vpop.trf.xlu0
          %v694 = vpop.trf.xlu0
          %v695 = vpop.trf.xlu0
          %v696 = vpop.trf.xlu0
          %v697 = vpop.trf.xlu0
          %v698 = vpop.trf.xlu0
          %v699 = vpop.trf.xlu0
          %v700 = vpop.trf.xlu0
          %v701 = vpop.trf.xlu0
          %v702 = vpop.trf.xlu0
          %v703 = vpop.trf.xlu0
          %v704 = vpack.c.bf16 %v688, %v688
          %v705 = vpack.c.bf16 %v689, %v689
          %v706 = vpack.c.bf16 %v690, %v690
          %v707 = vpack.c.bf16 %v691, %v691
          %vm708 = vcmask 60416
          %709 = vst.msk [vmem:[#allocation2] sm:$0xf] %vm708, %v704
          %710 = vst.msk [vmem:[#allocation2 + $0x4] sm:$0xf] %vm708, %v705
          %711 = vst.msk [vmem:[#allocation2 + $0x8] sm:$0xf] %vm708, %v706
          %712 = vst.msk [vmem:[#allocation2 + $0xc] sm:$0xf] %vm708, %v707
          %714 = vrot.lane.b32.xlu0 %v667, 120
          %v715 = vpop.permute.xlu0 %714
          %717 = vrot.lane.b32.xlu0 %v667, 112
          %v718 = vpop.permute.xlu0 %717
          %720 = vrot.lane.b32.xlu0 %v667, 104
          %v721 = vpop.permute.xlu0 %720
          %v723 = vcombine.low %v667, %v718
          %v724 = vcombine.high %v667, %v718
          %v726 = vunpack.c.l.s4 1983009808
          %v727 = vunpack.c.0.s8 %v726
          %v728 = vlaneseq
          %v729 = vshrl.u32 %v728, 7
          %v730 = vsub.s32 %v727, %v729
          %v731 = vrot.slane %v723, %v730
          %v733 = vunpack.c.l.s4 1983009808
          %v734 = vunpack.c.0.s8 %v733
          %v735 = vlaneseq
          %v736 = vshrl.u32 %v735, 7
          %v737 = vsub.s32 %v734, %v736
          %v738 = vrot.slane %v724, %v737
          %v739 = vcombine.low %v715, %v721
          %v740 = vcombine.high %v715, %v721
          %v742 = vunpack.c.l.s4 1983009808
          %v743 = vunpack.c.0.s8 %v742
          %v744 = vlaneseq
          %v745 = vshrl.u32 %v744, 7
          %v746 = vsub.s32 %v743, %v745
          %v747 = vrot.slane %v739, %v746
          %v749 = vunpack.c.l.s4 1983009808
          %v750 = vunpack.c.0.s8 %v749
          %v751 = vlaneseq
          %v752 = vshrl.u32 %v751, 7
          %v753 = vsub.s32 %v750, %v752
          %v754 = vrot.slane %v740, %v753
          %v755 = vcombine.low %v731, %v747
          %v756 = vcombine.high %v731, %v747
          %v758 = vunpack.c.l.s4 1934713408
          %v759 = vunpack.c.0.s8 %v758
          %v760 = vlaneseq
          %v761 = vshrl.u32 %v760, 7
          %v762 = vsub.s32 %v759, %v761
          %v763 = vrot.slane %v755, %v762
          %v765 = vunpack.c.l.s4 1934713408
          %v766 = vunpack.c.0.s8 %v765
          %v767 = vlaneseq
          %v768 = vshrl.u32 %v767, 7
          %v769 = vsub.s32 %v766, %v768
          %v770 = vrot.slane %v756, %v769
          %v771 = vcombine.low %v738, %v754
          %v772 = vcombine.high %v738, %v754
          %v774 = vunpack.c.l.s4 1934713408
          %v775 = vunpack.c.0.s8 %v774
          %v776 = vlaneseq
          %v777 = vshrl.u32 %v776, 7
          %v778 = vsub.s32 %v775, %v777
          %v779 = vrot.slane %v771, %v778
          %v781 = vunpack.c.l.s4 1934713408
          %v782 = vunpack.c.0.s8 %v781
          %v783 = vlaneseq
          %v784 = vshrl.u32 %v783, 7
          %v785 = vsub.s32 %v782, %v784
          %v786 = vrot.slane %v772, %v785
          %v787 = vcombine.high %v763, 0.0
          %v788 = vcombine.high %v770, 0.0
          %v789 = vcombine.high %v779, 0.0
          %v790 = vcombine.high %v786, 0.0
          %v791 = vcombine.low %v763, %v770
          %v793 = vunpack.c.l.s4 1983009808
          %v794 = vunpack.c.0.s8 %v793
          %v795 = vlaneseq
          %v796 = vshrl.u32 %v795, 7
          %v797 = vsub.s32 %v794, %v796
          %v798 = vrot.slane %v791, %v797
          %v799 = vcombine.low %v787, %v788
          %v801 = vunpack.c.l.s4 1983009808
          %v802 = vunpack.c.0.s8 %v801
          %v803 = vlaneseq
          %v804 = vshrl.u32 %v803, 7
          %v805 = vsub.s32 %v802, %v804
          %v806 = vrot.slane %v799, %v805
          %v807 = vcombine.low %v779, %v786
          %v809 = vunpack.c.l.s4 1983009808
          %v810 = vunpack.c.0.s8 %v809
          %v811 = vlaneseq
          %v812 = vshrl.u32 %v811, 7
          %v813 = vsub.s32 %v810, %v812
          %v814 = vrot.slane %v807, %v813
          %v815 = vcombine.low %v789, %v790
          %v817 = vunpack.c.l.s4 1983009808
          %v818 = vunpack.c.0.s8 %v817
          %v819 = vlaneseq
          %v820 = vshrl.u32 %v819, 7
          %v821 = vsub.s32 %v818, %v820
          %v822 = vrot.slane %v815, %v821
          %v823 = vcombine.low %v798, %v806
          %v824 = vcombine.high %v798, %v806
          %v826 = vunpack.c.l.s4 1934713408
          %v827 = vunpack.c.0.s8 %v826
          %v828 = vlaneseq
          %v829 = vshrl.u32 %v828, 7
          %v830 = vsub.s32 %v827, %v829
          %v831 = vrot.slane %v823, %v830
          %v833 = vunpack.c.l.s4 1934713408
          %v834 = vunpack.c.0.s8 %v833
          %v835 = vlaneseq
          %v836 = vshrl.u32 %v835, 7
          %v837 = vsub.s32 %v834, %v836
          %v838 = vrot.slane %v824, %v837
          %v839 = vcombine.low %v814, %v822
          %v840 = vcombine.high %v814, %v822
          %v842 = vunpack.c.l.s4 1934713408
          %v843 = vunpack.c.0.s8 %v842
          %v844 = vlaneseq
          %v845 = vshrl.u32 %v844, 7
          %v846 = vsub.s32 %v843, %v845
          %v847 = vrot.slane %v839, %v846
          %v849 = vunpack.c.l.s4 1934713408
          %v850 = vunpack.c.0.s8 %v849
          %v851 = vlaneseq
          %v852 = vshrl.u32 %v851, 7
          %v853 = vsub.s32 %v850, %v852
          %v854 = vrot.slane %v840, %v853
          %v855 = vcombine.low %v831, %v847
          %v856 = vcombine.high %v831, %v847
          %v857 = vcombine.low %v838, %v854
          %v858 = vcombine.high %v838, %v854
          %v859 = vpack.c.bf16 %v855, %v855
          %v860 = vpack.c.bf16 %v856, %v856
          %v861 = vpack.c.bf16 %v857, %v857
          %v862 = vpack.c.bf16 %v858, %v858
          %863 = vst.msk [vmem:[#allocation3] sm:$0xf] %vm708, %v859
          %864 = vst.msk [vmem:[#allocation3 + $0x4] sm:$0xf] %vm708, %v860
          %865 = vst.msk [vmem:[#allocation3 + $0x8] sm:$0xf] %vm708, %v861
          %866 = vst.msk [vmem:[#allocation3 + $0xc] sm:$0xf] %vm708, %v862
        $region92: #{tpu_custom_call.1} parent=63 // pred_fallthru
          _
        %v867 = vld [vmem:[%s462] sm:$0xf]
        %v868 = vld [vmem:[%s5] sm:$0xf]
        %v869 = vld [vmem:[%s5 + $0x4] sm:$0xf]
        %v870 = vld [vmem:[%s5 + $0x8] sm:$0xf]
        %v871 = vld [vmem:[%s5 + $0xc] sm:$0xf]
        %v872 = vld [vmem:[%s6] sm:$0x1]
        %v874 = vlaneseq
        %v875 = vshrl.u32 %v874, 7
        %v876 = vsub.s32 0, %v875
        %v877 = vrot.slane %v872, %v876
        %v883 = vunpack.c.l.b16 %v868
        %v884 = vunpack.c.l.b16 %v869
        %v885 = vunpack.c.l.b16 %v870
        %v886 = vunpack.c.l.b16 %v871
        %v887 = vpack.c.b16 %v884, %v883
        %v888 = vpack.c.b16 %v886, %v885
        %vm891 = vcmask 261120
        %v893 = vsel %vm891, %v867, 0
        %895 = vmatprep.subr.bf16.mxu0 0
        %896 = vmatpush1.bf16.msra.mxu0 %v887
        %897 = vmatprep.subr.bf16.mxu0 0
        %898 = vmatpush1.bf16.msra.mxu0 %v888
        %899 = vmatprep.subr.bf16.mxu0 0
        %900 = vmatpush1.bf16.msra.mxu0 0
        %901 = vmatprep.subr.bf16.mxu0 0
        %902 = vmatpush1.bf16.msra.mxu0 0
        %903 = vmatprep.subr.bf16.mxu0 0
        %904 = vmatpush1.bf16.msra.mxu0 0
        %905 = vmatprep.subr.bf16.mxu0 0
        %906 = vmatpush1.bf16.msra.mxu0 0
        %907 = vmatprep.subr.bf16.mxu0 0
        %908 = vmatpush1.bf16.msra.mxu0 0
        %909 = vmatprep.subr.bf16.mxu0 0
        %910 = vmatpush1.bf16.msra.mxu0 0
        %911 = vmatprep.subr.bf16.mxu0 0
        %912 = vmatpush1.bf16.msra.mxu0 0
        %913 = vmatprep.subr.bf16.mxu0 0
        %914 = vmatpush1.bf16.msra.mxu0 0
        %915 = vmatprep.subr.bf16.mxu0 0
        %916 = vmatpush1.bf16.msra.mxu0 0
        %917 = vmatprep.subr.bf16.mxu0 0
        %918 = vmatpush1.bf16.msra.mxu0 0
        %919 = vmatprep.subr.bf16.mxu0 0
        %920 = vmatpush1.bf16.msra.mxu0 0
        %921 = vmatprep.subr.bf16.mxu0 0
        %922 = vmatpush1.bf16.msra.mxu0 0
        %923 = vmatprep.subr.bf16.mxu0 0
        %924 = vmatpush1.bf16.msra.mxu0 0
        %925 = vmatprep.subr.bf16.mxu0 0
        %926 = vmatpush1.bf16.msra.mxu0 0
        %927 = vmatprep.mubr.bf16.mxu0 0
        %928 = vmatmul.mubr.bf16.gmra.mrb[0].mxu0 %v893
        %v929 = vpop.f32.mrb[0].mxu0
        %v930 = vadd.f32 %v877, %v929
        %v931 = vpop.f32.mrb[0].mxu0
        %v932 = vpop.f32.mrb[0].mxu0
        %v933 = vpop.f32.mrb[0].mxu0
        %934 = vdwg.mxu0
        %v935 = vpack.c.bf16 %v930, %v930
        %937 = vrot.lane.b32.xlu0 %v935, 120
        %v938 = vpop.permute.xlu0 %937
        %939 = vrot.lane.b32.xlu0 %v935, 112
        %v940 = vpop.permute.xlu0 %939
        %941 = vrot.lane.b32.xlu0 %v935, 104
        %v942 = vpop.permute.xlu0 %941
        %v944 = vunpack.c.l.s4 1983009808
        %v945 = vunpack.c.0.s8 %v944
        %v946 = vlaneseq
        %v947 = vshrl.u32 %v946, 7
        %v948 = vsub.s32 %v945, %v947
        %v949 = vrot.slane %v935, %v948
        %v952 = vunpack.c.l.s4 1983009808
        %v953 = vunpack.c.0.s8 %v952
        %v954 = vlaneseq
        %v955 = vshrl.u32 %v954, 7
        %v956 = vsub.s32 %v953, %v955
        %v957 = vrot.slane %v940, %v956
        %v958 = vcombine.low %v949, %v957
        %v959 = vcombine.high %v949, %v957
        %v961 = vunpack.c.l.s4 1934713408
        %v962 = vunpack.c.0.s8 %v961
        %v963 = vlaneseq
        %v964 = vshrl.u32 %v963, 7
        %v965 = vsub.s32 %v962, %v964
        %v966 = vrot.slane %v958, %v965
        %v968 = vunpack.c.l.s4 1934713408
        %v969 = vunpack.c.0.s8 %v968
        %v970 = vlaneseq
        %v971 = vshrl.u32 %v970, 7
        %v972 = vsub.s32 %v969, %v971
        %v973 = vrot.slane %v959, %v972
        %v974 = vcombine.high %v966, 0
        %v975 = vcombine.high %v973, 0
        %v978 = vunpack.c.l.s4 1983009808
        %v979 = vunpack.c.0.s8 %v978
        %v980 = vlaneseq
        %v981 = vshrl.u32 %v980, 7
        %v982 = vsub.s32 %v979, %v981
        %v983 = vrot.slane %v938, %v982
        %v986 = vunpack.c.l.s4 1983009808
        %v987 = vunpack.c.0.s8 %v986
        %v988 = vlaneseq
        %v989 = vshrl.u32 %v988, 7
        %v990 = vsub.s32 %v987, %v989
        %v991 = vrot.slane %v942, %v990
        %v992 = vcombine.low %v983, %v991
        %v993 = vcombine.high %v983, %v991
        %v995 = vunpack.c.l.s4 1934713408
        %v996 = vunpack.c.0.s8 %v995
        %v997 = vlaneseq
        %v998 = vshrl.u32 %v997, 7
        %v999 = vsub.s32 %v996, %v998
        %v1000 = vrot.slane %v992, %v999
        %v1002 = vunpack.c.l.s4 1934713408
        %v1003 = vunpack.c.0.s8 %v1002
        %v1004 = vlaneseq
        %v1005 = vshrl.u32 %v1004, 7
        %v1006 = vsub.s32 %v1003, %v1005
        %v1007 = vrot.slane %v993, %v1006
        %v1008 = vcombine.high %v1000, 0
        %v1009 = vcombine.high %v1007, 0
        %v1012 = vpack.i.b16 %v1000, %v966
        %v1014 = vshrl.u32 %v966, 16
        %v1015 = vshrl.u32 %v1000, 16
        %v1016 = vpack.i.b16 %v1015, %v1014
        %v1020 = vpack.i.b16 %v1008, %v974
        %v1022 = vshrl.u32 %v974, 16
        %v1023 = vshrl.u32 %v1008, 16
        %v1024 = vpack.i.b16 %v1023, %v1022
        %v1028 = vpack.i.b16 %v1007, %v973
        %v1030 = vshrl.u32 %v973, 16
        %v1031 = vshrl.u32 %v1007, 16
        %v1032 = vpack.i.b16 %v1031, %v1030
        %v1036 = vpack.i.b16 %v1009, %v975
        %v1038 = vshrl.u32 %v975, 16
        %v1039 = vshrl.u32 %v1009, 16
        %v1040 = vpack.i.b16 %v1039, %v1038
        %v1042 = vcombine.low %v1012, %v1028
        %v1044 = vunpack.c.l.s4 1983009808
        %v1045 = vunpack.c.0.s8 %v1044
        %v1046 = vlaneseq
        %v1047 = vshrl.u32 %v1046, 7
        %v1048 = vsub.s32 %v1045, %v1047
        %v1049 = vrot.slane %v1042, %v1048
        %v1050 = vcombine.low %v1020, %v1036
        %v1052 = vunpack.c.l.s4 1983009808
        %v1053 = vunpack.c.0.s8 %v1052
        %v1054 = vlaneseq
        %v1055 = vshrl.u32 %v1054, 7
        %v1056 = vsub.s32 %v1053, %v1055
        %v1057 = vrot.slane %v1050, %v1056
        %v1058 = vcombine.low %v1049, %v1057
        %v1060 = vunpack.c.l.s4 1934713408
        %v1061 = vunpack.c.0.s8 %v1060
        %v1062 = vlaneseq
        %v1063 = vshrl.u32 %v1062, 7
        %v1064 = vsub.s32 %v1061, %v1063
        %v1065 = vrot.slane %v1058, %v1064
        %v1066 = vcombine.high %v1065, 0
        %v1067 = vcombine.low %v1016, %v1032
        %v1069 = vunpack.c.l.s4 1983009808
        %v1070 = vunpack.c.0.s8 %v1069
        %v1071 = vlaneseq
        %v1072 = vshrl.u32 %v1071, 7
        %v1073 = vsub.s32 %v1070, %v1072
        %v1074 = vrot.slane %v1067, %v1073
        %v1075 = vcombine.low %v1024, %v1040
        %v1077 = vunpack.c.l.s4 1983009808
        %v1078 = vunpack.c.0.s8 %v1077
        %v1079 = vlaneseq
        %v1080 = vshrl.u32 %v1079, 7
        %v1081 = vsub.s32 %v1078, %v1080
        %v1082 = vrot.slane %v1075, %v1081
        %v1083 = vcombine.low %v1074, %v1082
        %v1085 = vunpack.c.l.s4 1934713408
        %v1086 = vunpack.c.0.s8 %v1085
        %v1087 = vlaneseq
        %v1088 = vshrl.u32 %v1087, 7
        %v1089 = vsub.s32 %v1086, %v1088
        %v1090 = vrot.slane %v1083, %v1089
        %v1091 = vcombine.high %v1090, 0
        %v1094 = vpack.i.b16 %v1090, %v1065
        %v1095 = vshrl.u32 %v1065, 16
        %v1096 = vshrl.u32 %v1090, 16
        %v1097 = vpack.i.b16 %v1096, %v1095
        %v1100 = vpack.i.b16 %v1091, %v1066
        %v1101 = vshrl.u32 %v1066, 16
        %v1102 = vshrl.u32 %v1091, 16
        %v1103 = vpack.i.b16 %v1102, %v1101
        %vm1104 = vcmask 7168
        %1105 = vst.msk [vmem:[#allocation4] sm:$0xff] %vm1104, -inf
        %1106 = vst.msk [vmem:[#allocation4 + $0x8] sm:$0xff] %vm1104, -inf
        %1107 = vst.msk [vmem:[#allocation4 + $0x10] sm:$0xff] %vm1104, -inf
        %1108 = vst.msk [vmem:[#allocation4 + $0x18] sm:$0xff] %vm1104, -inf
        %1109 = vst.msk [vmem:[#allocation5] sm:$0xff] %vm1104, 0.0
        %1110 = vst.msk [vmem:[#allocation5 + $0x8] sm:$0xff] %vm1104, 0.0
        %1111 = vst.msk [vmem:[#allocation5 + $0x10] sm:$0xff] %vm1104, 0.0
        %1112 = vst.msk [vmem:[#allocation5 + $0x18] sm:$0xff] %vm1104, 0.0
        %vm1113 = vcmask 64512
        %1114 = vst.msk [vmem:[#allocation6] sm:$0xff] %vm1113, 0.0
        %1115 = vst.msk [vmem:[#allocation6 + $0x8] sm:$0xff] %vm1113, 0.0
        %1116 = vst.msk [vmem:[#allocation6 + $0x10] sm:$0xff] %vm1113, 0.0
        %1117 = vst.msk [vmem:[#allocation6 + $0x18] sm:$0xff] %vm1113, 0.0
        %v1118 = vld [vmem:[#allocation2] sm:$0xf]
        %v1119 = vld [vmem:[#allocation2 + $0x4] sm:$0xf]
        %v1120 = vld [vmem:[#allocation2 + $0x8] sm:$0xf]
        %v1121 = vld [vmem:[#allocation2 + $0xc] sm:$0xf]
        %v1122 = vld [vmem:[#allocation3] sm:$0xf]
        %v1123 = vld [vmem:[#allocation3 + $0x4] sm:$0xf]
        %v1124 = vld [vmem:[#allocation3 + $0x8] sm:$0xf]
        %v1125 = vld [vmem:[#allocation3 + $0xc] sm:$0xf]
        %v1127 = vsel %vm1113, %v1094, 0
        %vm1129 = vcmask 1043456
        %v1131 = vsel %vm1129, %v1118, 0
        %1133 = vmatprep.subr.bf16.mxu0 0
        %1134 = vmatpush1.bf16.msra.mxu0 %v1131
        %1135 = vmatprep.subr.bf16.mxu0 0
        %1136 = vmatpush1.bf16.msra.mxu0 0
        %1137 = vmatprep.subr.bf16.mxu0 0
        %1138 = vmatpush1.bf16.msra.mxu0 0
        %1139 = vmatprep.subr.bf16.mxu0 0
        %1140 = vmatpush1.bf16.msra.mxu0 0
        %1141 = vmatprep.subr.bf16.mxu0 0
        %1142 = vmatpush1.bf16.msra.mxu0 0
        %1143 = vmatprep.subr.bf16.mxu0 0
        %1144 = vmatpush1.bf16.msra.mxu0 0
        %1145 = vmatprep.subr.bf16.mxu0 0
        %1146 = vmatpush1.bf16.msra.mxu0 0
        %1147 = vmatprep.subr.bf16.mxu0 0
        %1148 = vmatpush1.bf16.msra.mxu0 0
        %1149 = vmatprep.subr.bf16.mxu0 0
        %1150 = vmatpush1.bf16.msra.mxu0 0
        %1151 = vmatprep.subr.bf16.mxu0 0
        %1152 = vmatpush1.bf16.msra.mxu0 0
        %1153 = vmatprep.subr.bf16.mxu0 0
        %1154 = vmatpush1.bf16.msra.mxu0 0
        %1155 = vmatprep.subr.bf16.mxu0 0
        %1156 = vmatpush1.bf16.msra.mxu0 0
        %1157 = vmatprep.subr.bf16.mxu0 0
        %1158 = vmatpush1.bf16.msra.mxu0 0
        %1159 = vmatprep.subr.bf16.mxu0 0
        %1160 = vmatpush1.bf16.msra.mxu0 0
        %1161 = vmatprep.subr.bf16.mxu0 0
        %1162 = vmatpush1.bf16.msra.mxu0 0
        %1163 = vmatprep.subr.bf16.mxu0 0
        %1164 = vmatpush1.bf16.msra.mxu0 0
        %1165 = vmatprep.mubr.bf16.mxu0 0
        %1166 = vmatmul.mubr.bf16.gmra.mrb[0].mxu0 %v1127
        %v1167 = vpop.f32.mrb[0].mxu0
        %v1168 = vadd.f32 0.0, %v1167
        %v1169 = vpop.f32.mrb[0].mxu0
        %v1170 = vpop.f32.mrb[0].mxu0
        %v1171 = vpop.f32.mrb[0].mxu0
        %1172 = vdwg.mxu0
        %v1174 = vsel %vm1113, %v1097, 0
        %v1177 = vsel %vm1129, %v1119, 0
        %1179 = vmatprep.subr.bf16.mxu0 0
        %1180 = vmatpush1.bf16.msra.mxu0 %v1177
        %1181 = vmatprep.subr.bf16.mxu0 0
        %1182 = vmatpush1.bf16.msra.mxu0 0
        %1183 = vmatprep.subr.bf16.mxu0 0
        %1184 = vmatpush1.bf16.msra.mxu0 0
        %1185 = vmatprep.subr.bf16.mxu0 0
        %1186 = vmatpush1.bf16.msra.mxu0 0
        %1187 = vmatprep.subr.bf16.mxu0 0
        %1188 = vmatpush1.bf16.msra.mxu0 0
        %1189 = vmatprep.subr.bf16.mxu0 0
        %1190 = vmatpush1.bf16.msra.mxu0 0
        %1191 = vmatprep.subr.bf16.mxu0 0
        %1192 = vmatpush1.bf16.msra.mxu0 0
        %1193 = vmatprep.subr.bf16.mxu0 0
        %1194 = vmatpush1.bf16.msra.mxu0 0
        %1195 = vmatprep.subr.bf16.mxu0 0
        %1196 = vmatpush1.bf16.msra.mxu0 0
        %1197 = vmatprep.subr.bf16.mxu0 0
        %1198 = vmatpush1.bf16.msra.mxu0 0
        %1199 = vmatprep.subr.bf16.mxu0 0
        %1200 = vmatpush1.bf16.msra.mxu0 0
        %1201 = vmatprep.subr.bf16.mxu0 0
        %1202 = vmatpush1.bf16.msra.mxu0 0
        %1203 = vmatprep.subr.bf16.mxu0 0
        %1204 = vmatpush1.bf16.msra.mxu0 0
        %1205 = vmatprep.subr.bf16.mxu0 0
        %1206 = vmatpush1.bf16.msra.mxu0 0
        %1207 = vmatprep.subr.bf16.mxu0 0
        %1208 = vmatpush1.bf16.msra.mxu0 0
        %1209 = vmatprep.subr.bf16.mxu0 0
        %1210 = vmatpush1.bf16.msra.mxu0 0
        %1211 = vmatprep.mubr.bf16.mxu0 0
        %1212 = vmatmul.mubr.bf16.gmra.mrb[0].mxu0 %v1174
        %v1213 = vpop.f32.mrb[0].mxu0
        %v1214 = vadd.f32 0.0, %v1213
        %v1215 = vpop.f32.mrb[0].mxu0
        %v1216 = vpop.f32.mrb[0].mxu0
        %v1217 = vpop.f32.mrb[0].mxu0
        %1218 = vdwg.mxu0
        %v1220 = vsel %vm1113, %v1100, 0
        %v1223 = vsel %vm1129, %v1120, 0
        %1225 = vmatprep.subr.bf16.mxu0 0
        %1226 = vmatpush1.bf16.msra.mxu0 %v1223
        %1227 = vmatprep.subr.bf16.mxu0 0
        %1228 = vmatpush1.bf16.msra.mxu0 0
        %1229 = vmatprep.subr.bf16.mxu0 0
        %1230 = vmatpush1.bf16.msra.mxu0 0
        %1231 = vmatprep.subr.bf16.mxu0 0
        %1232 = vmatpush1.bf16.msra.mxu0 0
        %1233 = vmatprep.subr.bf16.mxu0 0
        %1234 = vmatpush1.bf16.msra.mxu0 0
        %1235 = vmatprep.subr.bf16.mxu0 0
        %1236 = vmatpush1.bf16.msra.mxu0 0
        %1237 = vmatprep.subr.bf16.mxu0 0
        %1238 = vmatpush1.bf16.msra.mxu0 0
        %1239 = vmatprep.subr.bf16.mxu0 0
        %1240 = vmatpush1.bf16.msra.mxu0 0
        %1241 = vmatprep.subr.bf16.mxu0 0
        %1242 = vmatpush1.bf16.msra.mxu0 0
        %1243 = vmatprep.subr.bf16.mxu0 0
        %1244 = vmatpush1.bf16.msra.mxu0 0
        %1245 = vmatprep.subr.bf16.mxu0 0
        %1246 = vmatpush1.bf16.msra.mxu0 0
        %1247 = vmatprep.subr.bf16.mxu0 0
        %1248 = vmatpush1.bf16.msra.mxu0 0
        %1249 = vmatprep.subr.bf16.mxu0 0
        %1250 = vmatpush1.bf16.msra.mxu0 0
        %1251 = vmatprep.subr.bf16.mxu0 0
        %1252 = vmatpush1.bf16.msra.mxu0 0
        %1253 = vmatprep.subr.bf16.mxu0 0
        %1254 = vmatpush1.bf16.msra.mxu0 0
        %1255 = vmatprep.subr.bf16.mxu0 0
        %1256 = vmatpush1.bf16.msra.mxu0 0
        %1257 = vmatprep.mubr.bf16.mxu0 0
        %1258 = vmatmul.mubr.bf16.gmra.mrb[0].mxu0 %v1220
        %v1259 = vpop.f32.mrb[0].mxu0
        %v1260 = vadd.f32 0.0, %v1259
        %v1261 = vpop.f32.mrb[0].mxu0
        %v1262 = vpop.f32.mrb[0].mxu0
        %v1263 = vpop.f32.mrb[0].mxu0
        %1264 = vdwg.mxu0
        %v1266 = vsel %vm1113, %v1103, 0
        %v1269 = vsel %vm1129, %v1121, 0
        %1271 = vmatprep.subr.bf16.mxu0 0
        %1272 = vmatpush1.bf16.msra.mxu0 %v1269
        %1273 = vmatprep.subr.bf16.mxu0 0
        %1274 = vmatpush1.bf16.msra.mxu0 0
        %1275 = vmatprep.subr.bf16.mxu0 0
        %1276 = vmatpush1.bf16.msra.mxu0 0
        %1277 = vmatprep.subr.bf16.mxu0 0
        %1278 = vmatpush1.bf16.msra.mxu0 0
        %1279 = vmatprep.subr.bf16.mxu0 0
        %1280 = vmatpush1.bf16.msra.mxu0 0
        %1281 = vmatprep.subr.bf16.mxu0 0
        %1282 = vmatpush1.bf16.msra.mxu0 0
        %1283 = vmatprep.subr.bf16.mxu0 0
        %1284 = vmatpush1.bf16.msra.mxu0 0
        %1285 = vmatprep.subr.bf16.mxu0 0
        %1286 = vmatpush1.bf16.msra.mxu0 0
        %1287 = vmatprep.subr.bf16.mxu0 0
        %1288 = vmatpush1.bf16.msra.mxu0 0
        %1289 = vmatprep.subr.bf16.mxu0 0
        %1290 = vmatpush1.bf16.msra.mxu0 0
        %1291 = vmatprep.subr.bf16.mxu0 0
        %1292 = vmatpush1.bf16.msra.mxu0 0
        %1293 = vmatprep.subr.bf16.mxu0 0
        %1294 = vmatpush1.bf16.msra.mxu0 0
        %1295 = vmatprep.subr.bf16.mxu0 0
        %1296 = vmatpush1.bf16.msra.mxu0 0
        %1297 = vmatprep.subr.bf16.mxu0 0
        %1298 = vmatpush1.bf16.msra.mxu0 0
        %1299 = vmatprep.subr.bf16.mxu0 0
        %1300 = vmatpush1.bf16.msra.mxu0 0
        %1301 = vmatprep.subr.bf16.mxu0 0
        %1302 = vmatpush1.bf16.msra.mxu0 0
        %1303 = vmatprep.mubr.bf16.mxu0 0
        %1304 = vmatmul.mubr.bf16.gmra.mrb[0].mxu0 %v1266
        %v1305 = vpop.f32.mrb[0].mxu0
        %v1306 = vadd.f32 0.0, %v1305
        %v1307 = vpop.f32.mrb[0].mxu0
        %v1308 = vpop.f32.mrb[0].mxu0
        %v1309 = vpop.f32.mrb[0].mxu0
        %1310 = vdwg.mxu0
        %v1311 = vld [vmem:[#allocation4] sm:$0xff]
        %v1312 = vld [vmem:[#allocation4 + $0x8] sm:$0xff]
        %v1313 = vld [vmem:[#allocation4 + $0x10] sm:$0xff]
        %v1314 = vld [vmem:[#allocation4 + $0x18] sm:$0xff]
        %v1315 = vsel %vm1113, %v1168, -inf
        %1316 = vmax.xlane.f32.xlu0 %v1315
        %v1317 = vpop.xlane.xlu0 %1316
        %v1318 = vsel %vm1113, %v1214, -inf
        %1319 = vmax.xlane.f32.xlu0 %v1318
        %v1320 = vpop.xlane.xlu0 %1319
        %v1321 = vsel %vm1113, %v1260, -inf
        %1322 = vmax.xlane.f32.xlu0 %v1321
        %v1323 = vpop.xlane.xlu0 %1322
        %v1324 = vsel %vm1113, %v1306, -inf
        %1325 = vmax.xlane.f32.xlu0 %v1324
        %v1326 = vpop.xlane.xlu0 %1325
        %v1327 = vmax.f32 %v1311, %v1317
        %v1328 = vmax.f32 %v1312, %v1320
        %v1329 = vmax.f32 %v1313, %v1323
        %v1330 = vmax.f32 %v1314, %v1326
        %v1331 = vsub.f32 %v1311, %v1327
        %v1332 = vsub.f32 %v1312, %v1328
        %v1333 = vsub.f32 %v1313, %v1329
        %v1334 = vsub.f32 %v1314, %v1330
        %v1335 = vmul.f32 %v1331, 1.442695
        %v1336 = vpow.pop %v1335
        %v1337 = vmul.f32 %v1332, 1.442695
        %v1338 = vpow.pop %v1337
        %v1339 = vmul.f32 %v1333, 1.442695
        %v1340 = vpow.pop %v1339
        %v1341 = vmul.f32 %v1334, 1.442695
        %v1342 = vpow.pop %v1341
        %1344 = vset.pattern.permute.xlu0 0
        %1345 = vperm.xlu0 %1344, %v1327
        %v1346 = vpop.permute.xlu0 %1345
        %1349 = vset.pattern.permute.xlu0 0
        %1350 = vperm.xlu0 %1349, %v1328
        %v1351 = vpop.permute.xlu0 %1350
        %1354 = vset.pattern.permute.xlu0 0
        %1355 = vperm.xlu0 %1354, %v1329
        %v1356 = vpop.permute.xlu0 %1355
        %1359 = vset.pattern.permute.xlu0 0
        %1360 = vperm.xlu0 %1359, %v1330
        %v1361 = vpop.permute.xlu0 %1360
        %v1363 = vsub.f32 %v1168, %v1346
        %v1364 = vsub.f32 %v1214, %v1351
        %v1365 = vsub.f32 %v1260, %v1356
        %v1366 = vsub.f32 %v1306, %v1361
        %v1367 = vmul.f32 %v1363, 1.442695
        %v1368 = vpow.pop %v1367
        %v1369 = vmul.f32 %v1364, 1.442695
        %v1370 = vpow.pop %v1369
        %v1371 = vmul.f32 %v1365, 1.442695
        %v1372 = vpow.pop %v1371
        %v1373 = vmul.f32 %v1366, 1.442695
        %v1374 = vpow.pop %v1373
        %v1375 = vld [vmem:[#allocation5] sm:$0xff]
        %v1376 = vld [vmem:[#allocation5 + $0x8] sm:$0xff]
        %v1377 = vld [vmem:[#allocation5 + $0x10] sm:$0xff]
        %v1378 = vld [vmem:[#allocation5 + $0x18] sm:$0xff]
        %v1379 = vmul.f32 %v1336, %v1375
        %v1380 = vmul.f32 %v1338, %v1376
        %v1381 = vmul.f32 %v1340, %v1377
        %v1382 = vmul.f32 %v1342, %v1378
        %v1383 = vsel %vm1113, %v1368, 0.0
        %1384 = vadd.xlane.f32.xlu0 %v1383
        %v1385 = vpop.xlane.xlu0 %1384
        %v1386 = vsel %vm1113, %v1370, 0.0
        %1387 = vadd.xlane.f32.xlu0 %v1386
        %v1388 = vpop.xlane.xlu0 %1387
        %v1389 = vsel %vm1113, %v1372, 0.0
        %1390 = vadd.xlane.f32.xlu0 %v1389
        %v1391 = vpop.xlane.xlu0 %1390
        %v1392 = vsel %vm1113, %v1374, 0.0
        %1393 = vadd.xlane.f32.xlu0 %v1392
        %v1394 = vpop.xlane.xlu0 %1393
        %v1395 = vadd.f32 %v1379, %v1385
        %v1396 = vadd.f32 %v1380, %v1388
        %v1397 = vadd.f32 %v1381, %v1391
        %v1398 = vadd.f32 %v1382, %v1394
        %1399 = vst.msk [vmem:[#allocation5] sm:$0xff] %vm1104, %v1395
        %1400 = vst.msk [vmem:[#allocation5 + $0x8] sm:$0xff] %vm1104, %v1396
        %1401 = vst.msk [vmem:[#allocation5 + $0x10] sm:$0xff] %vm1104, %v1397
        %1402 = vst.msk [vmem:[#allocation5 + $0x18] sm:$0xff] %vm1104, %v1398
        %v1403 = vld [vmem:[#allocation6] sm:$0xff]
        %v1404 = vld [vmem:[#allocation6 + $0x8] sm:$0xff]
        %v1405 = vld [vmem:[#allocation6 + $0x10] sm:$0xff]
        %v1406 = vld [vmem:[#allocation6 + $0x18] sm:$0xff]
        %1408 = vset.pattern.permute.xlu0 0
        %1409 = vperm.xlu0 %1408, %v1336
        %v1410 = vpop.permute.xlu0 %1409
        %1413 = vset.pattern.permute.xlu0 0
        %1414 = vperm.xlu0 %1413, %v1338
        %v1415 = vpop.permute.xlu0 %1414
        %1418 = vset.pattern.permute.xlu0 0
        %1419 = vperm.xlu0 %1418, %v1340
        %v1420 = vpop.permute.xlu0 %1419
        %1423 = vset.pattern.permute.xlu0 0
        %1424 = vperm.xlu0 %1423, %v1342
        %v1425 = vpop.permute.xlu0 %1424
        %v1427 = vmul.f32 %v1410, %v1403
        %v1428 = vmul.f32 %v1415, %v1404
        %v1429 = vmul.f32 %v1420, %v1405
        %v1430 = vmul.f32 %v1425, %v1406
        %v1431 = vpack.c.bf16 %v1368, %v1368
        %v1432 = vpack.c.bf16 %v1370, %v1370
        %v1433 = vpack.c.bf16 %v1372, %v1372
        %v1434 = vpack.c.bf16 %v1374, %v1374
        %v1436 = vsel %vm1113, %v1431, 0
        %v1439 = vsel %vm1129, %v1122, 0
        %1441 = vmatprep.subr.bf16.mxu0 0
        %1442 = vmatpush1.bf16.msra.mxu0 %v1439
        %1443 = vmatprep.subr.bf16.mxu0 0
        %1444 = vmatpush1.bf16.msra.mxu0 0
        %1445 = vmatprep.subr.bf16.mxu0 0
        %1446 = vmatpush1.bf16.msra.mxu0 0
        %1447 = vmatprep.subr.bf16.mxu0 0
        %1448 = vmatpush1.bf16.msra.mxu0 0
        %1449 = vmatprep.subr.bf16.mxu0 0
        %1450 = vmatpush1.bf16.msra.mxu0 0
        %1451 = vmatprep.subr.bf16.mxu0 0
        %1452 = vmatpush1.bf16.msra.mxu0 0
        %1453 = vmatprep.subr.bf16.mxu0 0
        %1454 = vmatpush1.bf16.msra.mxu0 0
        %1455 = vmatprep.subr.bf16.mxu0 0
        %1456 = vmatpush1.bf16.msra.mxu0 0
        %1457 = vmatprep.subr.bf16.mxu0 0
        %1458 = vmatpush1.bf16.msra.mxu0 0
        %1459 = vmatprep.subr.bf16.mxu0 0
        %1460 = vmatpush1.bf16.msra.mxu0 0
        %1461 = vmatprep.subr.bf16.mxu0 0
        %1462 = vmatpush1.bf16.msra.mxu0 0
        %1463 = vmatprep.subr.bf16.mxu0 0
        %1464 = vmatpush1.bf16.msra.mxu0 0
        %1465 = vmatprep.subr.bf16.mxu0 0
        %1466 = vmatpush1.bf16.msra.mxu0 0
        %1467 = vmatprep.subr.bf16.mxu0 0
        %1468 = vmatpush1.bf16.msra.mxu0 0
        %1469 = vmatprep.subr.bf16.mxu0 0
        %1470 = vmatpush1.bf16.msra.mxu0 0
        %1471 = vmatprep.subr.bf16.mxu0 0
        %1472 = vmatpush1.bf16.msra.mxu0 0
        %1473 = vmatprep.mubr.bf16.mxu0 0
        %1474 = vmatmul.mubr.bf16.gmra.mrb[0].mxu0 %v1436
        %v1475 = vpop.f32.mrb[0].mxu0
        %v1476 = vadd.f32 0.0, %v1475
        %v1477 = vpop.f32.mrb[0].mxu0
        %v1478 = vpop.f32.mrb[0].mxu0
        %v1479 = vpop.f32.mrb[0].mxu0
        %1480 = vdwg.mxu0
        %v1482 = vsel %vm1113, %v1432, 0
        %v1485 = vsel %vm1129, %v1123, 0
        %1487 = vmatprep.subr.bf16.mxu0 0
        %1488 = vmatpush1.bf16.msra.mxu0 %v1485
        %1489 = vmatprep.subr.bf16.mxu0 0
        %1490 = vmatpush1.bf16.msra.mxu0 0
        %1491 = vmatprep.subr.bf16.mxu0 0
        %1492 = vmatpush1.bf16.msra.mxu0 0
        %1493 = vmatprep.subr.bf16.mxu0 0
        %1494 = vmatpush1.bf16.msra.mxu0 0
        %1495 = vmatprep.subr.bf16.mxu0 0
        %1496 = vmatpush1.bf16.msra.mxu0 0
        %1497 = vmatprep.subr.bf16.mxu0 0
        %1498 = vmatpush1.bf16.msra.mxu0 0
        %1499 = vmatprep.subr.bf16.mxu0 0
        %1500 = vmatpush1.bf16.msra.mxu0 0
        %1501 = vmatprep.subr.bf16.mxu0 0
        %1502 = vmatpush1.bf16.msra.mxu0 0
        %1503 = vmatprep.subr.bf16.mxu0 0
        %1504 = vmatpush1.bf16.msra.mxu0 0
        %1505 = vmatprep.subr.bf16.mxu0 0
        %1506 = vmatpush1.bf16.msra.mxu0 0
        %1507 = vmatprep.subr.bf16.mxu0 0
        %1508 = vmatpush1.bf16.msra.mxu0 0
        %1509 = vmatprep.subr.bf16.mxu0 0
        %1510 = vmatpush1.bf16.msra.mxu0 0
        %1511 = vmatprep.subr.bf16.mxu0 0
        %1512 = vmatpush1.bf16.msra.mxu0 0
        %1513 = vmatprep.subr.bf16.mxu0 0
        %1514 = vmatpush1.bf16.msra.mxu0 0
        %1515 = vmatprep.subr.bf16.mxu0 0
        %1516 = vmatpush1.bf16.msra.mxu0 0
        %1517 = vmatprep.subr.bf16.mxu0 0
        %1518 = vmatpush1.bf16.msra.mxu0 0
        %1519 = vmatprep.mubr.bf16.mxu0 0
        %1520 = vmatmul.mubr.bf16.gmra.mrb[0].mxu0 %v1482
        %v1521 = vpop.f32.mrb[0].mxu0
        %v1522 = vadd.f32 0.0, %v1521
        %v1523 = vpop.f32.mrb[0].mxu0
        %v1524 = vpop.f32.mrb[0].mxu0
        %v1525 = vpop.f32.mrb[0].mxu0
        %1526 = vdwg.mxu0
        %v1528 = vsel %vm1113, %v1433, 0
        %v1531 = vsel %vm1129, %v1124, 0
        %1533 = vmatprep.subr.bf16.mxu0 0
        %1534 = vmatpush1.bf16.msra.mxu0 %v1531
        %1535 = vmatprep.subr.bf16.mxu0 0
        %1536 = vmatpush1.bf16.msra.mxu0 0
        %1537 = vmatprep.subr.bf16.mxu0 0
        %1538 = vmatpush1.bf16.msra.mxu0 0
        %1539 = vmatprep.subr.bf16.mxu0 0
        %1540 = vmatpush1.bf16.msra.mxu0 0
        %1541 = vmatprep.subr.bf16.mxu0 0
        %1542 = vmatpush1.bf16.msra.mxu0 0
        %1543 = vmatprep.subr.bf16.mxu0 0
        %1544 = vmatpush1.bf16.msra.mxu0 0
        %1545 = vmatprep.subr.bf16.mxu0 0
        %1546 = vmatpush1.bf16.msra.mxu0 0
        %1547 = vmatprep.subr.bf16.mxu0 0
        %1548 = vmatpush1.bf16.msra.mxu0 0
        %1549 = vmatprep.subr.bf16.mxu0 0
        %1550 = vmatpush1.bf16.msra.mxu0 0
        %1551 = vmatprep.subr.bf16.mxu0 0
        %1552 = vmatpush1.bf16.msra.mxu0 0
        %1553 = vmatprep.subr.bf16.mxu0 0
        %1554 = vmatpush1.bf16.msra.mxu0 0
        %1555 = vmatprep.subr.bf16.mxu0 0
        %1556 = vmatpush1.bf16.msra.mxu0 0
        %1557 = vmatprep.subr.bf16.mxu0 0
        %1558 = vmatpush1.bf16.msra.mxu0 0
        %1559 = vmatprep.subr.bf16.mxu0 0
        %1560 = vmatpush1.bf16.msra.mxu0 0
        %1561 = vmatprep.subr.bf16.mxu0 0
        %1562 = vmatpush1.bf16.msra.mxu0 0
        %1563 = vmatprep.subr.bf16.mxu0 0
        %1564 = vmatpush1.bf16.msra.mxu0 0
        %1565 = vmatprep.mubr.bf16.mxu0 0
        %1566 = vmatmul.mubr.bf16.gmra.mrb[0].mxu0 %v1528
        %v1567 = vpop.f32.mrb[0].mxu0
        %v1568 = vadd.f32 0.0, %v1567
        %v1569 = vpop.f32.mrb[0].mxu0
        %v1570 = vpop.f32.mrb[0].mxu0
        %v1571 = vpop.f32.mrb[0].mxu0
        %1572 = vdwg.mxu0
        %v1574 = vsel %vm1113, %v1434, 0
        %v1577 = vsel %vm1129, %v1125, 0
        %1579 = vmatprep.subr.bf16.mxu0 0
        %1580 = vmatpush1.bf16.msra.mxu0 %v1577
        %1581 = vmatprep.subr.bf16.mxu0 0
        %1582 = vmatpush1.bf16.msra.mxu0 0
        %1583 = vmatprep.subr.bf16.mxu0 0
        %1584 = vmatpush1.bf16.msra.mxu0 0
        %1585 = vmatprep.subr.bf16.mxu0 0
        %1586 = vmatpush1.bf16.msra.mxu0 0
        %1587 = vmatprep.subr.bf16.mxu0 0
        %1588 = vmatpush1.bf16.msra.mxu0 0
        %1589 = vmatprep.subr.bf16.mxu0 0
        %1590 = vmatpush1.bf16.msra.mxu0 0
        %1591 = vmatprep.subr.bf16.mxu0 0
        %1592 = vmatpush1.bf16.msra.mxu0 0
        %1593 = vmatprep.subr.bf16.mxu0 0
        %1594 = vmatpush1.bf16.msra.mxu0 0
        %1595 = vmatprep.subr.bf16.mxu0 0
        %1596 = vmatpush1.bf16.msra.mxu0 0
        %1597 = vmatprep.subr.bf16.mxu0 0
        %1598 = vmatpush1.bf16.msra.mxu0 0
        %1599 = vmatprep.subr.bf16.mxu0 0
        %1600 = vmatpush1.bf16.msra.mxu0 0
        %1601 = vmatprep.subr.bf16.mxu0 0
        %1602 = vmatpush1.bf16.msra.mxu0 0
        %1603 = vmatprep.subr.bf16.mxu0 0
        %1604 = vmatpush1.bf16.msra.mxu0 0
        %1605 = vmatprep.subr.bf16.mxu0 0
        %1606 = vmatpush1.bf16.msra.mxu0 0
        %1607 = vmatprep.subr.bf16.mxu0 0
        %1608 = vmatpush1.bf16.msra.mxu0 0
        %1609 = vmatprep.subr.bf16.mxu0 0
        %1610 = vmatpush1.bf16.msra.mxu0 0
        %1611 = vmatprep.mubr.bf16.mxu0 0
        %1612 = vmatmul.mubr.bf16.gmra.mrb[0].mxu0 %v1574
        %v1613 = vpop.f32.mrb[0].mxu0
        %v1614 = vadd.f32 0.0, %v1613
        %v1615 = vpop.f32.mrb[0].mxu0
        %v1616 = vpop.f32.mrb[0].mxu0
        %v1617 = vpop.f32.mrb[0].mxu0
        %1618 = vdwg.mxu0
        %v1619 = vadd.f32 %v1427, %v1476
        %v1620 = vadd.f32 %v1428, %v1522
        %v1621 = vadd.f32 %v1429, %v1568
        %v1622 = vadd.f32 %v1430, %v1614
        %1623 = vst.msk [vmem:[#allocation6] sm:$0xff] %vm1113, %v1619
        %1624 = vst.msk [vmem:[#allocation6 + $0x8] sm:$0xff] %vm1113, %v1620
        %1625 = vst.msk [vmem:[#allocation6 + $0x10] sm:$0xff] %vm1113, %v1621
        %1626 = vst.msk [vmem:[#allocation6 + $0x18] sm:$0xff] %vm1113, %v1622
        %1627 = vst.msk [vmem:[#allocation4] sm:$0xff] %vm1104, %v1327
        %1628 = vst.msk [vmem:[#allocation4 + $0x8] sm:$0xff] %vm1104, %v1328
        %1629 = vst.msk [vmem:[#allocation4 + $0x10] sm:$0xff] %vm1104, %v1329
        %1630 = vst.msk [vmem:[#allocation4 + $0x18] sm:$0xff] %vm1104, %v1330
        %v1631 = vld [vmem:[#allocation6] sm:$0xff]
        %v1632 = vld [vmem:[#allocation6 + $0x8] sm:$0xff]
        %v1633 = vld [vmem:[#allocation6 + $0x10] sm:$0xff]
        %v1634 = vld [vmem:[#allocation6 + $0x18] sm:$0xff]
        %v1635 = vld [vmem:[#allocation5] sm:$0xff]
        %v1636 = vld [vmem:[#allocation5 + $0x8] sm:$0xff]
        %v1637 = vld [vmem:[#allocation5 + $0x10] sm:$0xff]
        %v1638 = vld [vmem:[#allocation5 + $0x18] sm:$0xff]
        %v1639 = vrcp.pop %v1635
        %v1640 = vrcp.pop %v1636
        %v1641 = vrcp.pop %v1637
        %v1642 = vrcp.pop %v1638
        %1644 = vset.pattern.permute.xlu0 0
        %1645 = vperm.xlu0 %1644, %v1639
        %v1646 = vpop.permute.xlu0 %1645
        %1649 = vset.pattern.permute.xlu0 0
        %1650 = vperm.xlu0 %1649, %v1640
        %v1651 = vpop.permute.xlu0 %1650
        %1654 = vset.pattern.permute.xlu0 0
        %1655 = vperm.xlu0 %1654, %v1641
        %v1656 = vpop.permute.xlu0 %1655
        %1659 = vset.pattern.permute.xlu0 0
        %1660 = vperm.xlu0 %1659, %v1642
        %v1661 = vpop.permute.xlu0 %1660
        %v1663 = vmul.f32 %v1631, %v1646
        %v1664 = vmul.f32 %v1632, %v1651
        %v1665 = vmul.f32 %v1633, %v1656
        %v1666 = vmul.f32 %v1634, %v1661
        %v1667 = vpack.c.bf16 %v1663, %v1663
        %v1668 = vpack.c.bf16 %v1664, %v1664
        %v1669 = vpack.c.bf16 %v1665, %v1665
        %v1670 = vpack.c.bf16 %v1666, %v1666
        %v1671 = vld [vmem:[%s9] sm:$0xf]
        %v1672 = vld [vmem:[%s9 + $0x4] sm:$0xf]
        %v1673 = vld [vmem:[%s9 + $0x8] sm:$0xf]
        %v1674 = vld [vmem:[%s9 + $0xc] sm:$0xf]
        %v1676 = vsel %vm1113, %v1667, 0
        %v1679 = vsel %vm1129, %v1671, 0
        %1681 = vmatprep.subr.bf16.mxu0 0
        %1682 = vmatpush1.bf16.msra.mxu0 %v1679
        %1683 = vmatprep.subr.bf16.mxu0 0
        %1684 = vmatpush1.bf16.msra.mxu0 0
        %1685 = vmatprep.subr.bf16.mxu0 0
        %1686 = vmatpush1.bf16.msra.mxu0 0
        %1687 = vmatprep.subr.bf16.mxu0 0
        %1688 = vmatpush1.bf16.msra.mxu0 0
        %1689 = vmatprep.subr.bf16.mxu0 0
        %1690 = vmatpush1.bf16.msra.mxu0 0
        %1691 = vmatprep.subr.bf16.mxu0 0
        %1692 = vmatpush1.bf16.msra.mxu0 0
        %1693 = vmatprep.subr.bf16.mxu0 0
        %1694 = vmatpush1.bf16.msra.mxu0 0
        %1695 = vmatprep.subr.bf16.mxu0 0
        %1696 = vmatpush1.bf16.msra.mxu0 0
        %1697 = vmatprep.subr.bf16.mxu0 0
        %1698 = vmatpush1.bf16.msra.mxu0 0
        %1699 = vmatprep.subr.bf16.mxu0 0
        %1700 = vmatpush1.bf16.msra.mxu0 0
        %1701 = vmatprep.subr.bf16.mxu0 0
        %1702 = vmatpush1.bf16.msra.mxu0 0
        %1703 = vmatprep.subr.bf16.mxu0 0
        %1704 = vmatpush1.bf16.msra.mxu0 0
        %1705 = vmatprep.subr.bf16.mxu0 0
        %1706 = vmatpush1.bf16.msra.mxu0 0
        %1707 = vmatprep.subr.bf16.mxu0 0
        %1708 = vmatpush1.bf16.msra.mxu0 0
        %1709 = vmatprep.subr.bf16.mxu0 0
        %1710 = vmatpush1.bf16.msra.mxu0 0
        %1711 = vmatprep.subr.bf16.mxu0 0
        %1712 = vmatpush1.bf16.msra.mxu0 0
        %1713 = vmatprep.mubr.bf16.mxu0 0
        %1714 = vmatmul.mubr.bf16.gmra.mrb[0].mxu0 %v1676
        %v1715 = vpop.f32.mrb[0].mxu0
        %v1716 = vadd.f32 0.0, %v1715
        %v1717 = vpop.f32.mrb[0].mxu0
        %v1718 = vpop.f32.mrb[0].mxu0
        %v1719 = vpop.f32.mrb[0].mxu0
        %1720 = vdwg.mxu0
        %v1722 = vsel %vm1113, %v1668, 0
        %v1725 = vsel %vm1129, %v1672, 0
        %1727 = vmatprep.subr.bf16.mxu0 0
        %1728 = vmatpush1.bf16.msra.mxu0 %v1725
        %1729 = vmatprep.subr.bf16.mxu0 0
        %1730 = vmatpush1.bf16.msra.mxu0 0
        %1731 = vmatprep.subr.bf16.mxu0 0
        %1732 = vmatpush1.bf16.msra.mxu0 0
        %1733 = vmatprep.subr.bf16.mxu0 0
        %1734 = vmatpush1.bf16.msra.mxu0 0
        %1735 = vmatprep.subr.bf16.mxu0 0
        %1736 = vmatpush1.bf16.msra.mxu0 0
        %1737 = vmatprep.subr.bf16.mxu0 0
        %1738 = vmatpush1.bf16.msra.mxu0 0
        %1739 = vmatprep.subr.bf16.mxu0 0
        %1740 = vmatpush1.bf16.msra.mxu0 0
        %1741 = vmatprep.subr.bf16.mxu0 0
        %1742 = vmatpush1.bf16.msra.mxu0 0
        %1743 = vmatprep.subr.bf16.mxu0 0
        %1744 = vmatpush1.bf16.msra.mxu0 0
        %1745 = vmatprep.subr.bf16.mxu0 0
        %1746 = vmatpush1.bf16.msra.mxu0 0
        %1747 = vmatprep.subr.bf16.mxu0 0
        %1748 = vmatpush1.bf16.msra.mxu0 0
        %1749 = vmatprep.subr.bf16.mxu0 0
        %1750 = vmatpush1.bf16.msra.mxu0 0
        %1751 = vmatprep.subr.bf16.mxu0 0
        %1752 = vmatpush1.bf16.msra.mxu0 0
        %1753 = vmatprep.subr.bf16.mxu0 0
        %1754 = vmatpush1.bf16.msra.mxu0 0
        %1755 = vmatprep.subr.bf16.mxu0 0
        %1756 = vmatpush1.bf16.msra.mxu0 0
        %1757 = vmatprep.subr.bf16.mxu0 0
        %1758 = vmatpush1.bf16.msra.mxu0 0
        %1759 = vmatprep.mubr.bf16.mxu0 0
        %1760 = vmatmul.mubr.bf16.gmra.mrb[0].mxu0 %v1722
        %v1761 = vpop.f32.mrb[0].mxu0
        %v1762 = vadd.f32 0.0, %v1761
        %v1763 = vpop.f32.mrb[0].mxu0
        %v1764 = vpop.f32.mrb[0].mxu0
        %v1765 = vpop.f32.mrb[0].mxu0
        %1766 = vdwg.mxu0
        %v1768 = vsel %vm1113, %v1669, 0
        %v1771 = vsel %vm1129, %v1673, 0
        %1773 = vmatprep.subr.bf16.mxu0 0
        %1774 = vmatpush1.bf16.msra.mxu0 %v1771
        %1775 = vmatprep.subr.bf16.mxu0 0
        %1776 = vmatpush1.bf16.msra.mxu0 0
        %1777 = vmatprep.subr.bf16.mxu0 0
        %1778 = vmatpush1.bf16.msra.mxu0 0
        %1779 = vmatprep.subr.bf16.mxu0 0
        %1780 = vmatpush1.bf16.msra.mxu0 0
        %1781 = vmatprep.subr.bf16.mxu0 0
        %1782 = vmatpush1.bf16.msra.mxu0 0
        %1783 = vmatprep.subr.bf16.mxu0 0
        %1784 = vmatpush1.bf16.msra.mxu0 0
        %1785 = vmatprep.subr.bf16.mxu0 0
        %1786 = vmatpush1.bf16.msra.mxu0 0
        %1787 = vmatprep.subr.bf16.mxu0 0
        %1788 = vmatpush1.bf16.msra.mxu0 0
        %1789 = vmatprep.subr.bf16.mxu0 0
        %1790 = vmatpush1.bf16.msra.mxu0 0
        %1791 = vmatprep.subr.bf16.mxu0 0
        %1792 = vmatpush1.bf16.msra.mxu0 0
        %1793 = vmatprep.subr.bf16.mxu0 0
        %1794 = vmatpush1.bf16.msra.mxu0 0
        %1795 = vmatprep.subr.bf16.mxu0 0
        %1796 = vmatpush1.bf16.msra.mxu0 0
        %1797 = vmatprep.subr.bf16.mxu0 0
        %1798 = vmatpush1.bf16.msra.mxu0 0
        %1799 = vmatprep.subr.bf16.mxu0 0
        %1800 = vmatpush1.bf16.msra.mxu0 0
        %1801 = vmatprep.subr.bf16.mxu0 0
        %1802 = vmatpush1.bf16.msra.mxu0 0
        %1803 = vmatprep.subr.bf16.mxu0 0
        %1804 = vmatpush1.bf16.msra.mxu0 0
        %1805 = vmatprep.mubr.bf16.mxu0 0
        %1806 = vmatmul.mubr.bf16.gmra.mrb[0].mxu0 %v1768
        %v1807 = vpop.f32.mrb[0].mxu0
        %v1808 = vadd.f32 0.0, %v1807
        %v1809 = vpop.f32.mrb[0].mxu0
        %v1810 = vpop.f32.mrb[0].mxu0
        %v1811 = vpop.f32.mrb[0].mxu0
        %1812 = vdwg.mxu0
        %v1814 = vsel %vm1113, %v1670, 0
        %v1817 = vsel %vm1129, %v1674, 0
        %1819 = vmatprep.subr.bf16.mxu0 0
        %1820 = vmatpush1.bf16.msra.mxu0 %v1817
        %1821 = vmatprep.subr.bf16.mxu0 0
        %1822 = vmatpush1.bf16.msra.mxu0 0
        %1823 = vmatprep.subr.bf16.mxu0 0
        %1824 = vmatpush1.bf16.msra.mxu0 0
        %1825 = vmatprep.subr.bf16.mxu0 0
        %1826 = vmatpush1.bf16.msra.mxu0 0
        %1827 = vmatprep.subr.bf16.mxu0 0
        %1828 = vmatpush1.bf16.msra.mxu0 0
        %1829 = vmatprep.subr.bf16.mxu0 0
        %1830 = vmatpush1.bf16.msra.mxu0 0
        %1831 = vmatprep.subr.bf16.mxu0 0
        %1832 = vmatpush1.bf16.msra.mxu0 0
        %1833 = vmatprep.subr.bf16.mxu0 0
        %1834 = vmatpush1.bf16.msra.mxu0 0
        %1835 = vmatprep.subr.bf16.mxu0 0
        %1836 = vmatpush1.bf16.msra.mxu0 0
        %1837 = vmatprep.subr.bf16.mxu0 0
        %1838 = vmatpush1.bf16.msra.mxu0 0
        %1839 = vmatprep.subr.bf16.mxu0 0
        %1840 = vmatpush1.bf16.msra.mxu0 0
        %1841 = vmatprep.subr.bf16.mxu0 0
        %1842 = vmatpush1.bf16.msra.mxu0 0
        %1843 = vmatprep.subr.bf16.mxu0 0
        %1844 = vmatpush1.bf16.msra.mxu0 0
        %1845 = vmatprep.subr.bf16.mxu0 0
        %1846 = vmatpush1.bf16.msra.mxu0 0
        %1847 = vmatprep.subr.bf16.mxu0 0
        %1848 = vmatpush1.bf16.msra.mxu0 0
        %1849 = vmatprep.subr.bf16.mxu0 0
        %1850 = vmatpush1.bf16.msra.mxu0 0
        %1851 = vmatprep.mubr.bf16.mxu0 0
        %1852 = vmatmul.mubr.bf16.gmra.mrb[0].mxu0 %v1814
        %v1853 = vpop.f32.mrb[0].mxu0
        %v1854 = vadd.f32 0.0, %v1853
        %v1855 = vpop.f32.mrb[0].mxu0
        %v1856 = vpop.f32.mrb[0].mxu0
        %v1857 = vpop.f32.mrb[0].mxu0
        %1858 = vdwg.mxu0
        %v1859 = vsel %vm891, %v1716, 0.0
        %v1860 = vsel %vm891, %v1762, 0.0
        %v1861 = vadd.f32 %v1859, %v1860
        %v1862 = vsel %vm891, %v1808, 0.0
        %v1863 = vadd.f32 %v1861, %v1862
        %v1864 = vsel %vm891, %v1854, 0.0
        %v1865 = vadd.f32 %v1863, %v1864
        %v1866 = vld [vmem:[%s10] sm:$0x1]
        %v1868 = vlaneseq
        %v1869 = vshrl.u32 %v1868, 7
        %v1870 = vsub.s32 0, %v1869
        %v1871 = vrot.slane %v1866, %v1870
        %v1873 = vadd.f32 %v1865, %v1871
        %1874 = vst.msk [vmem:[%s531] sm:$0xff] %vm891, %v1873
        %s1875 = sand.u32 %s303, 1
        %s1876 = scalar_lea.sflag [#allocation9], %s1875
        %s1877 = sand.u32 %s303, 1
        %s1878 = smul.addr %s1877, 8
        %s1879 = scalar_lea.vmem [#allocation18], %s1878
        // Predicated region
        $region93: #{tpu_custom_call.1} parent=63 // pred_check
          %p1880 = pneg %p313
        $region94: #{tpu_custom_call.1} parent=63 // pred_check_branch
          %1882 = sbr.rel (%p1880) target = $region96
        $region95: #{tpu_custom_call.1} parent=63 // pred_region
          %s1884 = ssub.s32 128, 128
          %1885 = vsyncadd %s1876, %s1884
          %s1886 = sadd.s32 %s38, %s37
          %s1887 = smul.addr %s1886, 128
          %s1888 = scalar_lea.hbm %s11, %s1887
          %s1890 = sshll.u32 %s1879, 4
          %s1891 = int_to_ptr.vmem [resolvable:$true] %s1890
          %1893 = dma.vmem_to_hbm [thread:$0]  %s1891, 128, %s1888, %s1876
        $region96: #{tpu_custom_call.1} parent=63 // pred_fallthru
          _
      $region64: #{tpu_custom_call.1} parent=5 // pred_fallthru
        _
      %p1894 = scmp.le.s32.totalorder 2, %s28
      // Predicated region
      $region97: #{tpu_custom_call.1} parent=5 // pred_check
        %p1895 = pneg %p1894
      $region98: #{tpu_custom_call.1} parent=5 // pred_check_branch
        %1897 = sbr.rel (%p1895) target = $region100
      $region99: #{tpu_custom_call.1} parent=5 // pred_region
        %s1898 = ssub.s32 %s28, 2
        // Predicated region
        $region101: #{tpu_custom_call.1} parent=99 // pred_check
          %p1899 = pneg %p319
        $region102: #{tpu_custom_call.1} parent=99 // pred_check_branch
          %1901 = sbr.rel (%p1899) target = $region104
        $region103: #{tpu_custom_call.1} parent=99 // pred_region
          %s1902 = sand.u32 %s304, 1
          %s1903 = scalar_lea.sflag [#allocation9], %s1902
          %s1904 = sand.u32 %s304, 1
          %s1905 = smul.addr %s1904, 8
          %s1906 = scalar_lea.vmem [#allocation18], %s1905
          %1907 = dma.done %s1903, 128
        $region104: #{tpu_custom_call.1} parent=99 // pred_fallthru
          _
      $region100: #{tpu_custom_call.1} parent=5 // pred_fallthru
        _
    $region6: #{tpu_custom_call.1} parent=1 // loop_footer
      %s32 = sadd.s32 1, %s28
    $region7: #{tpu_custom_call.1} parent=1 // loop_footer_branch
      %27 = sbr.rel target = $region3
    $region8: #{tpu_custom_call.1} parent=1 // loop_exit
      _
    %1908 = vsyncpa [#allocation8], 1
    %s1909 = scalar_lea.sflag [#allocation8], 1
    %1910 = vsyncpa %s1909, 1
    %1911 = vsyncpa [#allocation11], 1
    %s1912 = scalar_lea.sflag [#allocation11], 1
    %1913 = vsyncpa %s1912, 1
    %1914 = vsyncpa [#allocation14], 1
    %1915 = vsyncpa [#allocation17], 1
    %1916 = vsyncpa [#allocation9], 1
    %s1917 = scalar_lea.sflag [#allocation9], 1
    %1918 = vsyncpa %s1917, 1

</llo_original>
